<compile_context>
chip_gen: v7x
topology: tpu7x:2x2x1
jax: 0.10.0
libtpu: 0.0.40
codegen_flags: <defaults>
</compile_context>

<pallas_src>
import numpy as np
import jax
import jax.numpy as jnp
from jax.experimental import pallas as pl
from jax.experimental.pallas import tpu as pltpu

_B = 8  # samples processed per grid step


# ---------------------------------------------------------------------------
# Parameter preparation (outside jit, done once)
# ---------------------------------------------------------------------------
def _fold_bn(gamma, beta, mean, var, eps=1e-5):
    # TODO(synk): BatchNorm uses eval-mode running statistics; training-mode
    # batch statistics are not implemented.
    scale = gamma / jnp.sqrt(var + eps)
    return scale, beta - mean * scale


def _conv_shift_group_weights(w_ocdhw, scale):
    """PyTorch Conv3d weight [Cout,Cin,3,3,3] (stride 2, pad 1) -> [8, 8*Cin, Cout]
    shift-group matrices matching the parity-packed (space-to-depth-by-2),
    front-padded input layout.  BN scale folded in per output channel."""
    cout, cin = int(w_ocdhw.shape[0]), int(w_ocdhw.shape[1])
    w = jnp.transpose(w_ocdhw, (2, 3, 4, 1, 0)) * scale[None, None, None, None, :]
    groups = []
    for sd in (0, 1):
        for sh in (0, 1):
            for sw in (0, 1):
                g = jnp.zeros((2, 2, 2, cin, cout), jnp.float32)
                for pd in (0, 1):
                    if sd == 1 and pd == 0:
                        continue
                    kd = 0 if sd == 1 else 1 + pd
                    for ph in (0, 1):
                        if sh == 1 and ph == 0:
                            continue
                        kh = 0 if sh == 1 else 1 + ph
                        for pw in (0, 1):
                            if sw == 1 and pw == 0:
                                continue
                            kw = 0 if sw == 1 else 1 + pw
                            g = g.at[pd, ph, pw].set(w[kd, kh, kw])
                groups.append(g.reshape(8 * cin, cout))
    return jnp.stack(groups, axis=0)  # [8, 8*Cin, Cout]


def _conv1_blockdiag(w1cols):
    """[64,16] conv1 im2col weight -> block-diagonal [512,128]: row = q*64+k,
    col = q*16+c, so 8 pooled voxels per row-group come out in one matmul with
    lanes already laid out (q, channel)."""
    return (jnp.eye(8, dtype=jnp.float32)[:, None, :, None] *
            w1cols[None, :, None, :]).reshape(512, 128)


def _conv2_dense(conv2_w, s2):
    """conv2 (stride-2 3x3x3, pad 1, 4^3x16 input -> 2^3x32) as one dense
    [1024, 256] matrix.  Row = (pd*16+ph*4+pw)*16 + c_in, col = vox*32 + c_out
    with vox = vd*4+vh*2+vw.  BN2 scale folded in."""
    w = np.asarray(conv2_w, np.float32) * np.asarray(s2, np.float32)[:, None, None, None, None]
    W = np.zeros((1024, 256), np.float32)
    for vd in range(2):
        for vh in range(2):
            for vw in range(2):
                vox = vd * 4 + vh * 2 + vw
                for kd in range(3):
                    pd = 2 * vd - 1 + kd
                    if not 0 <= pd < 4:
                        continue
                    for kh in range(3):
                        ph = 2 * vh - 1 + kh
                        if not 0 <= ph < 4:
                            continue
                        for kw in range(3):
                            pw = 2 * vw - 1 + kw
                            if not 0 <= pw < 4:
                                continue
                            p_lin = pd * 16 + ph * 4 + pw
                            W[p_lin * 16:(p_lin + 1) * 16,
                              vox * 32:(vox + 1) * 32] += w[:, :, kd, kh, kw].T
    return jnp.asarray(W)


def prepare_params(params):
    s1, t1 = _fold_bn(params["bn1_gamma"], params["bn1_beta"],
                      params["bn1_mean"], params["bn1_var"])
    s2, t2 = _fold_bn(params["bn2_gamma"], params["bn2_beta"],
                      params["bn2_mean"], params["bn2_var"])
    w1cols = _conv_shift_group_weights(params["conv1_w"], s1).reshape(64, 16)
    shift1 = s1 * params["conv1_b"] + t1                      # [16]
    shift2 = s2 * params["conv2_b"] + t2                      # [32]
    return {
        "w1bd": _conv1_blockdiag(w1cols).astype(jnp.bfloat16),            # [512,128]
        "shift1": jnp.tile(shift1, 8).reshape(1, 128).astype(jnp.float32),
        "w2d": _conv2_dense(params["conv2_w"], s2).astype(jnp.bfloat16),  # [1024,256]
        "shift2": shift2.reshape(1, 32).astype(jnp.float32),
        # NOTE: fc weights stored [in, out]; padded to lane-dense widths with zeros.
        "fc1_w": jnp.pad(params["fc1_w"], ((0, 0), (0, 12))).astype(jnp.bfloat16),    # [32,512]
        "fc1_b": jnp.pad(params["fc1_b"], (0, 12)).reshape(1, 512).astype(jnp.float32),
        "fc2_w": jnp.pad(params["fc2_w"], ((0, 12), (0, 126))).astype(jnp.bfloat16),  # [512,128]
        "fc2_b": jnp.pad(params["fc2_b"], (0, 126)).reshape(1, 128).astype(jnp.float32),
    }


# ---------------------------------------------------------------------------
# Fused Pallas kernel: conv1+BN1+ReLU+pool + conv2+BN2+ReLU+pool + fc1+ReLU + fc2
# ---------------------------------------------------------------------------
def _fused_kernel(xcol_ref, w1_ref, sh1_ref, w2_ref, sh2_ref,
                  fc1w_ref, fc1b_ref, fc2w_ref, fc2b_ref, o_ref):
    b = o_ref.shape[0]                                     # samples in this block
    # conv1 as one block-diagonal matmul: [b*64, 512] x [512, 128] -> [b*64, 128]
    # rows = (sample, pooled-voxel-group P, pool-window pos w3), lanes = (q, ch)
    a1 = jnp.dot(xcol_ref[...], w1_ref[...], preferred_element_type=jnp.float32)
    # 2x2x2 max-pool = sublane reduction over the 8 window rows of each group.
    z = jnp.max(a1.reshape(b * 8, 8, 128), axis=1)         # [b*8, 128]
    z = jnp.maximum(z + sh1_ref[...], 0.0)                 # folded BN1 shift + ReLU
    # Re-lay the 8 P-groups into lanes -> stage-2 operand [b, 1024] (vreg-aligned
    # concat; feature index = pooled_voxel*16 + channel, matching w2d rows).
    zv = z.reshape(b, 8, 128)
    feat = jnp.concatenate([zv[:, p, :] for p in range(8)], axis=-1)
    feat = feat.astype(jnp.bfloat16)                       # [b, 1024]
    # conv2 (+BN2 scale) as one dense matmul: [b,1024] x [1024,256] -> [b,256]
    y = jnp.dot(feat, w2_ref[...], preferred_element_type=jnp.float32)
    # full 2x2x2 max-pool over the 8 conv2 voxels (vox-major lanes): 3 halvings.
    for w in (128, 64, 32):
        y = jnp.maximum(y[:, :w], y[:, w:2 * w])           # -> [b, 32]
    y = jnp.maximum(y + sh2_ref[...], 0.0)                 # folded BN2 shift + ReLU
    # TODO(synk): Dropout(0.5) treated as identity (inference mode).
    h = jnp.dot(y.astype(jnp.bfloat16), fc1w_ref[...],
                preferred_element_type=jnp.float32) + fc1b_ref[...]
    h = jnp.maximum(h, 0.0)                                # [b, 512] (cols 500: are 0)
    out = jnp.dot(h.astype(jnp.bfloat16), fc2w_ref[...],
                  preferred_element_type=jnp.float32) + fc2b_ref[...]
    o_ref[...] = out                                       # [b, 128], logits in [:, :2]


def _fused_call(xcol, prepped, n_pad):
    return pl.pallas_call(
        _fused_kernel,
        out_shape=jax.ShapeDtypeStruct((n_pad, 128), jnp.float32),
        grid=(n_pad // _B,),
        in_specs=[
            pl.BlockSpec((_B * 64, 512), lambda i: (i, 0)),   # im2col input
            pl.BlockSpec((512, 128), lambda i: (0, 0)),       # conv1 block-diag weight
            pl.BlockSpec((1, 128), lambda i: (0, 0)),         # shift1 (tiled)
            pl.BlockSpec((1024, 256), lambda i: (0, 0)),      # conv2 dense weight
            pl.BlockSpec((1, 32), lambda i: (0, 0)),          # shift2
            pl.BlockSpec((32, 512), lambda i: (0, 0)),        # fc1 weight (padded)
            pl.BlockSpec((1, 512), lambda i: (0, 0)),         # fc1 bias  (padded)
            pl.BlockSpec((512, 128), lambda i: (0, 0)),       # fc2 weight (padded)
            pl.BlockSpec((1, 128), lambda i: (0, 0)),         # fc2 bias  (padded)
        ],
        out_specs=pl.BlockSpec((_B, 128), lambda i: (i, 0)),
        compiler_params=pltpu.CompilerParams(dimension_semantics=("parallel",)),
    )(xcol, prepped["w1bd"], prepped["shift1"], prepped["w2d"], prepped["shift2"],
      prepped["fc1_w"], prepped["fc1_b"], prepped["fc2_w"], prepped["fc2_b"])


# ---------------------------------------------------------------------------
# Forward pass
# ---------------------------------------------------------------------------
@jax.jit
def net_forward(x_ncdhw, prepped):
    n, c, d, h, w = x_ncdhw.shape
    # Kernel is specialized to the 16^3 single-channel input (PyTorch builds fc1
    # lazily, so the architecture is size-dependent).
    # TODO(synk): other input sizes need re-derived tile/pool constants.
    assert (c, d, h, w) == (1, 16, 16, 16), (c, d, h, w)
    n_pad = ((n + _B - 1) // _B) * _B

    # bf16 before any repacking (halves packing traffic), pad batch to _B multiple.
    x = x_ncdhw.astype(jnp.bfloat16).reshape(n, 16, 16, 16)
    if n_pad != n:
        x = jnp.pad(x, ((0, n_pad - n), (0, 0), (0, 0), (0, 0)))

    # Parity-pack (space-to-depth by 2) + one leading zero slab per spatial axis.
    x = x.reshape(n_pad, 8, 2, 8, 2, 8, 2)
    x = jnp.transpose(x, (0, 1, 3, 5, 2, 4, 6))               # [N,8,8,8,2,2,2]
    x = x.reshape(n_pad, 8, 8, 8, 8)
    xp = jnp.pad(x, ((0, 0), (1, 0), (1, 0), (1, 0), (0, 0))) # [N,9,9,9,8]

    # im2col for the stride-2 conv1: 8 shifted slabs -> K = 64 per output voxel.
    slabs = [xp[:, 1 - sd:9 - sd, 1 - sh:9 - sh, 1 - sw:9 - sw, :]
             for sd in (0, 1) for sh in (0, 1) for sw in (0, 1)]
    xc = jnp.stack(slabs, axis=4).reshape(n_pad, 8, 8, 8, 64)  # [N,od,oh,ow,k]
    # Reorder rows/cols for the block-diagonal conv1 matmul:
    #   rows = (sample, P, w3), cols = (q, k) with pooled voxel p_lin = P*8 + q
    xc = xc.reshape(n_pad, 4, 2, 4, 2, 4, 2, 64)
    xc = jnp.transpose(xc, (0, 1, 3, 5, 2, 4, 6, 7))           # [N,pd,ph,pw,wd,wh,ww,k]
    xc = xc.reshape(n_pad, 8, 8, 8, 64)                        # [N,P,q,w3,k]
    xc = jnp.transpose(xc, (0, 1, 3, 2, 4))                    # [N,P,w3,q,k]
    xcol = xc.reshape(n_pad * 64, 512)                         # lane-dense [N*64, 512]

    out = _fused_call(xcol, prepped, n_pad)                    # [n_pad, 128]
    return out[:n, :2]


# ---------------------------------------------------------------------------
# Pure-JAX reference (for correctness checking) and parameter init
# ---------------------------------------------------------------------------
def _bn_eval(y, gamma, beta, mean, var, eps=1e-5):
    inv = gamma / jnp.sqrt(var + eps)
    bc = lambda v: v[None, :, None, None, None]
    return (y - bc(mean)) * bc(inv) + bc(beta)


def reference_forward(x, params):
    y = jax.lax.conv_general_dilated(
        x.astype(jnp.float32), params["conv1_w"], (2, 2, 2),
        ((1, 1), (1, 1), (1, 1)),
        dimension_numbers=("NCDHW", "OIDHW", "NCDHW"))
    y = y + params["conv1_b"][None, :, None, None, None]
    y = jax.nn.relu(_bn_eval(y, params["bn1_gamma"], params["bn1_beta"],
                             params["bn1_mean"], params["bn1_var"]))
    y = jax.lax.reduce_window(y, -jnp.inf, jax.lax.max,
                              (1, 1, 2, 2, 2), (1, 1, 2, 2, 2), "VALID")
    y = jax.lax.conv_general_dilated(
        y, params["conv2_w"], (2, 2, 2), ((1, 1), (1, 1), (1, 1)),
        dimension_numbers=("NCDHW", "OIDHW", "NCDHW"))
    y = y + params["conv2_b"][None, :, None, None, None]
    y = jax.nn.relu(_bn_eval(y, params["bn2_gamma"], params["bn2_beta"],
                             params["bn2_mean"], params["bn2_var"]))
    y = jax.lax.reduce_window(y, -jnp.inf, jax.lax.max,
                              (1, 1, 2, 2, 2), (1, 1, 2, 2, 2), "VALID")
    y = y.reshape(y.shape[0], -1)
    y = jax.nn.relu(y @ params["fc1_w"] + params["fc1_b"])
    return y @ params["fc2_w"] + params["fc2_b"]


def init_params(key):
    ks = jax.random.split(key, 16)
    return {
        "conv1_w": 0.1 * jax.random.normal(ks[0], (16, 1, 3, 3, 3), jnp.float32),
        "conv1_b": 0.1 * jax.random.normal(ks[1], (16,), jnp.float32),
        "bn1_gamma": 1.0 + 0.1 * jax.random.normal(ks[2], (16,), jnp.float32),
        "bn1_beta": 0.1 * jax.random.normal(ks[3], (16,), jnp.float32),
        "bn1_mean": 0.1 * jax.random.normal(ks[4], (16,), jnp.float32),
        "bn1_var": jax.random.uniform(ks[5], (16,), jnp.float32, 0.5, 1.5),
        "conv2_w": 0.05 * jax.random.normal(ks[6], (32, 16, 3, 3, 3), jnp.float32),
        "conv2_b": 0.05 * jax.random.normal(ks[7], (32,), jnp.float32),
        "bn2_gamma": 1.0 + 0.1 * jax.random.normal(ks[8], (32,), jnp.float32),
        "bn2_beta": 0.1 * jax.random.normal(ks[9], (32,), jnp.float32),
        "bn2_mean": 0.1 * jax.random.normal(ks[10], (32,), jnp.float32),
        "bn2_var": jax.random.uniform(ks[11], (32,), jnp.float32, 0.5, 1.5),
        # fc weights stored [in, out] (= transpose of PyTorch nn.Linear.weight)
        "fc1_w": 0.05 * jax.random.normal(ks[12], (32, 500), jnp.float32),
        "fc1_b": 0.05 * jax.random.normal(ks[13], (500,), jnp.float32),
        "fc2_w": 0.05 * jax.random.normal(ks[14], (500, 2), jnp.float32),
        "fc2_b": 0.05 * jax.random.normal(ks[15], (2,), jnp.float32),
    }


if __name__ == "__main__":
    key = jax.random.PRNGKey(0)
    k_x, k_p = jax.random.split(key)

    # PyTorch-shaped input: [N, C=1, D, H, W]
    N = 2
    x = jax.random.normal(k_x, (N, 1, 16, 16, 16), jnp.float32)

    params = init_params(k_p)
    prepped = prepare_params(params)     # BN folding + weight repacking, done once

    out = jax.block_until_ready(net_forward(x, prepped))
    assert out.shape == (N, 2), out.shape

    # Tolerance check vs. a pure-JAX f32 reference (kernel uses bf16 operands).
    ref = jax.block_until_ready(reference_forward(x, params))
    err = float(jnp.max(jnp.abs(out - ref)))
    tol = 0.05 + 0.05 * float(jnp.max(jnp.abs(ref)))
    assert err < tol, (err, tol)

    print("KERNEL_OK")
</pallas_src>

<mosaic_0001>
module attributes {stable_mosaic.version = 11 : i64} {
  func.func @_fused_kernel(%arg0: i32, %arg1: memref<512x512xbf16, #tpu.memory_space<vmem>>, %arg2: memref<512x128xbf16, #tpu.memory_space<vmem>>, %arg3: memref<1x128xf32, #tpu.memory_space<vmem>>, %arg4: memref<1024x256xbf16, #tpu.memory_space<vmem>>, %arg5: memref<1x32xf32, #tpu.memory_space<vmem>>, %arg6: memref<32x512xbf16, #tpu.memory_space<vmem>>, %arg7: memref<1x512xf32, #tpu.memory_space<vmem>>, %arg8: memref<512x128xbf16, #tpu.memory_space<vmem>>, %arg9: memref<1x128xf32, #tpu.memory_space<vmem>>, %arg10: memref<8x128xf32, #tpu.memory_space<vmem>>) attributes {dimension_semantics = [#tpu.dimension_semantics<parallel>], iteration_bounds = array<i64: 1>, scalar_prefetch = 0 : i64, scratch_operands = 0 : i64, tpu.core_type = #tpu.core_type<tc>, window_params = [{transform_indices = @transform_0, window_bounds = array<i64: 512, 512>}, {pipeline_mode = #tpu.pipeline_mode<synchronous>, transform_indices = @transform_1, window_bounds = array<i64: 512, 128>}, {pipeline_mode = #tpu.pipeline_mode<synchronous>, transform_indices = @transform_2, window_bounds = array<i64: 1, 128>}, {pipeline_mode = #tpu.pipeline_mode<synchronous>, transform_indices = @transform_3, window_bounds = array<i64: 1024, 256>}, {pipeline_mode = #tpu.pipeline_mode<synchronous>, transform_indices = @transform_4, window_bounds = array<i64: 1, 32>}, {pipeline_mode = #tpu.pipeline_mode<synchronous>, transform_indices = @transform_5, window_bounds = array<i64: 32, 512>}, {pipeline_mode = #tpu.pipeline_mode<synchronous>, transform_indices = @transform_6, window_bounds = array<i64: 1, 512>}, {pipeline_mode = #tpu.pipeline_mode<synchronous>, transform_indices = @transform_7, window_bounds = array<i64: 512, 128>}, {pipeline_mode = #tpu.pipeline_mode<synchronous>, transform_indices = @transform_8, window_bounds = array<i64: 1, 128>}, {transform_indices = @transform_9, window_bounds = array<i64: 8, 128>}]} {
    %c0 = arith.constant 0 : index
    %c0_0 = arith.constant 0 : index
    %0 = vector.load %arg1[%c0, %c0_0] : memref<512x512xbf16, #tpu.memory_space<vmem>>, vector<512x512xbf16>
    %c0_1 = arith.constant 0 : index
    %c0_2 = arith.constant 0 : index
    %1 = vector.load %arg2[%c0_1, %c0_2] : memref<512x128xbf16, #tpu.memory_space<vmem>>, vector<512x128xbf16>
    %cst = arith.constant dense<0.000000e+00> : vector<512x128xf32>
    %2 = tpu.matmul %0, %1, %cst {dimension_numbers = #tpu.dot_dimension_numbers<[1], [0], [0], [1], [0, 0, 1, 1], [], []>} : vector<512x512xbf16>, vector<512x128xbf16>, vector<512x128xf32> -> vector<512x128xf32>
    %3 = vector.shape_cast %2 : vector<512x128xf32> to vector<64x8x128xf32>
    %cst_3 = arith.constant dense<0xFF800000> : vector<64x128xf32>
    %4 = vector.multi_reduction <maximumf>, %3, %cst_3 [1] : vector<64x8x128xf32> to vector<64x128xf32>
    %c0_4 = arith.constant 0 : index
    %c0_5 = arith.constant 0 : index
    %5 = vector.load %arg3[%c0_4, %c0_5] : memref<1x128xf32, #tpu.memory_space<vmem>>, vector<1x128xf32>
    %6 = vector.broadcast %5 : vector<1x128xf32> to vector<64x128xf32>
    %7 = arith.addf %4, %6 : vector<64x128xf32>
    %cst_6 = arith.constant 0.000000e+00 : f32
    %8 = vector.broadcast %cst_6 : f32 to vector<64x128xf32>
    %9 = arith.maximumf %7, %8 : vector<64x128xf32>
    %10 = vector.shape_cast %9 : vector<64x128xf32> to vector<8x8x128xf32>
    %11 = vector.extract_strided_slice %10 {offsets = [0, 0, 0], sizes = [8, 1, 128], strides = [1, 1, 1]} : vector<8x8x128xf32> to vector<8x1x128xf32>
    %12 = vector.shape_cast %11 : vector<8x1x128xf32> to vector<8x128xf32>
    %13 = vector.extract_strided_slice %10 {offsets = [0, 1, 0], sizes = [8, 1, 128], strides = [1, 1, 1]} : vector<8x8x128xf32> to vector<8x1x128xf32>
    %14 = vector.shape_cast %13 : vector<8x1x128xf32> to vector<8x128xf32>
    %15 = vector.extract_strided_slice %10 {offsets = [0, 2, 0], sizes = [8, 1, 128], strides = [1, 1, 1]} : vector<8x8x128xf32> to vector<8x1x128xf32>
    %16 = vector.shape_cast %15 : vector<8x1x128xf32> to vector<8x128xf32>
    %17 = vector.extract_strided_slice %10 {offsets = [0, 3, 0], sizes = [8, 1, 128], strides = [1, 1, 1]} : vector<8x8x128xf32> to vector<8x1x128xf32>
    %18 = vector.shape_cast %17 : vector<8x1x128xf32> to vector<8x128xf32>
    %19 = vector.extract_strided_slice %10 {offsets = [0, 4, 0], sizes = [8, 1, 128], strides = [1, 1, 1]} : vector<8x8x128xf32> to vector<8x1x128xf32>
    %20 = vector.shape_cast %19 : vector<8x1x128xf32> to vector<8x128xf32>
    %21 = vector.extract_strided_slice %10 {offsets = [0, 5, 0], sizes = [8, 1, 128], strides = [1, 1, 1]} : vector<8x8x128xf32> to vector<8x1x128xf32>
    %22 = vector.shape_cast %21 : vector<8x1x128xf32> to vector<8x128xf32>
    %23 = vector.extract_strided_slice %10 {offsets = [0, 6, 0], sizes = [8, 1, 128], strides = [1, 1, 1]} : vector<8x8x128xf32> to vector<8x1x128xf32>
    %24 = vector.shape_cast %23 : vector<8x1x128xf32> to vector<8x128xf32>
    %25 = vector.extract_strided_slice %10 {offsets = [0, 7, 0], sizes = [8, 1, 128], strides = [1, 1, 1]} : vector<8x8x128xf32> to vector<8x1x128xf32>
    %26 = vector.shape_cast %25 : vector<8x1x128xf32> to vector<8x128xf32>
    %27 = tpu.concatenate %12, %14, %16, %18, %20, %22, %24, %26 in 1 : vector<8x128xf32>, vector<8x128xf32>, vector<8x128xf32>, vector<8x128xf32>, vector<8x128xf32>, vector<8x128xf32>, vector<8x128xf32>, vector<8x128xf32> -> vector<8x1024xf32>
    %28 = arith.truncf %27 : vector<8x1024xf32> to vector<8x1024xbf16>
    %c0_7 = arith.constant 0 : index
    %c0_8 = arith.constant 0 : index
    %29 = vector.load %arg4[%c0_7, %c0_8] : memref<1024x256xbf16, #tpu.memory_space<vmem>>, vector<1024x256xbf16>
    %cst_9 = arith.constant dense<0.000000e+00> : vector<8x256xf32>
    %30 = tpu.matmul %28, %29, %cst_9 {dimension_numbers = #tpu.dot_dimension_numbers<[1], [0], [0], [1], [0, 0, 1, 1], [], []>} : vector<8x1024xbf16>, vector<1024x256xbf16>, vector<8x256xf32> -> vector<8x256xf32>
    %31 = vector.extract_strided_slice %30 {offsets = [0, 0], sizes = [8, 128], strides = [1, 1]} : vector<8x256xf32> to vector<8x128xf32>
    %32 = vector.extract_strided_slice %30 {offsets = [0, 128], sizes = [8, 128], strides = [1, 1]} : vector<8x256xf32> to vector<8x128xf32>
    %33 = arith.maximumf %31, %32 : vector<8x128xf32>
    %34 = vector.extract_strided_slice %33 {offsets = [0, 0], sizes = [8, 64], strides = [1, 1]} : vector<8x128xf32> to vector<8x64xf32>
    %35 = vector.extract_strided_slice %33 {offsets = [0, 64], sizes = [8, 64], strides = [1, 1]} : vector<8x128xf32> to vector<8x64xf32>
    %36 = arith.maximumf %34, %35 : vector<8x64xf32>
    %37 = vector.extract_strided_slice %36 {offsets = [0, 0], sizes = [8, 32], strides = [1, 1]} : vector<8x64xf32> to vector<8x32xf32>
    %38 = vector.extract_strided_slice %36 {offsets = [0, 32], sizes = [8, 32], strides = [1, 1]} : vector<8x64xf32> to vector<8x32xf32>
    %39 = arith.maximumf %37, %38 : vector<8x32xf32>
    %c0_10 = arith.constant 0 : index
    %c0_11 = arith.constant 0 : index
    %40 = vector.load %arg5[%c0_10, %c0_11] : memref<1x32xf32, #tpu.memory_space<vmem>>, vector<1x32xf32>
    %41 = vector.broadcast %40 : vector<1x32xf32> to vector<8x32xf32>
    %42 = arith.addf %39, %41 : vector<8x32xf32>
    %cst_12 = arith.constant 0.000000e+00 : f32
    %43 = vector.broadcast %cst_12 : f32 to vector<8x32xf32>
    %44 = arith.maximumf %42, %43 : vector<8x32xf32>
    %45 = arith.truncf %44 : vector<8x32xf32> to vector<8x32xbf16>
    %c0_13 = arith.constant 0 : index
    %c0_14 = arith.constant 0 : index
    %46 = vector.load %arg6[%c0_13, %c0_14] : memref<32x512xbf16, #tpu.memory_space<vmem>>, vector<32x512xbf16>
    %cst_15 = arith.constant dense<0.000000e+00> : vector<8x512xf32>
    %47 = tpu.matmul %45, %46, %cst_15 {dimension_numbers = #tpu.dot_dimension_numbers<[1], [0], [0], [1], [0, 0, 1, 1], [], []>} : vector<8x32xbf16>, vector<32x512xbf16>, vector<8x512xf32> -> vector<8x512xf32>
    %c0_16 = arith.constant 0 : index
    %c0_17 = arith.constant 0 : index
    %48 = vector.load %arg7[%c0_16, %c0_17] : memref<1x512xf32, #tpu.memory_space<vmem>>, vector<1x512xf32>
    %49 = vector.broadcast %48 : vector<1x512xf32> to vector<8x512xf32>
    %50 = arith.addf %47, %49 : vector<8x512xf32>
    %cst_18 = arith.constant 0.000000e+00 : f32
    %51 = vector.broadcast %cst_18 : f32 to vector<8x512xf32>
    %52 = arith.maximumf %50, %51 : vector<8x512xf32>
    %53 = arith.truncf %52 : vector<8x512xf32> to vector<8x512xbf16>
    %c0_19 = arith.constant 0 : index
    %c0_20 = arith.constant 0 : index
    %54 = vector.load %arg8[%c0_19, %c0_20] : memref<512x128xbf16, #tpu.memory_space<vmem>>, vector<512x128xbf16>
    %cst_21 = arith.constant dense<0.000000e+00> : vector<8x128xf32>
    %55 = tpu.matmul %53, %54, %cst_21 {dimension_numbers = #tpu.dot_dimension_numbers<[1], [0], [0], [1], [0, 0, 1, 1], [], []>} : vector<8x512xbf16>, vector<512x128xbf16>, vector<8x128xf32> -> vector<8x128xf32>
    %c0_22 = arith.constant 0 : index
    %c0_23 = arith.constant 0 : index
    %56 = vector.load %arg9[%c0_22, %c0_23] : memref<1x128xf32, #tpu.memory_space<vmem>>, vector<1x128xf32>
    %57 = vector.broadcast %56 : vector<1x128xf32> to vector<8x128xf32>
    %58 = arith.addf %55, %57 : vector<8x128xf32>
    %c0_24 = arith.constant 0 : index
    %c0_25 = arith.constant 0 : index
    %59 = vector.load %arg10[%c0_24, %c0_25] : memref<8x128xf32, #tpu.memory_space<vmem>>, vector<8x128xf32>
    tpu.vector_store %arg10[%c0_24, %c0_25], %58 {strides = array<i32>} : memref<8x128xf32, #tpu.memory_space<vmem>>, vector<8x128xf32>,
    return
  }
  func.func @transform_0(%arg0: i32) -> (i32, i32) {
    %c0_i32 = arith.constant 0 : i32
    %c0_i32_0 = arith.constant 0 : i32
    return %arg0, %c0_i32 : i32, i32
  }
  func.func @transform_1(%arg0: i32) -> (i32, i32) {
    %c0_i32 = arith.constant 0 : i32
    %c0_i32_0 = arith.constant 0 : i32
    %c0_i32_1 = arith.constant 0 : i32
    return %c0_i32, %c0_i32_0 : i32, i32
  }
  func.func @transform_2(%arg0: i32) -> (i32, i32) {
    %c0_i32 = arith.constant 0 : i32
    %c0_i32_0 = arith.constant 0 : i32
    %c0_i32_1 = arith.constant 0 : i32
    return %c0_i32, %c0_i32_0 : i32, i32
  }
  func.func @transform_3(%arg0: i32) -> (i32, i32) {
    %c0_i32 = arith.constant 0 : i32
    %c0_i32_0 = arith.constant 0 : i32
    %c0_i32_1 = arith.constant 0 : i32
    return %c0_i32, %c0_i32_0 : i32, i32
  }
  func.func @transform_4(%arg0: i32) -> (i32, i32) {
    %c0_i32 = arith.constant 0 : i32
    %c0_i32_0 = arith.constant 0 : i32
    %c0_i32_1 = arith.constant 0 : i32
    return %c0_i32, %c0_i32_0 : i32, i32
  }
  func.func @transform_5(%arg0: i32) -> (i32, i32) {
    %c0_i32 = arith.constant 0 : i32
    %c0_i32_0 = arith.constant 0 : i32
    %c0_i32_1 = arith.constant 0 : i32
    return %c0_i32, %c0_i32_0 : i32, i32
  }
  func.func @transform_6(%arg0: i32) -> (i32, i32) {
    %c0_i32 = arith.constant 0 : i32
    %c0_i32_0 = arith.constant 0 : i32
    %c0_i32_1 = arith.constant 0 : i32
    return %c0_i32, %c0_i32_0 : i32, i32
  }
  func.func @transform_7(%arg0: i32) -> (i32, i32) {
    %c0_i32 = arith.constant 0 : i32
    %c0_i32_0 = arith.constant 0 : i32
    %c0_i32_1 = arith.constant 0 : i32
    return %c0_i32, %c0_i32_0 : i32, i32
  }
  func.func @transform_8(%arg0: i32) -> (i32, i32) {
    %c0_i32 = arith.constant 0 : i32
    %c0_i32_0 = arith.constant 0 : i32
    %c0_i32_1 = arith.constant 0 : i32
    return %c0_i32, %c0_i32_0 : i32, i32
  }
  func.func @transform_9(%arg0: i32) -> (i32, i32) {
    %c0_i32 = arith.constant 0 : i32
    %c0_i32_0 = arith.constant 0 : i32
    return %arg0, %c0_i32 : i32, i32
  }
}

</mosaic_0001>

<llo_original>
// kernel: net_forward.1
$region0: #{net_forward.1}
  #allocation0 [shape = 'u32[]', space=smem, size = 0x4, offset = 0x4, fixed_abs, tag = 'smem constant byte address 0x4 - core index']
  #allocation1 [shape = 'u32[144,128]{1,0:T(1,128)}', space=vmem, size = 0x12000, scoped, tag = 'internal scratch']
  %s0 = inlined_call_operand.vmem [shape: bf16[512,512], index: 0, kind: input, shape index: {}]
  %s1 = inlined_call_operand.vmem [shape: bf16[512,128], index: 1, kind: input, shape index: {}]
  %s2 = inlined_call_operand.vmem [shape: f32[1,128], index: 2, kind: input, shape index: {}]
  %s3 = inlined_call_operand.vmem [shape: bf16[1024,256], index: 3, kind: input, shape index: {}]
  %s4 = inlined_call_operand.vmem [shape: f32[1,32], index: 4, kind: input, shape index: {}]
  %s5 = inlined_call_operand.vmem [shape: bf16[32,512], index: 5, kind: input, shape index: {}]
  %s6 = inlined_call_operand.vmem [shape: f32[1,512], index: 6, kind: input, shape index: {}]
  %s7 = inlined_call_operand.vmem [shape: bf16[512,128], index: 7, kind: input, shape index: {}]
  %s8 = inlined_call_operand.vmem [shape: f32[1,128], index: 8, kind: input, shape index: {}]
  %s9 = inlined_call_operand.vmem [shape: f32[8,128], index: 9, kind: output, shape index: {}]
  %s10 = sld [smem:[#allocation0]]
  $region46: #{net_forward.1} parent=0
    _
  %s12 = ssub.s32 1, %s10
  %s13 = scalar_select 0, %s12, %s10
  // Predicated region
  $region2: #{net_forward.1} parent=0 // pred_check
    _
  $region3: #{net_forward.1} parent=0 // pred_check_branch
    %15 = sbr.rel (0) target = $region5
  $region4: #{net_forward.1} parent=0 // pred_region
    _
  $region5: #{net_forward.1} parent=0 // pred_fallthru
    _
  // Predicated region
  $region6: #{net_forward.1} parent=0 // pred_check
    _
  $region7: #{net_forward.1} parent=0 // pred_check_branch
    %17 = sbr.rel (0) target = $region9
  $region8: #{net_forward.1} parent=0 // pred_region
    _
  $region9: #{net_forward.1} parent=0 // pred_fallthru
    _
  // Predicated region
  $region10: #{net_forward.1} parent=0 // pred_check
    _
  $region11: #{net_forward.1} parent=0 // pred_check_branch
    %19 = sbr.rel (0) target = $region13
  $region12: #{net_forward.1} parent=0 // pred_region
    _
  $region13: #{net_forward.1} parent=0 // pred_fallthru
    _
  // Predicated region
  $region14: #{net_forward.1} parent=0 // pred_check
    _
  $region15: #{net_forward.1} parent=0 // pred_check_branch
    %21 = sbr.rel (0) target = $region17
  $region16: #{net_forward.1} parent=0 // pred_region
    _
  $region17: #{net_forward.1} parent=0 // pred_fallthru
    _
  // Predicated region
  $region18: #{net_forward.1} parent=0 // pred_check
    _
  $region19: #{net_forward.1} parent=0 // pred_check_branch
    %23 = sbr.rel (0) target = $region21
  $region20: #{net_forward.1} parent=0 // pred_region
    _
  $region21: #{net_forward.1} parent=0 // pred_fallthru
    _
  // Predicated region
  $region22: #{net_forward.1} parent=0 // pred_check
    _
  $region23: #{net_forward.1} parent=0 // pred_check_branch
    %25 = sbr.rel (0) target = $region25
  $region24: #{net_forward.1} parent=0 // pred_region
    _
  $region25: #{net_forward.1} parent=0 // pred_fallthru
    _
  // Predicated region
  $region26: #{net_forward.1} parent=0 // pred_check
    _
  $region27: #{net_forward.1} parent=0 // pred_check_branch
    %27 = sbr.rel (0) target = $region29
  $region28: #{net_forward.1} parent=0 // pred_region
    _
  $region29: #{net_forward.1} parent=0 // pred_fallthru
    _
  // Predicated region
  $region30: #{net_forward.1} parent=0 // pred_check
    _
  $region31: #{net_forward.1} parent=0 // pred_check_branch
    %29 = sbr.rel (0) target = $region33
  $region32: #{net_forward.1} parent=0 // pred_region
    _
  $region33: #{net_forward.1} parent=0 // pred_fallthru
    _
  // Predicated region
  $region34: #{net_forward.1} parent=0 // pred_check
    _
  $region35: #{net_forward.1} parent=0 // pred_check_branch
    %31 = sbr.rel (0) target = $region37
  $region36: #{net_forward.1} parent=0 // pred_region
    _
  $region37: #{net_forward.1} parent=0 // pred_fallthru
    _
  %v33 = vld [vmem:[%s0] sm:$0xff]
  %v34 = vld [vmem:[%s0 + $0x8] sm:$0xff]
  %v35 = vld [vmem:[%s0 + $0x10] sm:$0xff]
  %v36 = vld [vmem:[%s0 + $0x18] sm:$0xff]
  %v37 = vld [vmem:[%s0 + $0x20] sm:$0xff]
  %v38 = vld [vmem:[%s0 + $0x28] sm:$0xff]
  %v39 = vld [vmem:[%s0 + $0x30] sm:$0xff]
  %v40 = vld [vmem:[%s0 + $0x38] sm:$0xff]
  %v41 = vld [vmem:[%s0 + $0x40] sm:$0xff]
  %v42 = vld [vmem:[%s0 + $0x48] sm:$0xff]
  %v43 = vld [vmem:[%s0 + $0x50] sm:$0xff]
  %v44 = vld [vmem:[%s0 + $0x58] sm:$0xff]
  %v45 = vld [vmem:[%s0 + $0x60] sm:$0xff]
  %v46 = vld [vmem:[%s0 + $0x68] sm:$0xff]
  %v47 = vld [vmem:[%s0 + $0x70] sm:$0xff]
  %v48 = vld [vmem:[%s0 + $0x78] sm:$0xff]
  %v49 = vld [vmem:[%s0 + $0x80] sm:$0xff]
  %v50 = vld [vmem:[%s0 + $0x88] sm:$0xff]
  %v51 = vld [vmem:[%s0 + $0x90] sm:$0xff]
  %v52 = vld [vmem:[%s0 + $0x98] sm:$0xff]
  %v53 = vld [vmem:[%s0 + $0xa0] sm:$0xff]
  %v54 = vld [vmem:[%s0 + $0xa8] sm:$0xff]
  %v55 = vld [vmem:[%s0 + $0xb0] sm:$0xff]
  %v56 = vld [vmem:[%s0 + $0xb8] sm:$0xff]
  %v57 = vld [vmem:[%s0 + $0xc0] sm:$0xff]
  %v58 = vld [vmem:[%s0 + $0xc8] sm:$0xff]
  %v59 = vld [vmem:[%s0 + $0xd0] sm:$0xff]
  %v60 = vld [vmem:[%s0 + $0xd8] sm:$0xff]
  %v61 = vld [vmem:[%s0 + $0xe0] sm:$0xff]
  %v62 = vld [vmem:[%s0 + $0xe8] sm:$0xff]
  %v63 = vld [vmem:[%s0 + $0xf0] sm:$0xff]
  %v64 = vld [vmem:[%s0 + $0xf8] sm:$0xff]
  %v65 = vld [vmem:[%s0 + $0x100] sm:$0xff]
  %v66 = vld [vmem:[%s0 + $0x108] sm:$0xff]
  %v67 = vld [vmem:[%s0 + $0x110] sm:$0xff]
  %v68 = vld [vmem:[%s0 + $0x118] sm:$0xff]
  %v69 = vld [vmem:[%s0 + $0x120] sm:$0xff]
  %v70 = vld [vmem:[%s0 + $0x128] sm:$0xff]
  %v71 = vld [vmem:[%s0 + $0x130] sm:$0xff]
  %v72 = vld [vmem:[%s0 + $0x138] sm:$0xff]
  %v73 = vld [vmem:[%s0 + $0x140] sm:$0xff]
  %v74 = vld [vmem:[%s0 + $0x148] sm:$0xff]
  %v75 = vld [vmem:[%s0 + $0x150] sm:$0xff]
  %v76 = vld [vmem:[%s0 + $0x158] sm:$0xff]
  %v77 = vld [vmem:[%s0 + $0x160] sm:$0xff]
  %v78 = vld [vmem:[%s0 + $0x168] sm:$0xff]
  %v79 = vld [vmem:[%s0 + $0x170] sm:$0xff]
  %v80 = vld [vmem:[%s0 + $0x178] sm:$0xff]
  %v81 = vld [vmem:[%s0 + $0x180] sm:$0xff]
  %v82 = vld [vmem:[%s0 + $0x188] sm:$0xff]
  %v83 = vld [vmem:[%s0 + $0x190] sm:$0xff]
  %v84 = vld [vmem:[%s0 + $0x198] sm:$0xff]
  %v85 = vld [vmem:[%s0 + $0x1a0] sm:$0xff]
  %v86 = vld [vmem:[%s0 + $0x1a8] sm:$0xff]
  %v87 = vld [vmem:[%s0 + $0x1b0] sm:$0xff]
  %v88 = vld [vmem:[%s0 + $0x1b8] sm:$0xff]
  %v89 = vld [vmem:[%s0 + $0x1c0] sm:$0xff]
  %v90 = vld [vmem:[%s0 + $0x1c8] sm:$0xff]
  %v91 = vld [vmem:[%s0 + $0x1d0] sm:$0xff]
  %v92 = vld [vmem:[%s0 + $0x1d8] sm:$0xff]
  %v93 = vld [vmem:[%s0 + $0x1e0] sm:$0xff]
  %v94 = vld [vmem:[%s0 + $0x1e8] sm:$0xff]
  %v95 = vld [vmem:[%s0 + $0x1f0] sm:$0xff]
  %v96 = vld [vmem:[%s0 + $0x1f8] sm:$0xff]
  %v97 = vld [vmem:[%s0 + $0x200] sm:$0xff]
  %v98 = vld [vmem:[%s0 + $0x208] sm:$0xff]
  %v99 = vld [vmem:[%s0 + $0x210] sm:$0xff]
  %v100 = vld [vmem:[%s0 + $0x218] sm:$0xff]
  %v101 = vld [vmem:[%s0 + $0x220] sm:$0xff]
  %v102 = vld [vmem:[%s0 + $0x228] sm:$0xff]
  %v103 = vld [vmem:[%s0 + $0x230] sm:$0xff]
  %v104 = vld [vmem:[%s0 + $0x238] sm:$0xff]
  %v105 = vld [vmem:[%s0 + $0x240] sm:$0xff]
  %v106 = vld [vmem:[%s0 + $0x248] sm:$0xff]
  %v107 = vld [vmem:[%s0 + $0x250] sm:$0xff]
  %v108 = vld [vmem:[%s0 + $0x258] sm:$0xff]
  %v109 = vld [vmem:[%s0 + $0x260] sm:$0xff]
  %v110 = vld [vmem:[%s0 + $0x268] sm:$0xff]
  %v111 = vld [vmem:[%s0 + $0x270] sm:$0xff]
  %v112 = vld [vmem:[%s0 + $0x278] sm:$0xff]
  %v113 = vld [vmem:[%s0 + $0x280] sm:$0xff]
  %v114 = vld [vmem:[%s0 + $0x288] sm:$0xff]
  %v115 = vld [vmem:[%s0 + $0x290] sm:$0xff]
  %v116 = vld [vmem:[%s0 + $0x298] sm:$0xff]
  %v117 = vld [vmem:[%s0 + $0x2a0] sm:$0xff]
  %v118 = vld [vmem:[%s0 + $0x2a8] sm:$0xff]
  %v119 = vld [vmem:[%s0 + $0x2b0] sm:$0xff]
  %v120 = vld [vmem:[%s0 + $0x2b8] sm:$0xff]
  %v121 = vld [vmem:[%s0 + $0x2c0] sm:$0xff]
  %v122 = vld [vmem:[%s0 + $0x2c8] sm:$0xff]
  %v123 = vld [vmem:[%s0 + $0x2d0] sm:$0xff]
  %v124 = vld [vmem:[%s0 + $0x2d8] sm:$0xff]
  %v125 = vld [vmem:[%s0 + $0x2e0] sm:$0xff]
  %v126 = vld [vmem:[%s0 + $0x2e8] sm:$0xff]
  %v127 = vld [vmem:[%s0 + $0x2f0] sm:$0xff]
  %v128 = vld [vmem:[%s0 + $0x2f8] sm:$0xff]
  %v129 = vld [vmem:[%s0 + $0x300] sm:$0xff]
  %v130 = vld [vmem:[%s0 + $0x308] sm:$0xff]
  %v131 = vld [vmem:[%s0 + $0x310] sm:$0xff]
  %v132 = vld [vmem:[%s0 + $0x318] sm:$0xff]
  %v133 = vld [vmem:[%s0 + $0x320] sm:$0xff]
  %v134 = vld [vmem:[%s0 + $0x328] sm:$0xff]
  %v135 = vld [vmem:[%s0 + $0x330] sm:$0xff]
  %v136 = vld [vmem:[%s0 + $0x338] sm:$0xff]
  %v137 = vld [vmem:[%s0 + $0x340] sm:$0xff]
  %v138 = vld [vmem:[%s0 + $0x348] sm:$0xff]
  %v139 = vld [vmem:[%s0 + $0x350] sm:$0xff]
  %v140 = vld [vmem:[%s0 + $0x358] sm:$0xff]
  %v141 = vld [vmem:[%s0 + $0x360] sm:$0xff]
  %v142 = vld [vmem:[%s0 + $0x368] sm:$0xff]
  %v143 = vld [vmem:[%s0 + $0x370] sm:$0xff]
  %v144 = vld [vmem:[%s0 + $0x378] sm:$0xff]
  %v145 = vld [vmem:[%s0 + $0x380] sm:$0xff]
  %v146 = vld [vmem:[%s0 + $0x388] sm:$0xff]
  %v147 = vld [vmem:[%s0 + $0x390] sm:$0xff]
  %v148 = vld [vmem:[%s0 + $0x398] sm:$0xff]
  %v149 = vld [vmem:[%s0 + $0x3a0] sm:$0xff]
  %v150 = vld [vmem:[%s0 + $0x3a8] sm:$0xff]
  %v151 = vld [vmem:[%s0 + $0x3b0] sm:$0xff]
  %v152 = vld [vmem:[%s0 + $0x3b8] sm:$0xff]
  %v153 = vld [vmem:[%s0 + $0x3c0] sm:$0xff]
  %v154 = vld [vmem:[%s0 + $0x3c8] sm:$0xff]
  %v155 = vld [vmem:[%s0 + $0x3d0] sm:$0xff]
  %v156 = vld [vmem:[%s0 + $0x3d8] sm:$0xff]
  %v157 = vld [vmem:[%s0 + $0x3e0] sm:$0xff]
  %v158 = vld [vmem:[%s0 + $0x3e8] sm:$0xff]
  %v159 = vld [vmem:[%s0 + $0x3f0] sm:$0xff]
  %v160 = vld [vmem:[%s0 + $0x3f8] sm:$0xff]
  %v161 = vld [vmem:[%s1] sm:$0xf]
  %v162 = vld [vmem:[%s1 + $0x4] sm:$0xf]
  %v163 = vld [vmem:[%s1 + $0x8] sm:$0xf]
  %v164 = vld [vmem:[%s1 + $0xc] sm:$0xf]
  %v165 = vld [vmem:[%s1 + $0x10] sm:$0xf]
  %v166 = vld [vmem:[%s1 + $0x14] sm:$0xf]
  %v167 = vld [vmem:[%s1 + $0x18] sm:$0xf]
  %v168 = vld [vmem:[%s1 + $0x1c] sm:$0xf]
  %v169 = vld [vmem:[%s1 + $0x20] sm:$0xf]
  %v170 = vld [vmem:[%s1 + $0x24] sm:$0xf]
  %v171 = vld [vmem:[%s1 + $0x28] sm:$0xf]
  %v172 = vld [vmem:[%s1 + $0x2c] sm:$0xf]
  %v173 = vld [vmem:[%s1 + $0x30] sm:$0xf]
  %v174 = vld [vmem:[%s1 + $0x34] sm:$0xf]
  %v175 = vld [vmem:[%s1 + $0x38] sm:$0xf]
  %v176 = vld [vmem:[%s1 + $0x3c] sm:$0xf]
  %v177 = vld [vmem:[%s1 + $0x40] sm:$0xf]
  %v178 = vld [vmem:[%s1 + $0x44] sm:$0xf]
  %v179 = vld [vmem:[%s1 + $0x48] sm:$0xf]
  %v180 = vld [vmem:[%s1 + $0x4c] sm:$0xf]
  %v181 = vld [vmem:[%s1 + $0x50] sm:$0xf]
  %v182 = vld [vmem:[%s1 + $0x54] sm:$0xf]
  %v183 = vld [vmem:[%s1 + $0x58] sm:$0xf]
  %v184 = vld [vmem:[%s1 + $0x5c] sm:$0xf]
  %v185 = vld [vmem:[%s1 + $0x60] sm:$0xf]
  %v186 = vld [vmem:[%s1 + $0x64] sm:$0xf]
  %v187 = vld [vmem:[%s1 + $0x68] sm:$0xf]
  %v188 = vld [vmem:[%s1 + $0x6c] sm:$0xf]
  %v189 = vld [vmem:[%s1 + $0x70] sm:$0xf]
  %v190 = vld [vmem:[%s1 + $0x74] sm:$0xf]
  %v191 = vld [vmem:[%s1 + $0x78] sm:$0xf]
  %v192 = vld [vmem:[%s1 + $0x7c] sm:$0xf]
  %v193 = vld [vmem:[%s1 + $0x80] sm:$0xf]
  %v194 = vld [vmem:[%s1 + $0x84] sm:$0xf]
  %v195 = vld [vmem:[%s1 + $0x88] sm:$0xf]
  %v196 = vld [vmem:[%s1 + $0x8c] sm:$0xf]
  %v197 = vld [vmem:[%s1 + $0x90] sm:$0xf]
  %v198 = vld [vmem:[%s1 + $0x94] sm:$0xf]
  %v199 = vld [vmem:[%s1 + $0x98] sm:$0xf]
  %v200 = vld [vmem:[%s1 + $0x9c] sm:$0xf]
  %v201 = vld [vmem:[%s1 + $0xa0] sm:$0xf]
  %v202 = vld [vmem:[%s1 + $0xa4] sm:$0xf]
  %v203 = vld [vmem:[%s1 + $0xa8] sm:$0xf]
  %v204 = vld [vmem:[%s1 + $0xac] sm:$0xf]
  %v205 = vld [vmem:[%s1 + $0xb0] sm:$0xf]
  %v206 = vld [vmem:[%s1 + $0xb4] sm:$0xf]
  %v207 = vld [vmem:[%s1 + $0xb8] sm:$0xf]
  %v208 = vld [vmem:[%s1 + $0xbc] sm:$0xf]
  %v209 = vld [vmem:[%s1 + $0xc0] sm:$0xf]
  %v210 = vld [vmem:[%s1 + $0xc4] sm:$0xf]
  %v211 = vld [vmem:[%s1 + $0xc8] sm:$0xf]
  %v212 = vld [vmem:[%s1 + $0xcc] sm:$0xf]
  %v213 = vld [vmem:[%s1 + $0xd0] sm:$0xf]
  %v214 = vld [vmem:[%s1 + $0xd4] sm:$0xf]
  %v215 = vld [vmem:[%s1 + $0xd8] sm:$0xf]
  %v216 = vld [vmem:[%s1 + $0xdc] sm:$0xf]
  %v217 = vld [vmem:[%s1 + $0xe0] sm:$0xf]
  %v218 = vld [vmem:[%s1 + $0xe4] sm:$0xf]
  %v219 = vld [vmem:[%s1 + $0xe8] sm:$0xf]
  %v220 = vld [vmem:[%s1 + $0xec] sm:$0xf]
  %v221 = vld [vmem:[%s1 + $0xf0] sm:$0xf]
  %v222 = vld [vmem:[%s1 + $0xf4] sm:$0xf]
  %v223 = vld [vmem:[%s1 + $0xf8] sm:$0xf]
  %v224 = vld [vmem:[%s1 + $0xfc] sm:$0xf]
  %v353 = vunpack.c.l.b16 %v33
  %v354 = vunpack.c.h.b16 %v33
  %v355 = vunpack.c.l.b16 %v34
  %v356 = vunpack.c.h.b16 %v34
  %v357 = vunpack.c.l.b16 %v35
  %v358 = vunpack.c.h.b16 %v35
  %v359 = vunpack.c.l.b16 %v36
  %v360 = vunpack.c.h.b16 %v36
  %v361 = vunpack.c.l.b16 %v37
  %v362 = vunpack.c.h.b16 %v37
  %v363 = vunpack.c.l.b16 %v38
  %v364 = vunpack.c.h.b16 %v38
  %v365 = vunpack.c.l.b16 %v39
  %v366 = vunpack.c.h.b16 %v39
  %v367 = vunpack.c.l.b16 %v40
  %v368 = vunpack.c.h.b16 %v40
  %v369 = vunpack.c.l.b16 %v41
  %v370 = vunpack.c.h.b16 %v41
  %v371 = vunpack.c.l.b16 %v42
  %v372 = vunpack.c.h.b16 %v42
  %v373 = vunpack.c.l.b16 %v43
  %v374 = vunpack.c.h.b16 %v43
  %v375 = vunpack.c.l.b16 %v44
  %v376 = vunpack.c.h.b16 %v44
  %v377 = vunpack.c.l.b16 %v45
  %v378 = vunpack.c.h.b16 %v45
  %v379 = vunpack.c.l.b16 %v46
  %v380 = vunpack.c.h.b16 %v46
  %v381 = vunpack.c.l.b16 %v47
  %v382 = vunpack.c.h.b16 %v47
  %v383 = vunpack.c.l.b16 %v48
  %v384 = vunpack.c.h.b16 %v48
  %v385 = vunpack.c.l.b16 %v49
  %v386 = vunpack.c.h.b16 %v49
  %v387 = vunpack.c.l.b16 %v50
  %v388 = vunpack.c.h.b16 %v50
  %v389 = vunpack.c.l.b16 %v51
  %v390 = vunpack.c.h.b16 %v51
  %v391 = vunpack.c.l.b16 %v52
  %v392 = vunpack.c.h.b16 %v52
  %v393 = vunpack.c.l.b16 %v53
  %v394 = vunpack.c.h.b16 %v53
  %v395 = vunpack.c.l.b16 %v54
  %v396 = vunpack.c.h.b16 %v54
  %v397 = vunpack.c.l.b16 %v55
  %v398 = vunpack.c.h.b16 %v55
  %v399 = vunpack.c.l.b16 %v56
  %v400 = vunpack.c.h.b16 %v56
  %v401 = vunpack.c.l.b16 %v57
  %v402 = vunpack.c.h.b16 %v57
  %v403 = vunpack.c.l.b16 %v58
  %v404 = vunpack.c.h.b16 %v58
  %v405 = vunpack.c.l.b16 %v59
  %v406 = vunpack.c.h.b16 %v59
  %v407 = vunpack.c.l.b16 %v60
  %v408 = vunpack.c.h.b16 %v60
  %v409 = vunpack.c.l.b16 %v61
  %v410 = vunpack.c.h.b16 %v61
  %v411 = vunpack.c.l.b16 %v62
  %v412 = vunpack.c.h.b16 %v62
  %v413 = vunpack.c.l.b16 %v63
  %v414 = vunpack.c.h.b16 %v63
  %v415 = vunpack.c.l.b16 %v64
  %v416 = vunpack.c.h.b16 %v64
  %v417 = vunpack.c.l.b16 %v65
  %v418 = vunpack.c.h.b16 %v65
  %v419 = vunpack.c.l.b16 %v66
  %v420 = vunpack.c.h.b16 %v66
  %v421 = vunpack.c.l.b16 %v67
  %v422 = vunpack.c.h.b16 %v67
  %v423 = vunpack.c.l.b16 %v68
  %v424 = vunpack.c.h.b16 %v68
  %v425 = vunpack.c.l.b16 %v69
  %v426 = vunpack.c.h.b16 %v69
  %v427 = vunpack.c.l.b16 %v70
  %v428 = vunpack.c.h.b16 %v70
  %v429 = vunpack.c.l.b16 %v71
  %v430 = vunpack.c.h.b16 %v71
  %v431 = vunpack.c.l.b16 %v72
  %v432 = vunpack.c.h.b16 %v72
  %v433 = vunpack.c.l.b16 %v73
  %v434 = vunpack.c.h.b16 %v73
  %v435 = vunpack.c.l.b16 %v74
  %v436 = vunpack.c.h.b16 %v74
  %v437 = vunpack.c.l.b16 %v75
  %v438 = vunpack.c.h.b16 %v75
  %v439 = vunpack.c.l.b16 %v76
  %v440 = vunpack.c.h.b16 %v76
  %v441 = vunpack.c.l.b16 %v77
  %v442 = vunpack.c.h.b16 %v77
  %v443 = vunpack.c.l.b16 %v78
  %v444 = vunpack.c.h.b16 %v78
  %v445 = vunpack.c.l.b16 %v79
  %v446 = vunpack.c.h.b16 %v79
  %v447 = vunpack.c.l.b16 %v80
  %v448 = vunpack.c.h.b16 %v80
  %v449 = vunpack.c.l.b16 %v81
  %v450 = vunpack.c.h.b16 %v81
  %v451 = vunpack.c.l.b16 %v82
  %v452 = vunpack.c.h.b16 %v82
  %v453 = vunpack.c.l.b16 %v83
  %v454 = vunpack.c.h.b16 %v83
  %v455 = vunpack.c.l.b16 %v84
  %v456 = vunpack.c.h.b16 %v84
  %v457 = vunpack.c.l.b16 %v85
  %v458 = vunpack.c.h.b16 %v85
  %v459 = vunpack.c.l.b16 %v86
  %v460 = vunpack.c.h.b16 %v86
  %v461 = vunpack.c.l.b16 %v87
  %v462 = vunpack.c.h.b16 %v87
  %v463 = vunpack.c.l.b16 %v88
  %v464 = vunpack.c.h.b16 %v88
  %v465 = vunpack.c.l.b16 %v89
  %v466 = vunpack.c.h.b16 %v89
  %v467 = vunpack.c.l.b16 %v90
  %v468 = vunpack.c.h.b16 %v90
  %v469 = vunpack.c.l.b16 %v91
  %v470 = vunpack.c.h.b16 %v91
  %v471 = vunpack.c.l.b16 %v92
  %v472 = vunpack.c.h.b16 %v92
  %v473 = vunpack.c.l.b16 %v93
  %v474 = vunpack.c.h.b16 %v93
  %v475 = vunpack.c.l.b16 %v94
  %v476 = vunpack.c.h.b16 %v94
  %v477 = vunpack.c.l.b16 %v95
  %v478 = vunpack.c.h.b16 %v95
  %v479 = vunpack.c.l.b16 %v96
  %v480 = vunpack.c.h.b16 %v96
  %v481 = vunpack.c.l.b16 %v97
  %v482 = vunpack.c.h.b16 %v97
  %v483 = vunpack.c.l.b16 %v98
  %v484 = vunpack.c.h.b16 %v98
  %v485 = vunpack.c.l.b16 %v99
  %v486 = vunpack.c.h.b16 %v99
  %v487 = vunpack.c.l.b16 %v100
  %v488 = vunpack.c.h.b16 %v100
  %v489 = vunpack.c.l.b16 %v101
  %v490 = vunpack.c.h.b16 %v101
  %v491 = vunpack.c.l.b16 %v102
  %v492 = vunpack.c.h.b16 %v102
  %v493 = vunpack.c.l.b16 %v103
  %v494 = vunpack.c.h.b16 %v103
  %v495 = vunpack.c.l.b16 %v104
  %v496 = vunpack.c.h.b16 %v104
  %v497 = vunpack.c.l.b16 %v105
  %v498 = vunpack.c.h.b16 %v105
  %v499 = vunpack.c.l.b16 %v106
  %v500 = vunpack.c.h.b16 %v106
  %v501 = vunpack.c.l.b16 %v107
  %v502 = vunpack.c.h.b16 %v107
  %v503 = vunpack.c.l.b16 %v108
  %v504 = vunpack.c.h.b16 %v108
  %v505 = vunpack.c.l.b16 %v109
  %v506 = vunpack.c.h.b16 %v109
  %v507 = vunpack.c.l.b16 %v110
  %v508 = vunpack.c.h.b16 %v110
  %v509 = vunpack.c.l.b16 %v111
  %v510 = vunpack.c.h.b16 %v111
  %v511 = vunpack.c.l.b16 %v112
  %v512 = vunpack.c.h.b16 %v112
  %v513 = vunpack.c.l.b16 %v113
  %v514 = vunpack.c.h.b16 %v113
  %v515 = vunpack.c.l.b16 %v114
  %v516 = vunpack.c.h.b16 %v114
  %v517 = vunpack.c.l.b16 %v115
  %v518 = vunpack.c.h.b16 %v115
  %v519 = vunpack.c.l.b16 %v116
  %v520 = vunpack.c.h.b16 %v116
  %v521 = vunpack.c.l.b16 %v117
  %v522 = vunpack.c.h.b16 %v117
  %v523 = vunpack.c.l.b16 %v118
  %v524 = vunpack.c.h.b16 %v118
  %v525 = vunpack.c.l.b16 %v119
  %v526 = vunpack.c.h.b16 %v119
  %v527 = vunpack.c.l.b16 %v120
  %v528 = vunpack.c.h.b16 %v120
  %v529 = vunpack.c.l.b16 %v121
  %v530 = vunpack.c.h.b16 %v121
  %v531 = vunpack.c.l.b16 %v122
  %v532 = vunpack.c.h.b16 %v122
  %v533 = vunpack.c.l.b16 %v123
  %v534 = vunpack.c.h.b16 %v123
  %v535 = vunpack.c.l.b16 %v124
  %v536 = vunpack.c.h.b16 %v124
  %v537 = vunpack.c.l.b16 %v125
  %v538 = vunpack.c.h.b16 %v125
  %v539 = vunpack.c.l.b16 %v126
  %v540 = vunpack.c.h.b16 %v126
  %v541 = vunpack.c.l.b16 %v127
  %v542 = vunpack.c.h.b16 %v127
  %v543 = vunpack.c.l.b16 %v128
  %v544 = vunpack.c.h.b16 %v128
  %v545 = vunpack.c.l.b16 %v129
  %v546 = vunpack.c.h.b16 %v129
  %v547 = vunpack.c.l.b16 %v130
  %v548 = vunpack.c.h.b16 %v130
  %v549 = vunpack.c.l.b16 %v131
  %v550 = vunpack.c.h.b16 %v131
  %v551 = vunpack.c.l.b16 %v132
  %v552 = vunpack.c.h.b16 %v132
  %v553 = vunpack.c.l.b16 %v133
  %v554 = vunpack.c.h.b16 %v133
  %v555 = vunpack.c.l.b16 %v134
  %v556 = vunpack.c.h.b16 %v134
  %v557 = vunpack.c.l.b16 %v135
  %v558 = vunpack.c.h.b16 %v135
  %v559 = vunpack.c.l.b16 %v136
  %v560 = vunpack.c.h.b16 %v136
  %v561 = vunpack.c.l.b16 %v137
  %v562 = vunpack.c.h.b16 %v137
  %v563 = vunpack.c.l.b16 %v138
  %v564 = vunpack.c.h.b16 %v138
  %v565 = vunpack.c.l.b16 %v139
  %v566 = vunpack.c.h.b16 %v139
  %v567 = vunpack.c.l.b16 %v140
  %v568 = vunpack.c.h.b16 %v140
  %v569 = vunpack.c.l.b16 %v141
  %v570 = vunpack.c.h.b16 %v141
  %v571 = vunpack.c.l.b16 %v142
  %v572 = vunpack.c.h.b16 %v142
  %v573 = vunpack.c.l.b16 %v143
  %v574 = vunpack.c.h.b16 %v143
  %v575 = vunpack.c.l.b16 %v144
  %v576 = vunpack.c.h.b16 %v144
  %v577 = vunpack.c.l.b16 %v145
  %v578 = vunpack.c.h.b16 %v145
  %v579 = vunpack.c.l.b16 %v146
  %v580 = vunpack.c.h.b16 %v146
  %v581 = vunpack.c.l.b16 %v147
  %v582 = vunpack.c.h.b16 %v147
  %v583 = vunpack.c.l.b16 %v148
  %v584 = vunpack.c.h.b16 %v148
  %v585 = vunpack.c.l.b16 %v149
  %v586 = vunpack.c.h.b16 %v149
  %v587 = vunpack.c.l.b16 %v150
  %v588 = vunpack.c.h.b16 %v150
  %v589 = vunpack.c.l.b16 %v151
  %v590 = vunpack.c.h.b16 %v151
  %v591 = vunpack.c.l.b16 %v152
  %v592 = vunpack.c.h.b16 %v152
  %v593 = vunpack.c.l.b16 %v153
  %v594 = vunpack.c.h.b16 %v153
  %v595 = vunpack.c.l.b16 %v154
  %v596 = vunpack.c.h.b16 %v154
  %v597 = vunpack.c.l.b16 %v155
  %v598 = vunpack.c.h.b16 %v155
  %v599 = vunpack.c.l.b16 %v156
  %v600 = vunpack.c.h.b16 %v156
  %v601 = vunpack.c.l.b16 %v157
  %v602 = vunpack.c.h.b16 %v157
  %v603 = vunpack.c.l.b16 %v158
  %v604 = vunpack.c.h.b16 %v158
  %v605 = vunpack.c.l.b16 %v159
  %v606 = vunpack.c.h.b16 %v159
  %v607 = vunpack.c.l.b16 %v160
  %v608 = vunpack.c.h.b16 %v160
  %v609 = vpack.c.b16 %v357, %v353
  %v610 = vpack.c.b16 %v358, %v354
  %v611 = vpack.c.b16 %v359, %v355
  %v612 = vpack.c.b16 %v360, %v356
  %v613 = vpack.c.b16 %v365, %v361
  %v614 = vpack.c.b16 %v366, %v362
  %v615 = vpack.c.b16 %v367, %v363
  %v616 = vpack.c.b16 %v368, %v364
  %v617 = vpack.c.b16 %v373, %v369
  %v618 = vpack.c.b16 %v374, %v370
  %v619 = vpack.c.b16 %v375, %v371
  %v620 = vpack.c.b16 %v376, %v372
  %v621 = vpack.c.b16 %v381, %v377
  %v622 = vpack.c.b16 %v382, %v378
  %v623 = vpack.c.b16 %v383, %v379
  %v624 = vpack.c.b16 %v384, %v380
  %v625 = vpack.c.b16 %v389, %v385
  %v626 = vpack.c.b16 %v390, %v386
  %v627 = vpack.c.b16 %v391, %v387
  %v628 = vpack.c.b16 %v392, %v388
  %v629 = vpack.c.b16 %v397, %v393
  %v630 = vpack.c.b16 %v398, %v394
  %v631 = vpack.c.b16 %v399, %v395
  %v632 = vpack.c.b16 %v400, %v396
  %v633 = vpack.c.b16 %v405, %v401
  %v634 = vpack.c.b16 %v406, %v402
  %v635 = vpack.c.b16 %v407, %v403
  %v636 = vpack.c.b16 %v408, %v404
  %v637 = vpack.c.b16 %v413, %v409
  %v638 = vpack.c.b16 %v414, %v410
  %v639 = vpack.c.b16 %v415, %v411
  %v640 = vpack.c.b16 %v416, %v412
  %v641 = vpack.c.b16 %v421, %v417
  %v642 = vpack.c.b16 %v422, %v418
  %v643 = vpack.c.b16 %v423, %v419
  %v644 = vpack.c.b16 %v424, %v420
  %v645 = vpack.c.b16 %v429, %v425
  %v646 = vpack.c.b16 %v430, %v426
  %v647 = vpack.c.b16 %v431, %v427
  %v648 = vpack.c.b16 %v432, %v428
  %v649 = vpack.c.b16 %v437, %v433
  %v650 = vpack.c.b16 %v438, %v434
  %v651 = vpack.c.b16 %v439, %v435
  %v652 = vpack.c.b16 %v440, %v436
  %v653 = vpack.c.b16 %v445, %v441
  %v654 = vpack.c.b16 %v446, %v442
  %v655 = vpack.c.b16 %v447, %v443
  %v656 = vpack.c.b16 %v448, %v444
  %v657 = vpack.c.b16 %v453, %v449
  %v658 = vpack.c.b16 %v454, %v450
  %v659 = vpack.c.b16 %v455, %v451
  %v660 = vpack.c.b16 %v456, %v452
  %v661 = vpack.c.b16 %v461, %v457
  %v662 = vpack.c.b16 %v462, %v458
  %v663 = vpack.c.b16 %v463, %v459
  %v664 = vpack.c.b16 %v464, %v460
  %v665 = vpack.c.b16 %v469, %v465
  %v666 = vpack.c.b16 %v470, %v466
  %v667 = vpack.c.b16 %v471, %v467
  %v668 = vpack.c.b16 %v472, %v468
  %v669 = vpack.c.b16 %v477, %v473
  %v670 = vpack.c.b16 %v478, %v474
  %v671 = vpack.c.b16 %v479, %v475
  %v672 = vpack.c.b16 %v480, %v476
  %v673 = vpack.c.b16 %v485, %v481
  %v674 = vpack.c.b16 %v486, %v482
  %v675 = vpack.c.b16 %v487, %v483
  %v676 = vpack.c.b16 %v488, %v484
  %v677 = vpack.c.b16 %v493, %v489
  %v678 = vpack.c.b16 %v494, %v490
  %v679 = vpack.c.b16 %v495, %v491
  %v680 = vpack.c.b16 %v496, %v492
  %v681 = vpack.c.b16 %v501, %v497
  %v682 = vpack.c.b16 %v502, %v498
  %v683 = vpack.c.b16 %v503, %v499
  %v684 = vpack.c.b16 %v504, %v500
  %v685 = vpack.c.b16 %v509, %v505
  %v686 = vpack.c.b16 %v510, %v506
  %v687 = vpack.c.b16 %v511, %v507
  %v688 = vpack.c.b16 %v512, %v508
  %v689 = vpack.c.b16 %v517, %v513
  %v690 = vpack.c.b16 %v518, %v514
  %v691 = vpack.c.b16 %v519, %v515
  %v692 = vpack.c.b16 %v520, %v516
  %v693 = vpack.c.b16 %v525, %v521
  %v694 = vpack.c.b16 %v526, %v522
  %v695 = vpack.c.b16 %v527, %v523
  %v696 = vpack.c.b16 %v528, %v524
  %v697 = vpack.c.b16 %v533, %v529
  %v698 = vpack.c.b16 %v534, %v530
  %v699 = vpack.c.b16 %v535, %v531
  %v700 = vpack.c.b16 %v536, %v532
  %v701 = vpack.c.b16 %v541, %v537
  %v702 = vpack.c.b16 %v542, %v538
  %v703 = vpack.c.b16 %v543, %v539
  %v704 = vpack.c.b16 %v544, %v540
  %v705 = vpack.c.b16 %v549, %v545
  %v706 = vpack.c.b16 %v550, %v546
  %v707 = vpack.c.b16 %v551, %v547
  %v708 = vpack.c.b16 %v552, %v548
  %v709 = vpack.c.b16 %v557, %v553
  %v710 = vpack.c.b16 %v558, %v554
  %v711 = vpack.c.b16 %v559, %v555
  %v712 = vpack.c.b16 %v560, %v556
  %v713 = vpack.c.b16 %v565, %v561
  %v714 = vpack.c.b16 %v566, %v562
  %v715 = vpack.c.b16 %v567, %v563
  %v716 = vpack.c.b16 %v568, %v564
  %v717 = vpack.c.b16 %v573, %v569
  %v718 = vpack.c.b16 %v574, %v570
  %v719 = vpack.c.b16 %v575, %v571
  %v720 = vpack.c.b16 %v576, %v572
  %v721 = vpack.c.b16 %v581, %v577
  %v722 = vpack.c.b16 %v582, %v578
  %v723 = vpack.c.b16 %v583, %v579
  %v724 = vpack.c.b16 %v584, %v580
  %v725 = vpack.c.b16 %v589, %v585
  %v726 = vpack.c.b16 %v590, %v586
  %v727 = vpack.c.b16 %v591, %v587
  %v728 = vpack.c.b16 %v592, %v588
  %v729 = vpack.c.b16 %v597, %v593
  %v730 = vpack.c.b16 %v598, %v594
  %v731 = vpack.c.b16 %v599, %v595
  %v732 = vpack.c.b16 %v600, %v596
  %v733 = vpack.c.b16 %v605, %v601
  %v734 = vpack.c.b16 %v606, %v602
  %v735 = vpack.c.b16 %v607, %v603
  %v736 = vpack.c.b16 %v608, %v604
  %v929 = vunpack.c.l.b16 %v161
  %v930 = vunpack.c.l.b16 %v162
  %v931 = vunpack.c.l.b16 %v163
  %v932 = vunpack.c.l.b16 %v164
  %v933 = vunpack.c.l.b16 %v165
  %v934 = vunpack.c.l.b16 %v166
  %v935 = vunpack.c.l.b16 %v167
  %v936 = vunpack.c.l.b16 %v168
  %v937 = vunpack.c.l.b16 %v169
  %v938 = vunpack.c.l.b16 %v170
  %v939 = vunpack.c.l.b16 %v171
  %v940 = vunpack.c.l.b16 %v172
  %v941 = vunpack.c.l.b16 %v173
  %v942 = vunpack.c.l.b16 %v174
  %v943 = vunpack.c.l.b16 %v175
  %v944 = vunpack.c.l.b16 %v176
  %v945 = vunpack.c.l.b16 %v177
  %v946 = vunpack.c.l.b16 %v178
  %v947 = vunpack.c.l.b16 %v179
  %v948 = vunpack.c.l.b16 %v180
  %v949 = vunpack.c.l.b16 %v181
  %v950 = vunpack.c.l.b16 %v182
  %v951 = vunpack.c.l.b16 %v183
  %v952 = vunpack.c.l.b16 %v184
  %v953 = vunpack.c.l.b16 %v185
  %v954 = vunpack.c.l.b16 %v186
  %v955 = vunpack.c.l.b16 %v187
  %v956 = vunpack.c.l.b16 %v188
  %v957 = vunpack.c.l.b16 %v189
  %v958 = vunpack.c.l.b16 %v190
  %v959 = vunpack.c.l.b16 %v191
  %v960 = vunpack.c.l.b16 %v192
  %v961 = vunpack.c.l.b16 %v193
  %v962 = vunpack.c.l.b16 %v194
  %v963 = vunpack.c.l.b16 %v195
  %v964 = vunpack.c.l.b16 %v196
  %v965 = vunpack.c.l.b16 %v197
  %v966 = vunpack.c.l.b16 %v198
  %v967 = vunpack.c.l.b16 %v199
  %v968 = vunpack.c.l.b16 %v200
  %v969 = vunpack.c.l.b16 %v201
  %v970 = vunpack.c.l.b16 %v202
  %v971 = vunpack.c.l.b16 %v203
  %v972 = vunpack.c.l.b16 %v204
  %v973 = vunpack.c.l.b16 %v205
  %v974 = vunpack.c.l.b16 %v206
  %v975 = vunpack.c.l.b16 %v207
  %v976 = vunpack.c.l.b16 %v208
  %v977 = vunpack.c.l.b16 %v209
  %v978 = vunpack.c.l.b16 %v210
  %v979 = vunpack.c.l.b16 %v211
  %v980 = vunpack.c.l.b16 %v212
  %v981 = vunpack.c.l.b16 %v213
  %v982 = vunpack.c.l.b16 %v214
  %v983 = vunpack.c.l.b16 %v215
  %v984 = vunpack.c.l.b16 %v216
  %v985 = vunpack.c.l.b16 %v217
  %v986 = vunpack.c.l.b16 %v218
  %v987 = vunpack.c.l.b16 %v219
  %v988 = vunpack.c.l.b16 %v220
  %v989 = vunpack.c.l.b16 %v221
  %v990 = vunpack.c.l.b16 %v222
  %v991 = vunpack.c.l.b16 %v223
  %v992 = vunpack.c.l.b16 %v224
  %v993 = vpack.c.b16 %v930, %v929
  %v994 = vpack.c.b16 %v932, %v931
  %v995 = vpack.c.b16 %v934, %v933
  %v996 = vpack.c.b16 %v936, %v935
  %v997 = vpack.c.b16 %v938, %v937
  %v998 = vpack.c.b16 %v940, %v939
  %v999 = vpack.c.b16 %v942, %v941
  %v1000 = vpack.c.b16 %v944, %v943
  %v1001 = vpack.c.b16 %v946, %v945
  %v1002 = vpack.c.b16 %v948, %v947
  %v1003 = vpack.c.b16 %v950, %v949
  %v1004 = vpack.c.b16 %v952, %v951
  %v1005 = vpack.c.b16 %v954, %v953
  %v1006 = vpack.c.b16 %v956, %v955
  %v1007 = vpack.c.b16 %v958, %v957
  %v1008 = vpack.c.b16 %v960, %v959
  %v1009 = vpack.c.b16 %v962, %v961
  %v1010 = vpack.c.b16 %v964, %v963
  %v1011 = vpack.c.b16 %v966, %v965
  %v1012 = vpack.c.b16 %v968, %v967
  %v1013 = vpack.c.b16 %v970, %v969
  %v1014 = vpack.c.b16 %v972, %v971
  %v1015 = vpack.c.b16 %v974, %v973
  %v1016 = vpack.c.b16 %v976, %v975
  %v1017 = vpack.c.b16 %v978, %v977
  %v1018 = vpack.c.b16 %v980, %v979
  %v1019 = vpack.c.b16 %v982, %v981
  %v1020 = vpack.c.b16 %v984, %v983
  %v1021 = vpack.c.b16 %v986, %v985
  %v1022 = vpack.c.b16 %v988, %v987
  %v1023 = vpack.c.b16 %v990, %v989
  %v1024 = vpack.c.b16 %v992, %v991
  %1057 = vmatprep.subr.bf16.mxu0 0
  %1058 = vmatpush1.bf16.msra.mxu0 %v993
  %1059 = vmatprep.subr.bf16.mxu0 0
  %1060 = vmatpush1.bf16.msra.mxu0 %v994
  %1061 = vmatprep.subr.bf16.mxu0 0
  %1062 = vmatpush1.bf16.msra.mxu0 %v995
  %1063 = vmatprep.subr.bf16.mxu0 0
  %1064 = vmatpush1.bf16.msra.mxu0 %v996
  %1065 = vmatprep.subr.bf16.mxu0 0
  %1066 = vmatpush1.bf16.msra.mxu0 %v997
  %1067 = vmatprep.subr.bf16.mxu0 0
  %1068 = vmatpush1.bf16.msra.mxu0 %v998
  %1069 = vmatprep.subr.bf16.mxu0 0
  %1070 = vmatpush1.bf16.msra.mxu0 %v999
  %1071 = vmatprep.subr.bf16.mxu0 0
  %1072 = vmatpush1.bf16.msra.mxu0 %v1000
  %1073 = vmatprep.subr.bf16.mxu0 0
  %1074 = vmatpush1.bf16.msra.mxu0 %v1001
  %1075 = vmatprep.subr.bf16.mxu0 0
  %1076 = vmatpush1.bf16.msra.mxu0 %v1002
  %1077 = vmatprep.subr.bf16.mxu0 0
  %1078 = vmatpush1.bf16.msra.mxu0 %v1003
  %1079 = vmatprep.subr.bf16.mxu0 0
  %1080 = vmatpush1.bf16.msra.mxu0 %v1004
  %1081 = vmatprep.subr.bf16.mxu0 0
  %1082 = vmatpush1.bf16.msra.mxu0 %v1005
  %1083 = vmatprep.subr.bf16.mxu0 0
  %1084 = vmatpush1.bf16.msra.mxu0 %v1006
  %1085 = vmatprep.subr.bf16.mxu0 0
  %1086 = vmatpush1.bf16.msra.mxu0 %v1007
  %1087 = vmatprep.subr.bf16.mxu0 0
  %1088 = vmatpush1.bf16.msra.mxu0 %v1008
  %1089 = vmatprep.mubr.bf16.mxu0 %v610
  %1090 = vmatmul.mubr.bf16.gmra.mrb[0].mxu0 %v609
  %v1091 = vpop.f32.mrb[0].mxu0
  %v1092 = vadd.f32 0.0, %v1091
  %v1093 = vpop.f32.mrb[0].mxu0
  %v1094 = vpop.f32.mrb[0].mxu0
  %v1095 = vadd.f32 0.0, %v1094
  %v1096 = vpop.f32.mrb[0].mxu0
  %1097 = vmatprep.mubr.bf16.mxu0 %v614
  %1098 = vmatmul.mubr.bf16.gmra.mrb[0].mxu0 %v613
  %v1099 = vpop.f32.mrb[0].mxu0
  %v1100 = vadd.f32 0.0, %v1099
  %v1101 = vpop.f32.mrb[0].mxu0
  %v1102 = vpop.f32.mrb[0].mxu0
  %v1103 = vadd.f32 0.0, %v1102
  %v1104 = vpop.f32.mrb[0].mxu0
  %1105 = vmatprep.mubr.bf16.mxu0 %v618
  %1106 = vmatmul.mubr.bf16.gmra.mrb[0].mxu0 %v617
  %v1107 = vpop.f32.mrb[0].mxu0
  %v1108 = vadd.f32 0.0, %v1107
  %v1109 = vpop.f32.mrb[0].mxu0
  %v1110 = vpop.f32.mrb[0].mxu0
  %v1111 = vadd.f32 0.0, %v1110
  %v1112 = vpop.f32.mrb[0].mxu0
  %1113 = vmatprep.mubr.bf16.mxu0 %v622
  %1114 = vmatmul.mubr.bf16.gmra.mrb[0].mxu0 %v621
  %v1115 = vpop.f32.mrb[0].mxu0
  %v1116 = vadd.f32 0.0, %v1115
  %v1117 = vpop.f32.mrb[0].mxu0
  %v1118 = vpop.f32.mrb[0].mxu0
  %v1119 = vadd.f32 0.0, %v1118
  %v1120 = vpop.f32.mrb[0].mxu0
  %1121 = vmatprep.mubr.bf16.mxu0 %v626
  %1122 = vmatmul.mubr.bf16.gmra.mrb[0].mxu0 %v625
  %v1123 = vpop.f32.mrb[0].mxu0
  %v1124 = vadd.f32 0.0, %v1123
  %v1125 = vpop.f32.mrb[0].mxu0
  %v1126 = vpop.f32.mrb[0].mxu0
  %v1127 = vadd.f32 0.0, %v1126
  %v1128 = vpop.f32.mrb[0].mxu0
  %1129 = vmatprep.mubr.bf16.mxu0 %v630
  %1130 = vmatmul.mubr.bf16.gmra.mrb[0].mxu0 %v629
  %v1131 = vpop.f32.mrb[0].mxu0
  %v1132 = vadd.f32 0.0, %v1131
  %v1133 = vpop.f32.mrb[0].mxu0
  %v1134 = vpop.f32.mrb[0].mxu0
  %v1135 = vadd.f32 0.0, %v1134
  %v1136 = vpop.f32.mrb[0].mxu0
  %1137 = vmatprep.mubr.bf16.mxu0 %v634
  %1138 = vmatmul.mubr.bf16.gmra.mrb[0].mxu0 %v633
  %v1139 = vpop.f32.mrb[0].mxu0
  %v1140 = vadd.f32 0.0, %v1139
  %v1141 = vpop.f32.mrb[0].mxu0
  %v1142 = vpop.f32.mrb[0].mxu0
  %v1143 = vadd.f32 0.0, %v1142
  %v1144 = vpop.f32.mrb[0].mxu0
  %1145 = vmatprep.mubr.bf16.mxu0 %v638
  %1146 = vmatmul.mubr.bf16.gmra.mrb[0].mxu0 %v637
  %v1147 = vpop.f32.mrb[0].mxu0
  %v1148 = vadd.f32 0.0, %v1147
  %v1149 = vpop.f32.mrb[0].mxu0
  %v1150 = vpop.f32.mrb[0].mxu0
  %v1151 = vadd.f32 0.0, %v1150
  %v1152 = vpop.f32.mrb[0].mxu0
  %1153 = vmatprep.mubr.bf16.mxu0 %v642
  %1154 = vmatmul.mubr.bf16.gmra.mrb[0].mxu0 %v641
  %v1155 = vpop.f32.mrb[0].mxu0
  %v1156 = vadd.f32 0.0, %v1155
  %v1157 = vpop.f32.mrb[0].mxu0
  %v1158 = vpop.f32.mrb[0].mxu0
  %v1159 = vadd.f32 0.0, %v1158
  %v1160 = vpop.f32.mrb[0].mxu0
  %1161 = vmatprep.mubr.bf16.mxu0 %v646
  %1162 = vmatmul.mubr.bf16.gmra.mrb[0].mxu0 %v645
  %v1163 = vpop.f32.mrb[0].mxu0
  %v1164 = vadd.f32 0.0, %v1163
  %v1165 = vpop.f32.mrb[0].mxu0
  %v1166 = vpop.f32.mrb[0].mxu0
  %v1167 = vadd.f32 0.0, %v1166
  %v1168 = vpop.f32.mrb[0].mxu0
  %1169 = vmatprep.mubr.bf16.mxu0 %v650
  %1170 = vmatmul.mubr.bf16.gmra.mrb[0].mxu0 %v649
  %v1171 = vpop.f32.mrb[0].mxu0
  %v1172 = vadd.f32 0.0, %v1171
  %v1173 = vpop.f32.mrb[0].mxu0
  %v1174 = vpop.f32.mrb[0].mxu0
  %v1175 = vadd.f32 0.0, %v1174
  %v1176 = vpop.f32.mrb[0].mxu0
  %1177 = vmatprep.mubr.bf16.mxu0 %v654
  %1178 = vmatmul.mubr.bf16.gmra.mrb[0].mxu0 %v653
  %v1179 = vpop.f32.mrb[0].mxu0
  %v1180 = vadd.f32 0.0, %v1179
  %v1181 = vpop.f32.mrb[0].mxu0
  %v1182 = vpop.f32.mrb[0].mxu0
  %v1183 = vadd.f32 0.0, %v1182
  %v1184 = vpop.f32.mrb[0].mxu0
  %1185 = vmatprep.mubr.bf16.mxu0 %v658
  %1186 = vmatmul.mubr.bf16.gmra.mrb[0].mxu0 %v657
  %v1187 = vpop.f32.mrb[0].mxu0
  %v1188 = vadd.f32 0.0, %v1187
  %v1189 = vpop.f32.mrb[0].mxu0
  %v1190 = vpop.f32.mrb[0].mxu0
  %v1191 = vadd.f32 0.0, %v1190
  %v1192 = vpop.f32.mrb[0].mxu0
  %1193 = vmatprep.mubr.bf16.mxu0 %v662
  %1194 = vmatmul.mubr.bf16.gmra.mrb[0].mxu0 %v661
  %v1195 = vpop.f32.mrb[0].mxu0
  %v1196 = vadd.f32 0.0, %v1195
  %v1197 = vpop.f32.mrb[0].mxu0
  %v1198 = vpop.f32.mrb[0].mxu0
  %v1199 = vadd.f32 0.0, %v1198
  %v1200 = vpop.f32.mrb[0].mxu0
  %1201 = vmatprep.mubr.bf16.mxu0 %v666
  %1202 = vmatmul.mubr.bf16.gmra.mrb[0].mxu0 %v665
  %v1203 = vpop.f32.mrb[0].mxu0
  %v1204 = vadd.f32 0.0, %v1203
  %v1205 = vpop.f32.mrb[0].mxu0
  %v1206 = vpop.f32.mrb[0].mxu0
  %v1207 = vadd.f32 0.0, %v1206
  %v1208 = vpop.f32.mrb[0].mxu0
  %1209 = vmatprep.mubr.bf16.mxu0 %v670
  %1210 = vmatmul.mubr.bf16.gmra.mrb[0].mxu0 %v669
  %v1211 = vpop.f32.mrb[0].mxu0
  %v1212 = vadd.f32 0.0, %v1211
  %v1213 = vpop.f32.mrb[0].mxu0
  %v1214 = vpop.f32.mrb[0].mxu0
  %v1215 = vadd.f32 0.0, %v1214
  %v1216 = vpop.f32.mrb[0].mxu0
  %1217 = vmatprep.mubr.bf16.mxu0 %v674
  %1218 = vmatmul.mubr.bf16.gmra.mrb[0].mxu0 %v673
  %v1219 = vpop.f32.mrb[0].mxu0
  %v1220 = vadd.f32 0.0, %v1219
  %v1221 = vpop.f32.mrb[0].mxu0
  %v1222 = vpop.f32.mrb[0].mxu0
  %v1223 = vadd.f32 0.0, %v1222
  %v1224 = vpop.f32.mrb[0].mxu0
  %1225 = vmatprep.mubr.bf16.mxu0 %v678
  %1226 = vmatmul.mubr.bf16.gmra.mrb[0].mxu0 %v677
  %v1227 = vpop.f32.mrb[0].mxu0
  %v1228 = vadd.f32 0.0, %v1227
  %v1229 = vpop.f32.mrb[0].mxu0
  %v1230 = vpop.f32.mrb[0].mxu0
  %v1231 = vadd.f32 0.0, %v1230
  %v1232 = vpop.f32.mrb[0].mxu0
  %1233 = vmatprep.mubr.bf16.mxu0 %v682
  %1234 = vmatmul.mubr.bf16.gmra.mrb[0].mxu0 %v681
  %v1235 = vpop.f32.mrb[0].mxu0
  %v1236 = vadd.f32 0.0, %v1235
  %v1237 = vpop.f32.mrb[0].mxu0
  %v1238 = vpop.f32.mrb[0].mxu0
  %v1239 = vadd.f32 0.0, %v1238
  %v1240 = vpop.f32.mrb[0].mxu0
  %1241 = vmatprep.mubr.bf16.mxu0 %v686
  %1242 = vmatmul.mubr.bf16.gmra.mrb[0].mxu0 %v685
  %v1243 = vpop.f32.mrb[0].mxu0
  %v1244 = vadd.f32 0.0, %v1243
  %v1245 = vpop.f32.mrb[0].mxu0
  %v1246 = vpop.f32.mrb[0].mxu0
  %v1247 = vadd.f32 0.0, %v1246
  %v1248 = vpop.f32.mrb[0].mxu0
  %1249 = vmatprep.mubr.bf16.mxu0 %v690
  %1250 = vmatmul.mubr.bf16.gmra.mrb[0].mxu0 %v689
  %v1251 = vpop.f32.mrb[0].mxu0
  %v1252 = vadd.f32 0.0, %v1251
  %v1253 = vpop.f32.mrb[0].mxu0
  %v1254 = vpop.f32.mrb[0].mxu0
  %v1255 = vadd.f32 0.0, %v1254
  %v1256 = vpop.f32.mrb[0].mxu0
  %1257 = vmatprep.mubr.bf16.mxu0 %v694
  %1258 = vmatmul.mubr.bf16.gmra.mrb[0].mxu0 %v693
  %v1259 = vpop.f32.mrb[0].mxu0
  %v1260 = vadd.f32 0.0, %v1259
  %v1261 = vpop.f32.mrb[0].mxu0
  %v1262 = vpop.f32.mrb[0].mxu0
  %v1263 = vadd.f32 0.0, %v1262
  %v1264 = vpop.f32.mrb[0].mxu0
  %1265 = vmatprep.mubr.bf16.mxu0 %v698
  %1266 = vmatmul.mubr.bf16.gmra.mrb[0].mxu0 %v697
  %v1267 = vpop.f32.mrb[0].mxu0
  %v1268 = vadd.f32 0.0, %v1267
  %v1269 = vpop.f32.mrb[0].mxu0
  %v1270 = vpop.f32.mrb[0].mxu0
  %v1271 = vadd.f32 0.0, %v1270
  %v1272 = vpop.f32.mrb[0].mxu0
  %1273 = vmatprep.mubr.bf16.mxu0 %v702
  %1274 = vmatmul.mubr.bf16.gmra.mrb[0].mxu0 %v701
  %v1275 = vpop.f32.mrb[0].mxu0
  %v1276 = vadd.f32 0.0, %v1275
  %v1277 = vpop.f32.mrb[0].mxu0
  %v1278 = vpop.f32.mrb[0].mxu0
  %v1279 = vadd.f32 0.0, %v1278
  %v1280 = vpop.f32.mrb[0].mxu0
  %1281 = vmatprep.mubr.bf16.mxu0 %v706
  %1282 = vmatmul.mubr.bf16.gmra.mrb[0].mxu0 %v705
  %v1283 = vpop.f32.mrb[0].mxu0
  %v1284 = vadd.f32 0.0, %v1283
  %v1285 = vpop.f32.mrb[0].mxu0
  %v1286 = vpop.f32.mrb[0].mxu0
  %v1287 = vadd.f32 0.0, %v1286
  %v1288 = vpop.f32.mrb[0].mxu0
  %1289 = vmatprep.mubr.bf16.mxu0 %v710
  %1290 = vmatmul.mubr.bf16.gmra.mrb[0].mxu0 %v709
  %v1291 = vpop.f32.mrb[0].mxu0
  %v1292 = vadd.f32 0.0, %v1291
  %v1293 = vpop.f32.mrb[0].mxu0
  %v1294 = vpop.f32.mrb[0].mxu0
  %v1295 = vadd.f32 0.0, %v1294
  %v1296 = vpop.f32.mrb[0].mxu0
  %1297 = vmatprep.mubr.bf16.mxu0 %v714
  %1298 = vmatmul.mubr.bf16.gmra.mrb[0].mxu0 %v713
  %v1299 = vpop.f32.mrb[0].mxu0
  %v1300 = vadd.f32 0.0, %v1299
  %v1301 = vpop.f32.mrb[0].mxu0
  %v1302 = vpop.f32.mrb[0].mxu0
  %v1303 = vadd.f32 0.0, %v1302
  %v1304 = vpop.f32.mrb[0].mxu0
  %1305 = vmatprep.mubr.bf16.mxu0 %v718
  %1306 = vmatmul.mubr.bf16.gmra.mrb[0].mxu0 %v717
  %v1307 = vpop.f32.mrb[0].mxu0
  %v1308 = vadd.f32 0.0, %v1307
  %v1309 = vpop.f32.mrb[0].mxu0
  %v1310 = vpop.f32.mrb[0].mxu0
  %v1311 = vadd.f32 0.0, %v1310
  %v1312 = vpop.f32.mrb[0].mxu0
  %1313 = vmatprep.mubr.bf16.mxu0 %v722
  %1314 = vmatmul.mubr.bf16.gmra.mrb[0].mxu0 %v721
  %v1315 = vpop.f32.mrb[0].mxu0
  %v1316 = vadd.f32 0.0, %v1315
  %v1317 = vpop.f32.mrb[0].mxu0
  %v1318 = vpop.f32.mrb[0].mxu0
  %v1319 = vadd.f32 0.0, %v1318
  %v1320 = vpop.f32.mrb[0].mxu0
  %1321 = vmatprep.mubr.bf16.mxu0 %v726
  %1322 = vmatmul.mubr.bf16.gmra.mrb[0].mxu0 %v725
  %v1323 = vpop.f32.mrb[0].mxu0
  %v1324 = vadd.f32 0.0, %v1323
  %v1325 = vpop.f32.mrb[0].mxu0
  %v1326 = vpop.f32.mrb[0].mxu0
  %v1327 = vadd.f32 0.0, %v1326
  %v1328 = vpop.f32.mrb[0].mxu0
  %1329 = vmatprep.mubr.bf16.mxu0 %v730
  %1330 = vmatmul.mubr.bf16.gmra.mrb[0].mxu0 %v729
  %v1331 = vpop.f32.mrb[0].mxu0
  %v1332 = vadd.f32 0.0, %v1331
  %v1333 = vpop.f32.mrb[0].mxu0
  %v1334 = vpop.f32.mrb[0].mxu0
  %v1335 = vadd.f32 0.0, %v1334
  %v1336 = vpop.f32.mrb[0].mxu0
  %1337 = vmatprep.mubr.bf16.mxu0 %v734
  %1338 = vmatmul.mubr.bf16.gmra.mrb[0].mxu0 %v733
  %v1339 = vpop.f32.mrb[0].mxu0
  %v1340 = vadd.f32 0.0, %v1339
  %v1341 = vpop.f32.mrb[0].mxu0
  %v1342 = vpop.f32.mrb[0].mxu0
  %v1343 = vadd.f32 0.0, %v1342
  %v1344 = vpop.f32.mrb[0].mxu0
  %1345 = vdwg.mxu0
  %1346 = vmatprep.subr.bf16.mxu0 0
  %1347 = vmatpush1.bf16.msra.mxu0 %v1009
  %1348 = vmatprep.subr.bf16.mxu0 0
  %1349 = vmatpush1.bf16.msra.mxu0 %v1010
  %1350 = vmatprep.subr.bf16.mxu0 0
  %1351 = vmatpush1.bf16.msra.mxu0 %v1011
  %1352 = vmatprep.subr.bf16.mxu0 0
  %1353 = vmatpush1.bf16.msra.mxu0 %v1012
  %1354 = vmatprep.subr.bf16.mxu0 0
  %1355 = vmatpush1.bf16.msra.mxu0 %v1013
  %1356 = vmatprep.subr.bf16.mxu0 0
  %1357 = vmatpush1.bf16.msra.mxu0 %v1014
  %1358 = vmatprep.subr.bf16.mxu0 0
  %1359 = vmatpush1.bf16.msra.mxu0 %v1015
  %1360 = vmatprep.subr.bf16.mxu0 0
  %1361 = vmatpush1.bf16.msra.mxu0 %v1016
  %1362 = vmatprep.subr.bf16.mxu0 0
  %1363 = vmatpush1.bf16.msra.mxu0 %v1017
  %1364 = vmatprep.subr.bf16.mxu0 0
  %1365 = vmatpush1.bf16.msra.mxu0 %v1018
  %1366 = vmatprep.subr.bf16.mxu0 0
  %1367 = vmatpush1.bf16.msra.mxu0 %v1019
  %1368 = vmatprep.subr.bf16.mxu0 0
  %1369 = vmatpush1.bf16.msra.mxu0 %v1020
  %1370 = vmatprep.subr.bf16.mxu0 0
  %1371 = vmatpush1.bf16.msra.mxu0 %v1021
  %1372 = vmatprep.subr.bf16.mxu0 0
  %1373 = vmatpush1.bf16.msra.mxu0 %v1022
  %1374 = vmatprep.subr.bf16.mxu0 0
  %1375 = vmatpush1.bf16.msra.mxu0 %v1023
  %1376 = vmatprep.subr.bf16.mxu0 0
  %1377 = vmatpush1.bf16.msra.mxu0 %v1024
  %1378 = vmatprep.mubr.bf16.mxu0 %v612
  %1379 = vmatmul.mubr.bf16.gmra.mrb[0].mxu0 %v611
  %v1380 = vpop.f32.mrb[0].mxu0
  %v1381 = vadd.f32 %v1092, %v1380
  %v1382 = vpop.f32.mrb[0].mxu0
  %v1383 = vpop.f32.mrb[0].mxu0
  %v1384 = vadd.f32 %v1095, %v1383
  %v1385 = vpop.f32.mrb[0].mxu0
  %1386 = vmatprep.mubr.bf16.mxu0 %v616
  %1387 = vmatmul.mubr.bf16.gmra.mrb[0].mxu0 %v615
  %v1388 = vpop.f32.mrb[0].mxu0
  %v1389 = vadd.f32 %v1100, %v1388
  %v1390 = vpop.f32.mrb[0].mxu0
  %v1391 = vpop.f32.mrb[0].mxu0
  %v1392 = vadd.f32 %v1103, %v1391
  %v1393 = vpop.f32.mrb[0].mxu0
  %1394 = vmatprep.mubr.bf16.mxu0 %v620
  %1395 = vmatmul.mubr.bf16.gmra.mrb[0].mxu0 %v619
  %v1396 = vpop.f32.mrb[0].mxu0
  %v1397 = vadd.f32 %v1108, %v1396
  %v1398 = vpop.f32.mrb[0].mxu0
  %v1399 = vpop.f32.mrb[0].mxu0
  %v1400 = vadd.f32 %v1111, %v1399
  %v1401 = vpop.f32.mrb[0].mxu0
  %1402 = vmatprep.mubr.bf16.mxu0 %v624
  %1403 = vmatmul.mubr.bf16.gmra.mrb[0].mxu0 %v623
  %v1404 = vpop.f32.mrb[0].mxu0
  %v1405 = vadd.f32 %v1116, %v1404
  %v1406 = vpop.f32.mrb[0].mxu0
  %v1407 = vpop.f32.mrb[0].mxu0
  %v1408 = vadd.f32 %v1119, %v1407
  %v1409 = vpop.f32.mrb[0].mxu0
  %1410 = vmatprep.mubr.bf16.mxu0 %v628
  %1411 = vmatmul.mubr.bf16.gmra.mrb[0].mxu0 %v627
  %v1412 = vpop.f32.mrb[0].mxu0
  %v1413 = vadd.f32 %v1124, %v1412
  %v1414 = vpop.f32.mrb[0].mxu0
  %v1415 = vpop.f32.mrb[0].mxu0
  %v1416 = vadd.f32 %v1127, %v1415
  %v1417 = vpop.f32.mrb[0].mxu0
  %1418 = vmatprep.mubr.bf16.mxu0 %v632
  %1419 = vmatmul.mubr.bf16.gmra.mrb[0].mxu0 %v631
  %v1420 = vpop.f32.mrb[0].mxu0
  %v1421 = vadd.f32 %v1132, %v1420
  %v1422 = vpop.f32.mrb[0].mxu0
  %v1423 = vpop.f32.mrb[0].mxu0
  %v1424 = vadd.f32 %v1135, %v1423
  %v1425 = vpop.f32.mrb[0].mxu0
  %1426 = vmatprep.mubr.bf16.mxu0 %v636
  %1427 = vmatmul.mubr.bf16.gmra.mrb[0].mxu0 %v635
  %v1428 = vpop.f32.mrb[0].mxu0
  %v1429 = vadd.f32 %v1140, %v1428
  %v1430 = vpop.f32.mrb[0].mxu0
  %v1431 = vpop.f32.mrb[0].mxu0
  %v1432 = vadd.f32 %v1143, %v1431
  %v1433 = vpop.f32.mrb[0].mxu0
  %1434 = vmatprep.mubr.bf16.mxu0 %v640
  %1435 = vmatmul.mubr.bf16.gmra.mrb[0].mxu0 %v639
  %v1436 = vpop.f32.mrb[0].mxu0
  %v1437 = vadd.f32 %v1148, %v1436
  %v1438 = vpop.f32.mrb[0].mxu0
  %v1439 = vpop.f32.mrb[0].mxu0
  %v1440 = vadd.f32 %v1151, %v1439
  %v1441 = vpop.f32.mrb[0].mxu0
  %1442 = vmatprep.mubr.bf16.mxu0 %v644
  %1443 = vmatmul.mubr.bf16.gmra.mrb[0].mxu0 %v643
  %v1444 = vpop.f32.mrb[0].mxu0
  %v1445 = vadd.f32 %v1156, %v1444
  %v1446 = vpop.f32.mrb[0].mxu0
  %v1447 = vpop.f32.mrb[0].mxu0
  %v1448 = vadd.f32 %v1159, %v1447
  %v1449 = vpop.f32.mrb[0].mxu0
  %1450 = vmatprep.mubr.bf16.mxu0 %v648
  %1451 = vmatmul.mubr.bf16.gmra.mrb[0].mxu0 %v647
  %v1452 = vpop.f32.mrb[0].mxu0
  %v1453 = vadd.f32 %v1164, %v1452
  %v1454 = vpop.f32.mrb[0].mxu0
  %v1455 = vpop.f32.mrb[0].mxu0
  %v1456 = vadd.f32 %v1167, %v1455
  %v1457 = vpop.f32.mrb[0].mxu0
  %1458 = vmatprep.mubr.bf16.mxu0 %v652
  %1459 = vmatmul.mubr.bf16.gmra.mrb[0].mxu0 %v651
  %v1460 = vpop.f32.mrb[0].mxu0
  %v1461 = vadd.f32 %v1172, %v1460
  %v1462 = vpop.f32.mrb[0].mxu0
  %v1463 = vpop.f32.mrb[0].mxu0
  %v1464 = vadd.f32 %v1175, %v1463
  %v1465 = vpop.f32.mrb[0].mxu0
  %1466 = vmatprep.mubr.bf16.mxu0 %v656
  %1467 = vmatmul.mubr.bf16.gmra.mrb[0].mxu0 %v655
  %v1468 = vpop.f32.mrb[0].mxu0
  %v1469 = vadd.f32 %v1180, %v1468
  %v1470 = vpop.f32.mrb[0].mxu0
  %v1471 = vpop.f32.mrb[0].mxu0
  %v1472 = vadd.f32 %v1183, %v1471
  %v1473 = vpop.f32.mrb[0].mxu0
  %1474 = vmatprep.mubr.bf16.mxu0 %v660
  %1475 = vmatmul.mubr.bf16.gmra.mrb[0].mxu0 %v659
  %v1476 = vpop.f32.mrb[0].mxu0
  %v1477 = vadd.f32 %v1188, %v1476
  %v1478 = vpop.f32.mrb[0].mxu0
  %v1479 = vpop.f32.mrb[0].mxu0
  %v1480 = vadd.f32 %v1191, %v1479
  %v1481 = vpop.f32.mrb[0].mxu0
  %1482 = vmatprep.mubr.bf16.mxu0 %v664
  %1483 = vmatmul.mubr.bf16.gmra.mrb[0].mxu0 %v663
  %v1484 = vpop.f32.mrb[0].mxu0
  %v1485 = vadd.f32 %v1196, %v1484
  %v1486 = vpop.f32.mrb[0].mxu0
  %v1487 = vpop.f32.mrb[0].mxu0
  %v1488 = vadd.f32 %v1199, %v1487
  %v1489 = vpop.f32.mrb[0].mxu0
  %1490 = vmatprep.mubr.bf16.mxu0 %v668
  %1491 = vmatmul.mubr.bf16.gmra.mrb[0].mxu0 %v667
  %v1492 = vpop.f32.mrb[0].mxu0
  %v1493 = vadd.f32 %v1204, %v1492
  %v1494 = vpop.f32.mrb[0].mxu0
  %v1495 = vpop.f32.mrb[0].mxu0
  %v1496 = vadd.f32 %v1207, %v1495
  %v1497 = vpop.f32.mrb[0].mxu0
  %1498 = vmatprep.mubr.bf16.mxu0 %v672
  %1499 = vmatmul.mubr.bf16.gmra.mrb[0].mxu0 %v671
  %v1500 = vpop.f32.mrb[0].mxu0
  %v1501 = vadd.f32 %v1212, %v1500
  %v1502 = vpop.f32.mrb[0].mxu0
  %v1503 = vpop.f32.mrb[0].mxu0
  %v1504 = vadd.f32 %v1215, %v1503
  %v1505 = vpop.f32.mrb[0].mxu0
  %1506 = vmatprep.mubr.bf16.mxu0 %v676
  %1507 = vmatmul.mubr.bf16.gmra.mrb[0].mxu0 %v675
  %v1508 = vpop.f32.mrb[0].mxu0
  %v1509 = vadd.f32 %v1220, %v1508
  %v1510 = vpop.f32.mrb[0].mxu0
  %v1511 = vpop.f32.mrb[0].mxu0
  %v1512 = vadd.f32 %v1223, %v1511
  %v1513 = vpop.f32.mrb[0].mxu0
  %1514 = vmatprep.mubr.bf16.mxu0 %v680
  %1515 = vmatmul.mubr.bf16.gmra.mrb[0].mxu0 %v679
  %v1516 = vpop.f32.mrb[0].mxu0
  %v1517 = vadd.f32 %v1228, %v1516
  %v1518 = vpop.f32.mrb[0].mxu0
  %v1519 = vpop.f32.mrb[0].mxu0
  %v1520 = vadd.f32 %v1231, %v1519
  %v1521 = vpop.f32.mrb[0].mxu0
  %1522 = vmatprep.mubr.bf16.mxu0 %v684
  %1523 = vmatmul.mubr.bf16.gmra.mrb[0].mxu0 %v683
  %v1524 = vpop.f32.mrb[0].mxu0
  %v1525 = vadd.f32 %v1236, %v1524
  %v1526 = vpop.f32.mrb[0].mxu0
  %v1527 = vpop.f32.mrb[0].mxu0
  %v1528 = vadd.f32 %v1239, %v1527
  %v1529 = vpop.f32.mrb[0].mxu0
  %1530 = vmatprep.mubr.bf16.mxu0 %v688
  %1531 = vmatmul.mubr.bf16.gmra.mrb[0].mxu0 %v687
  %v1532 = vpop.f32.mrb[0].mxu0
  %v1533 = vadd.f32 %v1244, %v1532
  %v1534 = vpop.f32.mrb[0].mxu0
  %v1535 = vpop.f32.mrb[0].mxu0
  %v1536 = vadd.f32 %v1247, %v1535
  %v1537 = vpop.f32.mrb[0].mxu0
  %1538 = vmatprep.mubr.bf16.mxu0 %v692
  %1539 = vmatmul.mubr.bf16.gmra.mrb[0].mxu0 %v691
  %v1540 = vpop.f32.mrb[0].mxu0
  %v1541 = vadd.f32 %v1252, %v1540
  %v1542 = vpop.f32.mrb[0].mxu0
  %v1543 = vpop.f32.mrb[0].mxu0
  %v1544 = vadd.f32 %v1255, %v1543
  %v1545 = vpop.f32.mrb[0].mxu0
  %1546 = vmatprep.mubr.bf16.mxu0 %v696
  %1547 = vmatmul.mubr.bf16.gmra.mrb[0].mxu0 %v695
  %v1548 = vpop.f32.mrb[0].mxu0
  %v1549 = vadd.f32 %v1260, %v1548
  %v1550 = vpop.f32.mrb[0].mxu0
  %v1551 = vpop.f32.mrb[0].mxu0
  %v1552 = vadd.f32 %v1263, %v1551
  %v1553 = vpop.f32.mrb[0].mxu0
  %1554 = vmatprep.mubr.bf16.mxu0 %v700
  %1555 = vmatmul.mubr.bf16.gmra.mrb[0].mxu0 %v699
  %v1556 = vpop.f32.mrb[0].mxu0
  %v1557 = vadd.f32 %v1268, %v1556
  %v1558 = vpop.f32.mrb[0].mxu0
  %v1559 = vpop.f32.mrb[0].mxu0
  %v1560 = vadd.f32 %v1271, %v1559
  %v1561 = vpop.f32.mrb[0].mxu0
  %1562 = vmatprep.mubr.bf16.mxu0 %v704
  %1563 = vmatmul.mubr.bf16.gmra.mrb[0].mxu0 %v703
  %v1564 = vpop.f32.mrb[0].mxu0
  %v1565 = vadd.f32 %v1276, %v1564
  %v1566 = vpop.f32.mrb[0].mxu0
  %v1567 = vpop.f32.mrb[0].mxu0
  %v1568 = vadd.f32 %v1279, %v1567
  %v1569 = vpop.f32.mrb[0].mxu0
  %1570 = vmatprep.mubr.bf16.mxu0 %v708
  %1571 = vmatmul.mubr.bf16.gmra.mrb[0].mxu0 %v707
  %v1572 = vpop.f32.mrb[0].mxu0
  %v1573 = vadd.f32 %v1284, %v1572
  %v1574 = vpop.f32.mrb[0].mxu0
  %v1575 = vpop.f32.mrb[0].mxu0
  %v1576 = vadd.f32 %v1287, %v1575
  %v1577 = vpop.f32.mrb[0].mxu0
  %1578 = vmatprep.mubr.bf16.mxu0 %v712
  %1579 = vmatmul.mubr.bf16.gmra.mrb[0].mxu0 %v711
  %v1580 = vpop.f32.mrb[0].mxu0
  %v1581 = vadd.f32 %v1292, %v1580
  %v1582 = vpop.f32.mrb[0].mxu0
  %v1583 = vpop.f32.mrb[0].mxu0
  %v1584 = vadd.f32 %v1295, %v1583
  %v1585 = vpop.f32.mrb[0].mxu0
  %1586 = vmatprep.mubr.bf16.mxu0 %v716
  %1587 = vmatmul.mubr.bf16.gmra.mrb[0].mxu0 %v715
  %v1588 = vpop.f32.mrb[0].mxu0
  %v1589 = vadd.f32 %v1300, %v1588
  %v1590 = vpop.f32.mrb[0].mxu0
  %v1591 = vpop.f32.mrb[0].mxu0
  %v1592 = vadd.f32 %v1303, %v1591
  %v1593 = vpop.f32.mrb[0].mxu0
  %1594 = vmatprep.mubr.bf16.mxu0 %v720
  %1595 = vmatmul.mubr.bf16.gmra.mrb[0].mxu0 %v719
  %v1596 = vpop.f32.mrb[0].mxu0
  %v1597 = vadd.f32 %v1308, %v1596
  %v1598 = vpop.f32.mrb[0].mxu0
  %v1599 = vpop.f32.mrb[0].mxu0
  %v1600 = vadd.f32 %v1311, %v1599
  %v1601 = vpop.f32.mrb[0].mxu0
  %1602 = vmatprep.mubr.bf16.mxu0 %v724
  %1603 = vmatmul.mubr.bf16.gmra.mrb[0].mxu0 %v723
  %v1604 = vpop.f32.mrb[0].mxu0
  %v1605 = vadd.f32 %v1316, %v1604
  %v1606 = vpop.f32.mrb[0].mxu0
  %v1607 = vpop.f32.mrb[0].mxu0
  %v1608 = vadd.f32 %v1319, %v1607
  %v1609 = vpop.f32.mrb[0].mxu0
  %1610 = vmatprep.mubr.bf16.mxu0 %v728
  %1611 = vmatmul.mubr.bf16.gmra.mrb[0].mxu0 %v727
  %v1612 = vpop.f32.mrb[0].mxu0
  %v1613 = vadd.f32 %v1324, %v1612
  %v1614 = vpop.f32.mrb[0].mxu0
  %v1615 = vpop.f32.mrb[0].mxu0
  %v1616 = vadd.f32 %v1327, %v1615
  %v1617 = vpop.f32.mrb[0].mxu0
  %1618 = vmatprep.mubr.bf16.mxu0 %v732
  %1619 = vmatmul.mubr.bf16.gmra.mrb[0].mxu0 %v731
  %v1620 = vpop.f32.mrb[0].mxu0
  %v1621 = vadd.f32 %v1332, %v1620
  %v1622 = vpop.f32.mrb[0].mxu0
  %v1623 = vpop.f32.mrb[0].mxu0
  %v1624 = vadd.f32 %v1335, %v1623
  %v1625 = vpop.f32.mrb[0].mxu0
  %1626 = vmatprep.mubr.bf16.mxu0 %v736
  %1627 = vmatmul.mubr.bf16.gmra.mrb[0].mxu0 %v735
  %v1628 = vpop.f32.mrb[0].mxu0
  %v1629 = vadd.f32 %v1340, %v1628
  %v1630 = vpop.f32.mrb[0].mxu0
  %v1631 = vpop.f32.mrb[0].mxu0
  %v1632 = vadd.f32 %v1343, %v1631
  %v1633 = vpop.f32.mrb[0].mxu0
  %1634 = vdwg.mxu0
  %v1635 = vrot.slane %v1381, 4
  %v1636 = vmax.f32 %v1381, %v1635
  %v1637 = vrot.slane %v1636, 2
  %v1638 = vmax.f32 %v1636, %v1637
  %v1639 = vrot.slane %v1638, 1
  %v1640 = vmax.f32 %v1638, %v1639
  %v1641 = vrot.slane %v1384, 4
  %v1642 = vmax.f32 %v1384, %v1641
  %v1643 = vrot.slane %v1642, 2
  %v1644 = vmax.f32 %v1642, %v1643
  %v1645 = vrot.slane %v1644, 1
  %v1646 = vmax.f32 %v1644, %v1645
  %v1647 = vrot.slane %v1389, 4
  %v1648 = vmax.f32 %v1389, %v1647
  %v1649 = vrot.slane %v1648, 2
  %v1650 = vmax.f32 %v1648, %v1649
  %v1651 = vrot.slane %v1650, 1
  %v1652 = vmax.f32 %v1650, %v1651
  %v1653 = vrot.slane %v1392, 4
  %v1654 = vmax.f32 %v1392, %v1653
  %v1655 = vrot.slane %v1654, 2
  %v1656 = vmax.f32 %v1654, %v1655
  %v1657 = vrot.slane %v1656, 1
  %v1658 = vmax.f32 %v1656, %v1657
  %v1659 = vrot.slane %v1397, 4
  %v1660 = vmax.f32 %v1397, %v1659
  %v1661 = vrot.slane %v1660, 2
  %v1662 = vmax.f32 %v1660, %v1661
  %v1663 = vrot.slane %v1662, 1
  %v1664 = vmax.f32 %v1662, %v1663
  %v1665 = vrot.slane %v1400, 4
  %v1666 = vmax.f32 %v1400, %v1665
  %v1667 = vrot.slane %v1666, 2
  %v1668 = vmax.f32 %v1666, %v1667
  %v1669 = vrot.slane %v1668, 1
  %v1670 = vmax.f32 %v1668, %v1669
  %v1671 = vrot.slane %v1405, 4
  %v1672 = vmax.f32 %v1405, %v1671
  %v1673 = vrot.slane %v1672, 2
  %v1674 = vmax.f32 %v1672, %v1673
  %v1675 = vrot.slane %v1674, 1
  %v1676 = vmax.f32 %v1674, %v1675
  %v1677 = vrot.slane %v1408, 4
  %v1678 = vmax.f32 %v1408, %v1677
  %v1679 = vrot.slane %v1678, 2
  %v1680 = vmax.f32 %v1678, %v1679
  %v1681 = vrot.slane %v1680, 1
  %v1682 = vmax.f32 %v1680, %v1681
  %v1683 = vrot.slane %v1413, 4
  %v1684 = vmax.f32 %v1413, %v1683
  %v1685 = vrot.slane %v1684, 2
  %v1686 = vmax.f32 %v1684, %v1685
  %v1687 = vrot.slane %v1686, 1
  %v1688 = vmax.f32 %v1686, %v1687
  %v1689 = vrot.slane %v1416, 4
  %v1690 = vmax.f32 %v1416, %v1689
  %v1691 = vrot.slane %v1690, 2
  %v1692 = vmax.f32 %v1690, %v1691
  %v1693 = vrot.slane %v1692, 1
  %v1694 = vmax.f32 %v1692, %v1693
  %v1695 = vrot.slane %v1421, 4
  %v1696 = vmax.f32 %v1421, %v1695
  %v1697 = vrot.slane %v1696, 2
  %v1698 = vmax.f32 %v1696, %v1697
  %v1699 = vrot.slane %v1698, 1
  %v1700 = vmax.f32 %v1698, %v1699
  %v1701 = vrot.slane %v1424, 4
  %v1702 = vmax.f32 %v1424, %v1701
  %v1703 = vrot.slane %v1702, 2
  %v1704 = vmax.f32 %v1702, %v1703
  %v1705 = vrot.slane %v1704, 1
  %v1706 = vmax.f32 %v1704, %v1705
  %v1707 = vrot.slane %v1429, 4
  %v1708 = vmax.f32 %v1429, %v1707
  %v1709 = vrot.slane %v1708, 2
  %v1710 = vmax.f32 %v1708, %v1709
  %v1711 = vrot.slane %v1710, 1
  %v1712 = vmax.f32 %v1710, %v1711
  %v1713 = vrot.slane %v1432, 4
  %v1714 = vmax.f32 %v1432, %v1713
  %v1715 = vrot.slane %v1714, 2
  %v1716 = vmax.f32 %v1714, %v1715
  %v1717 = vrot.slane %v1716, 1
  %v1718 = vmax.f32 %v1716, %v1717
  %v1719 = vrot.slane %v1437, 4
  %v1720 = vmax.f32 %v1437, %v1719
  %v1721 = vrot.slane %v1720, 2
  %v1722 = vmax.f32 %v1720, %v1721
  %v1723 = vrot.slane %v1722, 1
  %v1724 = vmax.f32 %v1722, %v1723
  %v1725 = vrot.slane %v1440, 4
  %v1726 = vmax.f32 %v1440, %v1725
  %v1727 = vrot.slane %v1726, 2
  %v1728 = vmax.f32 %v1726, %v1727
  %v1729 = vrot.slane %v1728, 1
  %v1730 = vmax.f32 %v1728, %v1729
  %v1731 = vrot.slane %v1445, 4
  %v1732 = vmax.f32 %v1445, %v1731
  %v1733 = vrot.slane %v1732, 2
  %v1734 = vmax.f32 %v1732, %v1733
  %v1735 = vrot.slane %v1734, 1
  %v1736 = vmax.f32 %v1734, %v1735
  %v1737 = vrot.slane %v1448, 4
  %v1738 = vmax.f32 %v1448, %v1737
  %v1739 = vrot.slane %v1738, 2
  %v1740 = vmax.f32 %v1738, %v1739
  %v1741 = vrot.slane %v1740, 1
  %v1742 = vmax.f32 %v1740, %v1741
  %v1743 = vrot.slane %v1453, 4
  %v1744 = vmax.f32 %v1453, %v1743
  %v1745 = vrot.slane %v1744, 2
  %v1746 = vmax.f32 %v1744, %v1745
  %v1747 = vrot.slane %v1746, 1
  %v1748 = vmax.f32 %v1746, %v1747
  %v1749 = vrot.slane %v1456, 4
  %v1750 = vmax.f32 %v1456, %v1749
  %v1751 = vrot.slane %v1750, 2
  %v1752 = vmax.f32 %v1750, %v1751
  %v1753 = vrot.slane %v1752, 1
  %v1754 = vmax.f32 %v1752, %v1753
  %v1755 = vrot.slane %v1461, 4
  %v1756 = vmax.f32 %v1461, %v1755
  %v1757 = vrot.slane %v1756, 2
  %v1758 = vmax.f32 %v1756, %v1757
  %v1759 = vrot.slane %v1758, 1
  %v1760 = vmax.f32 %v1758, %v1759
  %v1761 = vrot.slane %v1464, 4
  %v1762 = vmax.f32 %v1464, %v1761
  %v1763 = vrot.slane %v1762, 2
  %v1764 = vmax.f32 %v1762, %v1763
  %v1765 = vrot.slane %v1764, 1
  %v1766 = vmax.f32 %v1764, %v1765
  %v1767 = vrot.slane %v1469, 4
  %v1768 = vmax.f32 %v1469, %v1767
  %v1769 = vrot.slane %v1768, 2
  %v1770 = vmax.f32 %v1768, %v1769
  %v1771 = vrot.slane %v1770, 1
  %v1772 = vmax.f32 %v1770, %v1771
  %v1773 = vrot.slane %v1472, 4
  %v1774 = vmax.f32 %v1472, %v1773
  %v1775 = vrot.slane %v1774, 2
  %v1776 = vmax.f32 %v1774, %v1775
  %v1777 = vrot.slane %v1776, 1
  %v1778 = vmax.f32 %v1776, %v1777
  %v1779 = vrot.slane %v1477, 4
  %v1780 = vmax.f32 %v1477, %v1779
  %v1781 = vrot.slane %v1780, 2
  %v1782 = vmax.f32 %v1780, %v1781
  %v1783 = vrot.slane %v1782, 1
  %v1784 = vmax.f32 %v1782, %v1783
  %v1785 = vrot.slane %v1480, 4
  %v1786 = vmax.f32 %v1480, %v1785
  %v1787 = vrot.slane %v1786, 2
  %v1788 = vmax.f32 %v1786, %v1787
  %v1789 = vrot.slane %v1788, 1
  %v1790 = vmax.f32 %v1788, %v1789
  %v1791 = vrot.slane %v1485, 4
  %v1792 = vmax.f32 %v1485, %v1791
  %v1793 = vrot.slane %v1792, 2
  %v1794 = vmax.f32 %v1792, %v1793
  %v1795 = vrot.slane %v1794, 1
  %v1796 = vmax.f32 %v1794, %v1795
  %v1797 = vrot.slane %v1488, 4
  %v1798 = vmax.f32 %v1488, %v1797
  %v1799 = vrot.slane %v1798, 2
  %v1800 = vmax.f32 %v1798, %v1799
  %v1801 = vrot.slane %v1800, 1
  %v1802 = vmax.f32 %v1800, %v1801
  %v1803 = vrot.slane %v1493, 4
  %v1804 = vmax.f32 %v1493, %v1803
  %v1805 = vrot.slane %v1804, 2
  %v1806 = vmax.f32 %v1804, %v1805
  %v1807 = vrot.slane %v1806, 1
  %v1808 = vmax.f32 %v1806, %v1807
  %v1809 = vrot.slane %v1496, 4
  %v1810 = vmax.f32 %v1496, %v1809
  %v1811 = vrot.slane %v1810, 2
  %v1812 = vmax.f32 %v1810, %v1811
  %v1813 = vrot.slane %v1812, 1
  %v1814 = vmax.f32 %v1812, %v1813
  %v1815 = vrot.slane %v1501, 4
  %v1816 = vmax.f32 %v1501, %v1815
  %v1817 = vrot.slane %v1816, 2
  %v1818 = vmax.f32 %v1816, %v1817
  %v1819 = vrot.slane %v1818, 1
  %v1820 = vmax.f32 %v1818, %v1819
  %v1821 = vrot.slane %v1504, 4
  %v1822 = vmax.f32 %v1504, %v1821
  %v1823 = vrot.slane %v1822, 2
  %v1824 = vmax.f32 %v1822, %v1823
  %v1825 = vrot.slane %v1824, 1
  %v1826 = vmax.f32 %v1824, %v1825
  %v1827 = vrot.slane %v1509, 4
  %v1828 = vmax.f32 %v1509, %v1827
  %v1829 = vrot.slane %v1828, 2
  %v1830 = vmax.f32 %v1828, %v1829
  %v1831 = vrot.slane %v1830, 1
  %v1832 = vmax.f32 %v1830, %v1831
  %v1833 = vrot.slane %v1512, 4
  %v1834 = vmax.f32 %v1512, %v1833
  %v1835 = vrot.slane %v1834, 2
  %v1836 = vmax.f32 %v1834, %v1835
  %v1837 = vrot.slane %v1836, 1
  %v1838 = vmax.f32 %v1836, %v1837
  %v1839 = vrot.slane %v1517, 4
  %v1840 = vmax.f32 %v1517, %v1839
  %v1841 = vrot.slane %v1840, 2
  %v1842 = vmax.f32 %v1840, %v1841
  %v1843 = vrot.slane %v1842, 1
  %v1844 = vmax.f32 %v1842, %v1843
  %v1845 = vrot.slane %v1520, 4
  %v1846 = vmax.f32 %v1520, %v1845
  %v1847 = vrot.slane %v1846, 2
  %v1848 = vmax.f32 %v1846, %v1847
  %v1849 = vrot.slane %v1848, 1
  %v1850 = vmax.f32 %v1848, %v1849
  %v1851 = vrot.slane %v1525, 4
  %v1852 = vmax.f32 %v1525, %v1851
  %v1853 = vrot.slane %v1852, 2
  %v1854 = vmax.f32 %v1852, %v1853
  %v1855 = vrot.slane %v1854, 1
  %v1856 = vmax.f32 %v1854, %v1855
  %v1857 = vrot.slane %v1528, 4
  %v1858 = vmax.f32 %v1528, %v1857
  %v1859 = vrot.slane %v1858, 2
  %v1860 = vmax.f32 %v1858, %v1859
  %v1861 = vrot.slane %v1860, 1
  %v1862 = vmax.f32 %v1860, %v1861
  %v1863 = vrot.slane %v1533, 4
  %v1864 = vmax.f32 %v1533, %v1863
  %v1865 = vrot.slane %v1864, 2
  %v1866 = vmax.f32 %v1864, %v1865
  %v1867 = vrot.slane %v1866, 1
  %v1868 = vmax.f32 %v1866, %v1867
  %v1869 = vrot.slane %v1536, 4
  %v1870 = vmax.f32 %v1536, %v1869
  %v1871 = vrot.slane %v1870, 2
  %v1872 = vmax.f32 %v1870, %v1871
  %v1873 = vrot.slane %v1872, 1
  %v1874 = vmax.f32 %v1872, %v1873
  %v1875 = vrot.slane %v1541, 4
  %v1876 = vmax.f32 %v1541, %v1875
  %v1877 = vrot.slane %v1876, 2
  %v1878 = vmax.f32 %v1876, %v1877
  %v1879 = vrot.slane %v1878, 1
  %v1880 = vmax.f32 %v1878, %v1879
  %v1881 = vrot.slane %v1544, 4
  %v1882 = vmax.f32 %v1544, %v1881
  %v1883 = vrot.slane %v1882, 2
  %v1884 = vmax.f32 %v1882, %v1883
  %v1885 = vrot.slane %v1884, 1
  %v1886 = vmax.f32 %v1884, %v1885
  %v1887 = vrot.slane %v1549, 4
  %v1888 = vmax.f32 %v1549, %v1887
  %v1889 = vrot.slane %v1888, 2
  %v1890 = vmax.f32 %v1888, %v1889
  %v1891 = vrot.slane %v1890, 1
  %v1892 = vmax.f32 %v1890, %v1891
  %v1893 = vrot.slane %v1552, 4
  %v1894 = vmax.f32 %v1552, %v1893
  %v1895 = vrot.slane %v1894, 2
  %v1896 = vmax.f32 %v1894, %v1895
  %v1897 = vrot.slane %v1896, 1
  %v1898 = vmax.f32 %v1896, %v1897
  %v1899 = vrot.slane %v1557, 4
  %v1900 = vmax.f32 %v1557, %v1899
  %v1901 = vrot.slane %v1900, 2
  %v1902 = vmax.f32 %v1900, %v1901
  %v1903 = vrot.slane %v1902, 1
  %v1904 = vmax.f32 %v1902, %v1903
  %v1905 = vrot.slane %v1560, 4
  %v1906 = vmax.f32 %v1560, %v1905
  %v1907 = vrot.slane %v1906, 2
  %v1908 = vmax.f32 %v1906, %v1907
  %v1909 = vrot.slane %v1908, 1
  %v1910 = vmax.f32 %v1908, %v1909
  %v1911 = vrot.slane %v1565, 4
  %v1912 = vmax.f32 %v1565, %v1911
  %v1913 = vrot.slane %v1912, 2
  %v1914 = vmax.f32 %v1912, %v1913
  %v1915 = vrot.slane %v1914, 1
  %v1916 = vmax.f32 %v1914, %v1915
  %v1917 = vrot.slane %v1568, 4
  %v1918 = vmax.f32 %v1568, %v1917
  %v1919 = vrot.slane %v1918, 2
  %v1920 = vmax.f32 %v1918, %v1919
  %v1921 = vrot.slane %v1920, 1
  %v1922 = vmax.f32 %v1920, %v1921
  %v1923 = vrot.slane %v1573, 4
  %v1924 = vmax.f32 %v1573, %v1923
  %v1925 = vrot.slane %v1924, 2
  %v1926 = vmax.f32 %v1924, %v1925
  %v1927 = vrot.slane %v1926, 1
  %v1928 = vmax.f32 %v1926, %v1927
  %v1929 = vrot.slane %v1576, 4
  %v1930 = vmax.f32 %v1576, %v1929
  %v1931 = vrot.slane %v1930, 2
  %v1932 = vmax.f32 %v1930, %v1931
  %v1933 = vrot.slane %v1932, 1
  %v1934 = vmax.f32 %v1932, %v1933
  %v1935 = vrot.slane %v1581, 4
  %v1936 = vmax.f32 %v1581, %v1935
  %v1937 = vrot.slane %v1936, 2
  %v1938 = vmax.f32 %v1936, %v1937
  %v1939 = vrot.slane %v1938, 1
  %v1940 = vmax.f32 %v1938, %v1939
  %v1941 = vrot.slane %v1584, 4
  %v1942 = vmax.f32 %v1584, %v1941
  %v1943 = vrot.slane %v1942, 2
  %v1944 = vmax.f32 %v1942, %v1943
  %v1945 = vrot.slane %v1944, 1
  %v1946 = vmax.f32 %v1944, %v1945
  %v1947 = vrot.slane %v1589, 4
  %v1948 = vmax.f32 %v1589, %v1947
  %v1949 = vrot.slane %v1948, 2
  %v1950 = vmax.f32 %v1948, %v1949
  %v1951 = vrot.slane %v1950, 1
  %v1952 = vmax.f32 %v1950, %v1951
  %v1953 = vrot.slane %v1592, 4
  %v1954 = vmax.f32 %v1592, %v1953
  %v1955 = vrot.slane %v1954, 2
  %v1956 = vmax.f32 %v1954, %v1955
  %v1957 = vrot.slane %v1956, 1
  %v1958 = vmax.f32 %v1956, %v1957
  %v1959 = vrot.slane %v1597, 4
  %v1960 = vmax.f32 %v1597, %v1959
  %v1961 = vrot.slane %v1960, 2
  %v1962 = vmax.f32 %v1960, %v1961
  %v1963 = vrot.slane %v1962, 1
  %v1964 = vmax.f32 %v1962, %v1963
  %v1965 = vrot.slane %v1600, 4
  %v1966 = vmax.f32 %v1600, %v1965
  %v1967 = vrot.slane %v1966, 2
  %v1968 = vmax.f32 %v1966, %v1967
  %v1969 = vrot.slane %v1968, 1
  %v1970 = vmax.f32 %v1968, %v1969
  %v1971 = vrot.slane %v1605, 4
  %v1972 = vmax.f32 %v1605, %v1971
  %v1973 = vrot.slane %v1972, 2
  %v1974 = vmax.f32 %v1972, %v1973
  %v1975 = vrot.slane %v1974, 1
  %v1976 = vmax.f32 %v1974, %v1975
  %v1977 = vrot.slane %v1608, 4
  %v1978 = vmax.f32 %v1608, %v1977
  %v1979 = vrot.slane %v1978, 2
  %v1980 = vmax.f32 %v1978, %v1979
  %v1981 = vrot.slane %v1980, 1
  %v1982 = vmax.f32 %v1980, %v1981
  %v1983 = vrot.slane %v1613, 4
  %v1984 = vmax.f32 %v1613, %v1983
  %v1985 = vrot.slane %v1984, 2
  %v1986 = vmax.f32 %v1984, %v1985
  %v1987 = vrot.slane %v1986, 1
  %v1988 = vmax.f32 %v1986, %v1987
  %v1989 = vrot.slane %v1616, 4
  %v1990 = vmax.f32 %v1616, %v1989
  %v1991 = vrot.slane %v1990, 2
  %v1992 = vmax.f32 %v1990, %v1991
  %v1993 = vrot.slane %v1992, 1
  %v1994 = vmax.f32 %v1992, %v1993
  %v1995 = vrot.slane %v1621, 4
  %v1996 = vmax.f32 %v1621, %v1995
  %v1997 = vrot.slane %v1996, 2
  %v1998 = vmax.f32 %v1996, %v1997
  %v1999 = vrot.slane %v1998, 1
  %v2000 = vmax.f32 %v1998, %v1999
  %v2001 = vrot.slane %v1624, 4
  %v2002 = vmax.f32 %v1624, %v2001
  %v2003 = vrot.slane %v2002, 2
  %v2004 = vmax.f32 %v2002, %v2003
  %v2005 = vrot.slane %v2004, 1
  %v2006 = vmax.f32 %v2004, %v2005
  %v2007 = vrot.slane %v1629, 4
  %v2008 = vmax.f32 %v1629, %v2007
  %v2009 = vrot.slane %v2008, 2
  %v2010 = vmax.f32 %v2008, %v2009
  %v2011 = vrot.slane %v2010, 1
  %v2012 = vmax.f32 %v2010, %v2011
  %v2013 = vrot.slane %v1632, 4
  %v2014 = vmax.f32 %v1632, %v2013
  %v2015 = vrot.slane %v2014, 2
  %v2016 = vmax.f32 %v2014, %v2015
  %v2017 = vrot.slane %v2016, 1
  %v2018 = vmax.f32 %v2016, %v2017
  %v2019 = vld [vmem:[%s2] sm:$0x1]
  %v2021 = vlaneseq
  %v2022 = vshrl.u32 %v2021, 7
  %v2023 = vsub.s32 0, %v2022
  %v2024 = vrot.slane %v2019, %v2023
  %v2026 = vadd.f32 %v1640, %v2024
  %v2027 = vadd.f32 %v1646, %v2024
  %v2028 = vadd.f32 %v1652, %v2024
  %v2029 = vadd.f32 %v1658, %v2024
  %v2030 = vadd.f32 %v1664, %v2024
  %v2031 = vadd.f32 %v1670, %v2024
  %v2032 = vadd.f32 %v1676, %v2024
  %v2033 = vadd.f32 %v1682, %v2024
  %v2034 = vadd.f32 %v1688, %v2024
  %v2035 = vadd.f32 %v1694, %v2024
  %v2036 = vadd.f32 %v1700, %v2024
  %v2037 = vadd.f32 %v1706, %v2024
  %v2038 = vadd.f32 %v1712, %v2024
  %v2039 = vadd.f32 %v1718, %v2024
  %v2040 = vadd.f32 %v1724, %v2024
  %v2041 = vadd.f32 %v1730, %v2024
  %v2042 = vadd.f32 %v1736, %v2024
  %v2043 = vadd.f32 %v1742, %v2024
  %v2044 = vadd.f32 %v1748, %v2024
  %v2045 = vadd.f32 %v1754, %v2024
  %v2046 = vadd.f32 %v1760, %v2024
  %v2047 = vadd.f32 %v1766, %v2024
  %v2048 = vadd.f32 %v1772, %v2024
  %v2049 = vadd.f32 %v1778, %v2024
  %v2050 = vadd.f32 %v1784, %v2024
  %v2051 = vadd.f32 %v1790, %v2024
  %v2052 = vadd.f32 %v1796, %v2024
  %v2053 = vadd.f32 %v1802, %v2024
  %v2054 = vadd.f32 %v1808, %v2024
  %v2055 = vadd.f32 %v1814, %v2024
  %v2056 = vadd.f32 %v1820, %v2024
  %v2057 = vadd.f32 %v1826, %v2024
  %v2058 = vadd.f32 %v1832, %v2024
  %v2059 = vadd.f32 %v1838, %v2024
  %v2060 = vadd.f32 %v1844, %v2024
  %v2061 = vadd.f32 %v1850, %v2024
  %v2062 = vadd.f32 %v1856, %v2024
  %v2063 = vadd.f32 %v1862, %v2024
  %v2064 = vadd.f32 %v1868, %v2024
  %v2065 = vadd.f32 %v1874, %v2024
  %v2066 = vadd.f32 %v1880, %v2024
  %v2067 = vadd.f32 %v1886, %v2024
  %v2068 = vadd.f32 %v1892, %v2024
  %v2069 = vadd.f32 %v1898, %v2024
  %v2070 = vadd.f32 %v1904, %v2024
  %v2071 = vadd.f32 %v1910, %v2024
  %v2072 = vadd.f32 %v1916, %v2024
  %v2073 = vadd.f32 %v1922, %v2024
  %v2074 = vadd.f32 %v1928, %v2024
  %v2075 = vadd.f32 %v1934, %v2024
  %v2076 = vadd.f32 %v1940, %v2024
  %v2077 = vadd.f32 %v1946, %v2024
  %v2078 = vadd.f32 %v1952, %v2024
  %v2079 = vadd.f32 %v1958, %v2024
  %v2080 = vadd.f32 %v1964, %v2024
  %v2081 = vadd.f32 %v1970, %v2024
  %v2082 = vadd.f32 %v1976, %v2024
  %v2083 = vadd.f32 %v1982, %v2024
  %v2084 = vadd.f32 %v1988, %v2024
  %v2085 = vadd.f32 %v1994, %v2024
  %v2086 = vadd.f32 %v2000, %v2024
  %v2087 = vadd.f32 %v2006, %v2024
  %v2088 = vadd.f32 %v2012, %v2024
  %v2089 = vadd.f32 %v2018, %v2024
  %v2090 = vmax.f32 %v2026, 0.0
  %v2091 = vmax.f32 %v2027, 0.0
  %v2092 = vmax.f32 %v2028, 0.0
  %v2093 = vmax.f32 %v2029, 0.0
  %v2094 = vmax.f32 %v2030, 0.0
  %v2095 = vmax.f32 %v2031, 0.0
  %v2096 = vmax.f32 %v2032, 0.0
  %v2097 = vmax.f32 %v2033, 0.0
  %v2098 = vmax.f32 %v2034, 0.0
  %v2099 = vmax.f32 %v2035, 0.0
  %v2100 = vmax.f32 %v2036, 0.0
  %v2101 = vmax.f32 %v2037, 0.0
  %v2102 = vmax.f32 %v2038, 0.0
  %v2103 = vmax.f32 %v2039, 0.0
  %v2104 = vmax.f32 %v2040, 0.0
  %v2105 = vmax.f32 %v2041, 0.0
  %v2106 = vmax.f32 %v2042, 0.0
  %v2107 = vmax.f32 %v2043, 0.0
  %v2108 = vmax.f32 %v2044, 0.0
  %v2109 = vmax.f32 %v2045, 0.0
  %v2110 = vmax.f32 %v2046, 0.0
  %v2111 = vmax.f32 %v2047, 0.0
  %v2112 = vmax.f32 %v2048, 0.0
  %v2113 = vmax.f32 %v2049, 0.0
  %v2114 = vmax.f32 %v2050, 0.0
  %v2115 = vmax.f32 %v2051, 0.0
  %v2116 = vmax.f32 %v2052, 0.0
  %v2117 = vmax.f32 %v2053, 0.0
  %v2118 = vmax.f32 %v2054, 0.0
  %v2119 = vmax.f32 %v2055, 0.0
  %v2120 = vmax.f32 %v2056, 0.0
  %v2121 = vmax.f32 %v2057, 0.0
  %v2122 = vmax.f32 %v2058, 0.0
  %v2123 = vmax.f32 %v2059, 0.0
  %v2124 = vmax.f32 %v2060, 0.0
  %v2125 = vmax.f32 %v2061, 0.0
  %v2126 = vmax.f32 %v2062, 0.0
  %v2127 = vmax.f32 %v2063, 0.0
  %v2128 = vmax.f32 %v2064, 0.0
  %v2129 = vmax.f32 %v2065, 0.0
  %v2130 = vmax.f32 %v2066, 0.0
  %v2131 = vmax.f32 %v2067, 0.0
  %v2132 = vmax.f32 %v2068, 0.0
  %v2133 = vmax.f32 %v2069, 0.0
  %v2134 = vmax.f32 %v2070, 0.0
  %v2135 = vmax.f32 %v2071, 0.0
  %v2136 = vmax.f32 %v2072, 0.0
  %v2137 = vmax.f32 %v2073, 0.0
  %v2138 = vmax.f32 %v2074, 0.0
  %v2139 = vmax.f32 %v2075, 0.0
  %v2140 = vmax.f32 %v2076, 0.0
  %v2141 = vmax.f32 %v2077, 0.0
  %v2142 = vmax.f32 %v2078, 0.0
  %v2143 = vmax.f32 %v2079, 0.0
  %v2144 = vmax.f32 %v2080, 0.0
  %v2145 = vmax.f32 %v2081, 0.0
  %v2146 = vmax.f32 %v2082, 0.0
  %v2147 = vmax.f32 %v2083, 0.0
  %v2148 = vmax.f32 %v2084, 0.0
  %v2149 = vmax.f32 %v2085, 0.0
  %v2150 = vmax.f32 %v2086, 0.0
  %v2151 = vmax.f32 %v2087, 0.0
  %v2152 = vmax.f32 %v2088, 0.0
  %v2153 = vmax.f32 %v2089, 0.0
  %v2162 = vrot.slane %v2098, 7
  %vm2163 = vcmask 1041409
  %v2164 = vsel %vm2163, %v2162, %v2090
  %v2165 = vrot.slane %v2106, 6
  %vm2166 = vcmask 1042434
  %v2167 = vsel %vm2166, %v2165, %v2164
  %v2168 = vrot.slane %v2114, 5
  %vm2169 = vcmask 1043459
  %v2170 = vsel %vm2169, %v2168, %v2167
  %v2171 = vrot.slane %v2122, 4
  %vm2172 = vcmask 1044484
  %v2173 = vsel %vm2172, %v2171, %v2170
  %v2174 = vrot.slane %v2130, 3
  %vm2175 = vcmask 1045509
  %v2176 = vsel %vm2175, %v2174, %v2173
  %v2177 = vrot.slane %v2138, 2
  %vm2178 = vcmask 1046534
  %v2179 = vsel %vm2178, %v2177, %v2176
  %v2180 = vrot.slane %v2146, 1
  %vm2181 = vcmask 1047559
  %v2182 = vsel %vm2181, %v2180, %v2179
  %v2192 = vrot.slane %v2099, 7
  %v2193 = vsel %vm2163, %v2192, %v2091
  %v2194 = vrot.slane %v2107, 6
  %v2195 = vsel %vm2166, %v2194, %v2193
  %v2196 = vrot.slane %v2115, 5
  %v2197 = vsel %vm2169, %v2196, %v2195
  %v2198 = vrot.slane %v2123, 4
  %v2199 = vsel %vm2172, %v2198, %v2197
  %v2200 = vrot.slane %v2131, 3
  %v2201 = vsel %vm2175, %v2200, %v2199
  %v2202 = vrot.slane %v2139, 2
  %v2203 = vsel %vm2178, %v2202, %v2201
  %v2204 = vrot.slane %v2147, 1
  %v2205 = vsel %vm2181, %v2204, %v2203
  %v2215 = vrot.slane %v2100, 7
  %v2216 = vsel %vm2163, %v2215, %v2092
  %v2217 = vrot.slane %v2108, 6
  %v2218 = vsel %vm2166, %v2217, %v2216
  %v2219 = vrot.slane %v2116, 5
  %v2220 = vsel %vm2169, %v2219, %v2218
  %v2221 = vrot.slane %v2124, 4
  %v2222 = vsel %vm2172, %v2221, %v2220
  %v2223 = vrot.slane %v2132, 3
  %v2224 = vsel %vm2175, %v2223, %v2222
  %v2225 = vrot.slane %v2140, 2
  %v2226 = vsel %vm2178, %v2225, %v2224
  %v2227 = vrot.slane %v2148, 1
  %v2228 = vsel %vm2181, %v2227, %v2226
  %v2238 = vrot.slane %v2101, 7
  %v2239 = vsel %vm2163, %v2238, %v2093
  %v2240 = vrot.slane %v2109, 6
  %v2241 = vsel %vm2166, %v2240, %v2239
  %v2242 = vrot.slane %v2117, 5
  %v2243 = vsel %vm2169, %v2242, %v2241
  %v2244 = vrot.slane %v2125, 4
  %v2245 = vsel %vm2172, %v2244, %v2243
  %v2246 = vrot.slane %v2133, 3
  %v2247 = vsel %vm2175, %v2246, %v2245
  %v2248 = vrot.slane %v2141, 2
  %v2249 = vsel %vm2178, %v2248, %v2247
  %v2250 = vrot.slane %v2149, 1
  %v2251 = vsel %vm2181, %v2250, %v2249
  %v2261 = vrot.slane %v2102, 7
  %v2262 = vsel %vm2163, %v2261, %v2094
  %v2263 = vrot.slane %v2110, 6
  %v2264 = vsel %vm2166, %v2263, %v2262
  %v2265 = vrot.slane %v2118, 5
  %v2266 = vsel %vm2169, %v2265, %v2264
  %v2267 = vrot.slane %v2126, 4
  %v2268 = vsel %vm2172, %v2267, %v2266
  %v2269 = vrot.slane %v2134, 3
  %v2270 = vsel %vm2175, %v2269, %v2268
  %v2271 = vrot.slane %v2142, 2
  %v2272 = vsel %vm2178, %v2271, %v2270
  %v2273 = vrot.slane %v2150, 1
  %v2274 = vsel %vm2181, %v2273, %v2272
  %v2284 = vrot.slane %v2103, 7
  %v2285 = vsel %vm2163, %v2284, %v2095
  %v2286 = vrot.slane %v2111, 6
  %v2287 = vsel %vm2166, %v2286, %v2285
  %v2288 = vrot.slane %v2119, 5
  %v2289 = vsel %vm2169, %v2288, %v2287
  %v2290 = vrot.slane %v2127, 4
  %v2291 = vsel %vm2172, %v2290, %v2289
  %v2292 = vrot.slane %v2135, 3
  %v2293 = vsel %vm2175, %v2292, %v2291
  %v2294 = vrot.slane %v2143, 2
  %v2295 = vsel %vm2178, %v2294, %v2293
  %v2296 = vrot.slane %v2151, 1
  %v2297 = vsel %vm2181, %v2296, %v2295
  %v2307 = vrot.slane %v2104, 7
  %v2308 = vsel %vm2163, %v2307, %v2096
  %v2309 = vrot.slane %v2112, 6
  %v2310 = vsel %vm2166, %v2309, %v2308
  %v2311 = vrot.slane %v2120, 5
  %v2312 = vsel %vm2169, %v2311, %v2310
  %v2313 = vrot.slane %v2128, 4
  %v2314 = vsel %vm2172, %v2313, %v2312
  %v2315 = vrot.slane %v2136, 3
  %v2316 = vsel %vm2175, %v2315, %v2314
  %v2317 = vrot.slane %v2144, 2
  %v2318 = vsel %vm2178, %v2317, %v2316
  %v2319 = vrot.slane %v2152, 1
  %v2320 = vsel %vm2181, %v2319, %v2318
  %v2330 = vrot.slane %v2105, 7
  %v2331 = vsel %vm2163, %v2330, %v2097
  %v2332 = vrot.slane %v2113, 6
  %v2333 = vsel %vm2166, %v2332, %v2331
  %v2334 = vrot.slane %v2121, 5
  %v2335 = vsel %vm2169, %v2334, %v2333
  %v2336 = vrot.slane %v2129, 4
  %v2337 = vsel %vm2172, %v2336, %v2335
  %v2338 = vrot.slane %v2137, 3
  %v2339 = vsel %vm2175, %v2338, %v2337
  %v2340 = vrot.slane %v2145, 2
  %v2341 = vsel %vm2178, %v2340, %v2339
  %v2342 = vrot.slane %v2153, 1
  %v2343 = vsel %vm2181, %v2342, %v2341
  %v2345 = vpack.c.bf16 %v2182, %v2182
  %v2346 = vpack.c.bf16 %v2205, %v2205
  %v2347 = vpack.c.bf16 %v2228, %v2228
  %v2348 = vpack.c.bf16 %v2251, %v2251
  %v2349 = vpack.c.bf16 %v2274, %v2274
  %v2350 = vpack.c.bf16 %v2297, %v2297
  %v2351 = vpack.c.bf16 %v2320, %v2320
  %v2352 = vpack.c.bf16 %v2343, %v2343
  %v2353 = vld [vmem:[%s3] sm:$0xff]
  %v2354 = vld [vmem:[%s3 + $0x8] sm:$0xff]
  %v2355 = vld [vmem:[%s3 + $0x10] sm:$0xff]
  %v2356 = vld [vmem:[%s3 + $0x18] sm:$0xff]
  %v2357 = vld [vmem:[%s3 + $0x20] sm:$0xff]
  %v2358 = vld [vmem:[%s3 + $0x28] sm:$0xff]
  %v2359 = vld [vmem:[%s3 + $0x30] sm:$0xff]
  %v2360 = vld [vmem:[%s3 + $0x38] sm:$0xff]
  %v2361 = vld [vmem:[%s3 + $0x40] sm:$0xff]
  %v2362 = vld [vmem:[%s3 + $0x48] sm:$0xff]
  %v2363 = vld [vmem:[%s3 + $0x50] sm:$0xff]
  %v2364 = vld [vmem:[%s3 + $0x58] sm:$0xff]
  %v2365 = vld [vmem:[%s3 + $0x60] sm:$0xff]
  %v2366 = vld [vmem:[%s3 + $0x68] sm:$0xff]
  %v2367 = vld [vmem:[%s3 + $0x70] sm:$0xff]
  %v2368 = vld [vmem:[%s3 + $0x78] sm:$0xff]
  %v2369 = vld [vmem:[%s3 + $0x80] sm:$0xff]
  %v2370 = vld [vmem:[%s3 + $0x88] sm:$0xff]
  %v2371 = vld [vmem:[%s3 + $0x90] sm:$0xff]
  %v2372 = vld [vmem:[%s3 + $0x98] sm:$0xff]
  %v2373 = vld [vmem:[%s3 + $0xa0] sm:$0xff]
  %v2374 = vld [vmem:[%s3 + $0xa8] sm:$0xff]
  %v2375 = vld [vmem:[%s3 + $0xb0] sm:$0xff]
  %v2376 = vld [vmem:[%s3 + $0xb8] sm:$0xff]
  %v2377 = vld [vmem:[%s3 + $0xc0] sm:$0xff]
  %v2378 = vld [vmem:[%s3 + $0xc8] sm:$0xff]
  %v2379 = vld [vmem:[%s3 + $0xd0] sm:$0xff]
  %v2380 = vld [vmem:[%s3 + $0xd8] sm:$0xff]
  %v2381 = vld [vmem:[%s3 + $0xe0] sm:$0xff]
  %v2382 = vld [vmem:[%s3 + $0xe8] sm:$0xff]
  %v2383 = vld [vmem:[%s3 + $0xf0] sm:$0xff]
  %v2384 = vld [vmem:[%s3 + $0xf8] sm:$0xff]
  %v2385 = vld [vmem:[%s3 + $0x100] sm:$0xff]
  %v2386 = vld [vmem:[%s3 + $0x108] sm:$0xff]
  %v2387 = vld [vmem:[%s3 + $0x110] sm:$0xff]
  %v2388 = vld [vmem:[%s3 + $0x118] sm:$0xff]
  %v2389 = vld [vmem:[%s3 + $0x120] sm:$0xff]
  %v2390 = vld [vmem:[%s3 + $0x128] sm:$0xff]
  %v2391 = vld [vmem:[%s3 + $0x130] sm:$0xff]
  %v2392 = vld [vmem:[%s3 + $0x138] sm:$0xff]
  %v2393 = vld [vmem:[%s3 + $0x140] sm:$0xff]
  %v2394 = vld [vmem:[%s3 + $0x148] sm:$0xff]
  %v2395 = vld [vmem:[%s3 + $0x150] sm:$0xff]
  %v2396 = vld [vmem:[%s3 + $0x158] sm:$0xff]
  %v2397 = vld [vmem:[%s3 + $0x160] sm:$0xff]
  %v2398 = vld [vmem:[%s3 + $0x168] sm:$0xff]
  %v2399 = vld [vmem:[%s3 + $0x170] sm:$0xff]
  %v2400 = vld [vmem:[%s3 + $0x178] sm:$0xff]
  %v2401 = vld [vmem:[%s3 + $0x180] sm:$0xff]
  %v2402 = vld [vmem:[%s3 + $0x188] sm:$0xff]
  %v2403 = vld [vmem:[%s3 + $0x190] sm:$0xff]
  %v2404 = vld [vmem:[%s3 + $0x198] sm:$0xff]
  %v2405 = vld [vmem:[%s3 + $0x1a0] sm:$0xff]
  %v2406 = vld [vmem:[%s3 + $0x1a8] sm:$0xff]
  %v2407 = vld [vmem:[%s3 + $0x1b0] sm:$0xff]
  %v2408 = vld [vmem:[%s3 + $0x1b8] sm:$0xff]
  %v2409 = vld [vmem:[%s3 + $0x1c0] sm:$0xff]
  %v2410 = vld [vmem:[%s3 + $0x1c8] sm:$0xff]
  %v2411 = vld [vmem:[%s3 + $0x1d0] sm:$0xff]
  %v2412 = vld [vmem:[%s3 + $0x1d8] sm:$0xff]
  %v2413 = vld [vmem:[%s3 + $0x1e0] sm:$0xff]
  %v2414 = vld [vmem:[%s3 + $0x1e8] sm:$0xff]
  %v2415 = vld [vmem:[%s3 + $0x1f0] sm:$0xff]
  %v2416 = vld [vmem:[%s3 + $0x1f8] sm:$0xff]
  %v2417 = vld [vmem:[%s3 + $0x200] sm:$0xff]
  %v2418 = vld [vmem:[%s3 + $0x208] sm:$0xff]
  %v2419 = vld [vmem:[%s3 + $0x210] sm:$0xff]
  %v2420 = vld [vmem:[%s3 + $0x218] sm:$0xff]
  %v2421 = vld [vmem:[%s3 + $0x220] sm:$0xff]
  %v2422 = vld [vmem:[%s3 + $0x228] sm:$0xff]
  %v2423 = vld [vmem:[%s3 + $0x230] sm:$0xff]
  %v2424 = vld [vmem:[%s3 + $0x238] sm:$0xff]
  %v2425 = vld [vmem:[%s3 + $0x240] sm:$0xff]
  %v2426 = vld [vmem:[%s3 + $0x248] sm:$0xff]
  %v2427 = vld [vmem:[%s3 + $0x250] sm:$0xff]
  %v2428 = vld [vmem:[%s3 + $0x258] sm:$0xff]
  %v2429 = vld [vmem:[%s3 + $0x260] sm:$0xff]
  %v2430 = vld [vmem:[%s3 + $0x268] sm:$0xff]
  %v2431 = vld [vmem:[%s3 + $0x270] sm:$0xff]
  %v2432 = vld [vmem:[%s3 + $0x278] sm:$0xff]
  %v2433 = vld [vmem:[%s3 + $0x280] sm:$0xff]
  %v2434 = vld [vmem:[%s3 + $0x288] sm:$0xff]
  %v2435 = vld [vmem:[%s3 + $0x290] sm:$0xff]
  %v2436 = vld [vmem:[%s3 + $0x298] sm:$0xff]
  %v2437 = vld [vmem:[%s3 + $0x2a0] sm:$0xff]
  %v2438 = vld [vmem:[%s3 + $0x2a8] sm:$0xff]
  %v2439 = vld [vmem:[%s3 + $0x2b0] sm:$0xff]
  %v2440 = vld [vmem:[%s3 + $0x2b8] sm:$0xff]
  %v2441 = vld [vmem:[%s3 + $0x2c0] sm:$0xff]
  %v2442 = vld [vmem:[%s3 + $0x2c8] sm:$0xff]
  %v2443 = vld [vmem:[%s3 + $0x2d0] sm:$0xff]
  %v2444 = vld [vmem:[%s3 + $0x2d8] sm:$0xff]
  %v2445 = vld [vmem:[%s3 + $0x2e0] sm:$0xff]
  %v2446 = vld [vmem:[%s3 + $0x2e8] sm:$0xff]
  %v2447 = vld [vmem:[%s3 + $0x2f0] sm:$0xff]
  %v2448 = vld [vmem:[%s3 + $0x2f8] sm:$0xff]
  %v2449 = vld [vmem:[%s3 + $0x300] sm:$0xff]
  %v2450 = vld [vmem:[%s3 + $0x308] sm:$0xff]
  %v2451 = vld [vmem:[%s3 + $0x310] sm:$0xff]
  %v2452 = vld [vmem:[%s3 + $0x318] sm:$0xff]
  %v2453 = vld [vmem:[%s3 + $0x320] sm:$0xff]
  %v2454 = vld [vmem:[%s3 + $0x328] sm:$0xff]
  %v2455 = vld [vmem:[%s3 + $0x330] sm:$0xff]
  %v2456 = vld [vmem:[%s3 + $0x338] sm:$0xff]
  %v2457 = vld [vmem:[%s3 + $0x340] sm:$0xff]
  %v2458 = vld [vmem:[%s3 + $0x348] sm:$0xff]
  %v2459 = vld [vmem:[%s3 + $0x350] sm:$0xff]
  %v2460 = vld [vmem:[%s3 + $0x358] sm:$0xff]
  %v2461 = vld [vmem:[%s3 + $0x360] sm:$0xff]
  %v2462 = vld [vmem:[%s3 + $0x368] sm:$0xff]
  %v2463 = vld [vmem:[%s3 + $0x370] sm:$0xff]
  %v2464 = vld [vmem:[%s3 + $0x378] sm:$0xff]
  %v2465 = vld [vmem:[%s3 + $0x380] sm:$0xff]
  %v2466 = vld [vmem:[%s3 + $0x388] sm:$0xff]
  %v2467 = vld [vmem:[%s3 + $0x390] sm:$0xff]
  %v2468 = vld [vmem:[%s3 + $0x398] sm:$0xff]
  %v2469 = vld [vmem:[%s3 + $0x3a0] sm:$0xff]
  %v2470 = vld [vmem:[%s3 + $0x3a8] sm:$0xff]
  %v2471 = vld [vmem:[%s3 + $0x3b0] sm:$0xff]
  %v2472 = vld [vmem:[%s3 + $0x3b8] sm:$0xff]
  %v2473 = vld [vmem:[%s3 + $0x3c0] sm:$0xff]
  %v2474 = vld [vmem:[%s3 + $0x3c8] sm:$0xff]
  %v2475 = vld [vmem:[%s3 + $0x3d0] sm:$0xff]
  %v2476 = vld [vmem:[%s3 + $0x3d8] sm:$0xff]
  %v2477 = vld [vmem:[%s3 + $0x3e0] sm:$0xff]
  %v2478 = vld [vmem:[%s3 + $0x3e8] sm:$0xff]
  %v2479 = vld [vmem:[%s3 + $0x3f0] sm:$0xff]
  %v2480 = vld [vmem:[%s3 + $0x3f8] sm:$0xff]
  %v2609 = vunpack.c.l.b16 %v2353
  %v2610 = vunpack.c.h.b16 %v2353
  %v2611 = vunpack.c.l.b16 %v2354
  %v2612 = vunpack.c.h.b16 %v2354
  %v2613 = vunpack.c.l.b16 %v2355
  %v2614 = vunpack.c.h.b16 %v2355
  %v2615 = vunpack.c.l.b16 %v2356
  %v2616 = vunpack.c.h.b16 %v2356
  %v2617 = vunpack.c.l.b16 %v2357
  %v2618 = vunpack.c.h.b16 %v2357
  %v2619 = vunpack.c.l.b16 %v2358
  %v2620 = vunpack.c.h.b16 %v2358
  %v2621 = vunpack.c.l.b16 %v2359
  %v2622 = vunpack.c.h.b16 %v2359
  %v2623 = vunpack.c.l.b16 %v2360
  %v2624 = vunpack.c.h.b16 %v2360
  %v2625 = vunpack.c.l.b16 %v2361
  %v2626 = vunpack.c.h.b16 %v2361
  %v2627 = vunpack.c.l.b16 %v2362
  %v2628 = vunpack.c.h.b16 %v2362
  %v2629 = vunpack.c.l.b16 %v2363
  %v2630 = vunpack.c.h.b16 %v2363
  %v2631 = vunpack.c.l.b16 %v2364
  %v2632 = vunpack.c.h.b16 %v2364
  %v2633 = vunpack.c.l.b16 %v2365
  %v2634 = vunpack.c.h.b16 %v2365
  %v2635 = vunpack.c.l.b16 %v2366
  %v2636 = vunpack.c.h.b16 %v2366
  %v2637 = vunpack.c.l.b16 %v2367
  %v2638 = vunpack.c.h.b16 %v2367
  %v2639 = vunpack.c.l.b16 %v2368
  %v2640 = vunpack.c.h.b16 %v2368
  %v2641 = vunpack.c.l.b16 %v2369
  %v2642 = vunpack.c.h.b16 %v2369
  %v2643 = vunpack.c.l.b16 %v2370
  %v2644 = vunpack.c.h.b16 %v2370
  %v2645 = vunpack.c.l.b16 %v2371
  %v2646 = vunpack.c.h.b16 %v2371
  %v2647 = vunpack.c.l.b16 %v2372
  %v2648 = vunpack.c.h.b16 %v2372
  %v2649 = vunpack.c.l.b16 %v2373
  %v2650 = vunpack.c.h.b16 %v2373
  %v2651 = vunpack.c.l.b16 %v2374
  %v2652 = vunpack.c.h.b16 %v2374
  %v2653 = vunpack.c.l.b16 %v2375
  %v2654 = vunpack.c.h.b16 %v2375
  %v2655 = vunpack.c.l.b16 %v2376
  %v2656 = vunpack.c.h.b16 %v2376
  %v2657 = vunpack.c.l.b16 %v2377
  %v2658 = vunpack.c.h.b16 %v2377
  %v2659 = vunpack.c.l.b16 %v2378
  %v2660 = vunpack.c.h.b16 %v2378
  %v2661 = vunpack.c.l.b16 %v2379
  %v2662 = vunpack.c.h.b16 %v2379
  %v2663 = vunpack.c.l.b16 %v2380
  %v2664 = vunpack.c.h.b16 %v2380
  %v2665 = vunpack.c.l.b16 %v2381
  %v2666 = vunpack.c.h.b16 %v2381
  %v2667 = vunpack.c.l.b16 %v2382
  %v2668 = vunpack.c.h.b16 %v2382
  %v2669 = vunpack.c.l.b16 %v2383
  %v2670 = vunpack.c.h.b16 %v2383
  %v2671 = vunpack.c.l.b16 %v2384
  %v2672 = vunpack.c.h.b16 %v2384
  %v2673 = vunpack.c.l.b16 %v2385
  %v2674 = vunpack.c.h.b16 %v2385
  %v2675 = vunpack.c.l.b16 %v2386
  %v2676 = vunpack.c.h.b16 %v2386
  %v2677 = vunpack.c.l.b16 %v2387
  %v2678 = vunpack.c.h.b16 %v2387
  %v2679 = vunpack.c.l.b16 %v2388
  %v2680 = vunpack.c.h.b16 %v2388
  %v2681 = vunpack.c.l.b16 %v2389
  %v2682 = vunpack.c.h.b16 %v2389
  %v2683 = vunpack.c.l.b16 %v2390
  %v2684 = vunpack.c.h.b16 %v2390
  %v2685 = vunpack.c.l.b16 %v2391
  %v2686 = vunpack.c.h.b16 %v2391
  %v2687 = vunpack.c.l.b16 %v2392
  %v2688 = vunpack.c.h.b16 %v2392
  %v2689 = vunpack.c.l.b16 %v2393
  %v2690 = vunpack.c.h.b16 %v2393
  %v2691 = vunpack.c.l.b16 %v2394
  %v2692 = vunpack.c.h.b16 %v2394
  %v2693 = vunpack.c.l.b16 %v2395
  %v2694 = vunpack.c.h.b16 %v2395
  %v2695 = vunpack.c.l.b16 %v2396
  %v2696 = vunpack.c.h.b16 %v2396
  %v2697 = vunpack.c.l.b16 %v2397
  %v2698 = vunpack.c.h.b16 %v2397
  %v2699 = vunpack.c.l.b16 %v2398
  %v2700 = vunpack.c.h.b16 %v2398
  %v2701 = vunpack.c.l.b16 %v2399
  %v2702 = vunpack.c.h.b16 %v2399
  %v2703 = vunpack.c.l.b16 %v2400
  %v2704 = vunpack.c.h.b16 %v2400
  %v2705 = vunpack.c.l.b16 %v2401
  %v2706 = vunpack.c.h.b16 %v2401
  %v2707 = vunpack.c.l.b16 %v2402
  %v2708 = vunpack.c.h.b16 %v2402
  %v2709 = vunpack.c.l.b16 %v2403
  %v2710 = vunpack.c.h.b16 %v2403
  %v2711 = vunpack.c.l.b16 %v2404
  %v2712 = vunpack.c.h.b16 %v2404
  %v2713 = vunpack.c.l.b16 %v2405
  %v2714 = vunpack.c.h.b16 %v2405
  %v2715 = vunpack.c.l.b16 %v2406
  %v2716 = vunpack.c.h.b16 %v2406
  %v2717 = vunpack.c.l.b16 %v2407
  %v2718 = vunpack.c.h.b16 %v2407
  %v2719 = vunpack.c.l.b16 %v2408
  %v2720 = vunpack.c.h.b16 %v2408
  %v2721 = vunpack.c.l.b16 %v2409
  %v2722 = vunpack.c.h.b16 %v2409
  %v2723 = vunpack.c.l.b16 %v2410
  %v2724 = vunpack.c.h.b16 %v2410
  %v2725 = vunpack.c.l.b16 %v2411
  %v2726 = vunpack.c.h.b16 %v2411
  %v2727 = vunpack.c.l.b16 %v2412
  %v2728 = vunpack.c.h.b16 %v2412
  %v2729 = vunpack.c.l.b16 %v2413
  %v2730 = vunpack.c.h.b16 %v2413
  %v2731 = vunpack.c.l.b16 %v2414
  %v2732 = vunpack.c.h.b16 %v2414
  %v2733 = vunpack.c.l.b16 %v2415
  %v2734 = vunpack.c.h.b16 %v2415
  %v2735 = vunpack.c.l.b16 %v2416
  %v2736 = vunpack.c.h.b16 %v2416
  %v2737 = vunpack.c.l.b16 %v2417
  %v2738 = vunpack.c.h.b16 %v2417
  %v2739 = vunpack.c.l.b16 %v2418
  %v2740 = vunpack.c.h.b16 %v2418
  %v2741 = vunpack.c.l.b16 %v2419
  %v2742 = vunpack.c.h.b16 %v2419
  %v2743 = vunpack.c.l.b16 %v2420
  %v2744 = vunpack.c.h.b16 %v2420
  %v2745 = vunpack.c.l.b16 %v2421
  %v2746 = vunpack.c.h.b16 %v2421
  %v2747 = vunpack.c.l.b16 %v2422
  %v2748 = vunpack.c.h.b16 %v2422
  %v2749 = vunpack.c.l.b16 %v2423
  %v2750 = vunpack.c.h.b16 %v2423
  %v2751 = vunpack.c.l.b16 %v2424
  %v2752 = vunpack.c.h.b16 %v2424
  %v2753 = vunpack.c.l.b16 %v2425
  %v2754 = vunpack.c.h.b16 %v2425
  %v2755 = vunpack.c.l.b16 %v2426
  %v2756 = vunpack.c.h.b16 %v2426
  %v2757 = vunpack.c.l.b16 %v2427
  %v2758 = vunpack.c.h.b16 %v2427
  %v2759 = vunpack.c.l.b16 %v2428
  %v2760 = vunpack.c.h.b16 %v2428
  %v2761 = vunpack.c.l.b16 %v2429
  %v2762 = vunpack.c.h.b16 %v2429
  %v2763 = vunpack.c.l.b16 %v2430
  %v2764 = vunpack.c.h.b16 %v2430
  %v2765 = vunpack.c.l.b16 %v2431
  %v2766 = vunpack.c.h.b16 %v2431
  %v2767 = vunpack.c.l.b16 %v2432
  %v2768 = vunpack.c.h.b16 %v2432
  %v2769 = vunpack.c.l.b16 %v2433
  %v2770 = vunpack.c.h.b16 %v2433
  %v2771 = vunpack.c.l.b16 %v2434
  %v2772 = vunpack.c.h.b16 %v2434
  %v2773 = vunpack.c.l.b16 %v2435
  %v2774 = vunpack.c.h.b16 %v2435
  %v2775 = vunpack.c.l.b16 %v2436
  %v2776 = vunpack.c.h.b16 %v2436
  %v2777 = vunpack.c.l.b16 %v2437
  %v2778 = vunpack.c.h.b16 %v2437
  %v2779 = vunpack.c.l.b16 %v2438
  %v2780 = vunpack.c.h.b16 %v2438
  %v2781 = vunpack.c.l.b16 %v2439
  %v2782 = vunpack.c.h.b16 %v2439
  %v2783 = vunpack.c.l.b16 %v2440
  %v2784 = vunpack.c.h.b16 %v2440
  %v2785 = vunpack.c.l.b16 %v2441
  %v2786 = vunpack.c.h.b16 %v2441
  %v2787 = vunpack.c.l.b16 %v2442
  %v2788 = vunpack.c.h.b16 %v2442
  %v2789 = vunpack.c.l.b16 %v2443
  %v2790 = vunpack.c.h.b16 %v2443
  %v2791 = vunpack.c.l.b16 %v2444
  %v2792 = vunpack.c.h.b16 %v2444
  %v2793 = vunpack.c.l.b16 %v2445
  %v2794 = vunpack.c.h.b16 %v2445
  %v2795 = vunpack.c.l.b16 %v2446
  %v2796 = vunpack.c.h.b16 %v2446
  %v2797 = vunpack.c.l.b16 %v2447
  %v2798 = vunpack.c.h.b16 %v2447
  %v2799 = vunpack.c.l.b16 %v2448
  %v2800 = vunpack.c.h.b16 %v2448
  %v2801 = vunpack.c.l.b16 %v2449
  %v2802 = vunpack.c.h.b16 %v2449
  %v2803 = vunpack.c.l.b16 %v2450
  %v2804 = vunpack.c.h.b16 %v2450
  %v2805 = vunpack.c.l.b16 %v2451
  %v2806 = vunpack.c.h.b16 %v2451
  %v2807 = vunpack.c.l.b16 %v2452
  %v2808 = vunpack.c.h.b16 %v2452
  %v2809 = vunpack.c.l.b16 %v2453
  %v2810 = vunpack.c.h.b16 %v2453
  %v2811 = vunpack.c.l.b16 %v2454
  %v2812 = vunpack.c.h.b16 %v2454
  %v2813 = vunpack.c.l.b16 %v2455
  %v2814 = vunpack.c.h.b16 %v2455
  %v2815 = vunpack.c.l.b16 %v2456
  %v2816 = vunpack.c.h.b16 %v2456
  %v2817 = vunpack.c.l.b16 %v2457
  %v2818 = vunpack.c.h.b16 %v2457
  %v2819 = vunpack.c.l.b16 %v2458
  %v2820 = vunpack.c.h.b16 %v2458
  %v2821 = vunpack.c.l.b16 %v2459
  %v2822 = vunpack.c.h.b16 %v2459
  %v2823 = vunpack.c.l.b16 %v2460
  %v2824 = vunpack.c.h.b16 %v2460
  %v2825 = vunpack.c.l.b16 %v2461
  %v2826 = vunpack.c.h.b16 %v2461
  %v2827 = vunpack.c.l.b16 %v2462
  %v2828 = vunpack.c.h.b16 %v2462
  %v2829 = vunpack.c.l.b16 %v2463
  %v2830 = vunpack.c.h.b16 %v2463
  %v2831 = vunpack.c.l.b16 %v2464
  %v2832 = vunpack.c.h.b16 %v2464
  %v2833 = vunpack.c.l.b16 %v2465
  %v2834 = vunpack.c.h.b16 %v2465
  %v2835 = vunpack.c.l.b16 %v2466
  %v2836 = vunpack.c.h.b16 %v2466
  %v2837 = vunpack.c.l.b16 %v2467
  %v2838 = vunpack.c.h.b16 %v2467
  %v2839 = vunpack.c.l.b16 %v2468
  %v2840 = vunpack.c.h.b16 %v2468
  %v2841 = vunpack.c.l.b16 %v2469
  %v2842 = vunpack.c.h.b16 %v2469
  %v2843 = vunpack.c.l.b16 %v2470
  %v2844 = vunpack.c.h.b16 %v2470
  %v2845 = vunpack.c.l.b16 %v2471
  %v2846 = vunpack.c.h.b16 %v2471
  %v2847 = vunpack.c.l.b16 %v2472
  %v2848 = vunpack.c.h.b16 %v2472
  %v2849 = vunpack.c.l.b16 %v2473
  %v2850 = vunpack.c.h.b16 %v2473
  %v2851 = vunpack.c.l.b16 %v2474
  %v2852 = vunpack.c.h.b16 %v2474
  %v2853 = vunpack.c.l.b16 %v2475
  %v2854 = vunpack.c.h.b16 %v2475
  %v2855 = vunpack.c.l.b16 %v2476
  %v2856 = vunpack.c.h.b16 %v2476
  %v2857 = vunpack.c.l.b16 %v2477
  %v2858 = vunpack.c.h.b16 %v2477
  %v2859 = vunpack.c.l.b16 %v2478
  %v2860 = vunpack.c.h.b16 %v2478
  %v2861 = vunpack.c.l.b16 %v2479
  %v2862 = vunpack.c.h.b16 %v2479
  %v2863 = vunpack.c.l.b16 %v2480
  %v2864 = vunpack.c.h.b16 %v2480
  %v2865 = vpack.c.b16 %v2611, %v2609
  %v2866 = vpack.c.b16 %v2612, %v2610
  %v2867 = vpack.c.b16 %v2615, %v2613
  %v2868 = vpack.c.b16 %v2616, %v2614
  %v2869 = vpack.c.b16 %v2619, %v2617
  %v2870 = vpack.c.b16 %v2620, %v2618
  %v2871 = vpack.c.b16 %v2623, %v2621
  %v2872 = vpack.c.b16 %v2624, %v2622
  %v2873 = vpack.c.b16 %v2627, %v2625
  %v2874 = vpack.c.b16 %v2628, %v2626
  %v2875 = vpack.c.b16 %v2631, %v2629
  %v2876 = vpack.c.b16 %v2632, %v2630
  %v2877 = vpack.c.b16 %v2635, %v2633
  %v2878 = vpack.c.b16 %v2636, %v2634
  %v2879 = vpack.c.b16 %v2639, %v2637
  %v2880 = vpack.c.b16 %v2640, %v2638
  %v2881 = vpack.c.b16 %v2643, %v2641
  %v2882 = vpack.c.b16 %v2644, %v2642
  %v2883 = vpack.c.b16 %v2647, %v2645
  %v2884 = vpack.c.b16 %v2648, %v2646
  %v2885 = vpack.c.b16 %v2651, %v2649
  %v2886 = vpack.c.b16 %v2652, %v2650
  %v2887 = vpack.c.b16 %v2655, %v2653
  %v2888 = vpack.c.b16 %v2656, %v2654
  %v2889 = vpack.c.b16 %v2659, %v2657
  %v2890 = vpack.c.b16 %v2660, %v2658
  %v2891 = vpack.c.b16 %v2663, %v2661
  %v2892 = vpack.c.b16 %v2664, %v2662
  %v2893 = vpack.c.b16 %v2667, %v2665
  %v2894 = vpack.c.b16 %v2668, %v2666
  %v2895 = vpack.c.b16 %v2671, %v2669
  %v2896 = vpack.c.b16 %v2672, %v2670
  %v2897 = vpack.c.b16 %v2675, %v2673
  %v2898 = vpack.c.b16 %v2676, %v2674
  %v2899 = vpack.c.b16 %v2679, %v2677
  %v2900 = vpack.c.b16 %v2680, %v2678
  %v2901 = vpack.c.b16 %v2683, %v2681
  %v2902 = vpack.c.b16 %v2684, %v2682
  %v2903 = vpack.c.b16 %v2687, %v2685
  %v2904 = vpack.c.b16 %v2688, %v2686
  %v2905 = vpack.c.b16 %v2691, %v2689
  %v2906 = vpack.c.b16 %v2692, %v2690
  %v2907 = vpack.c.b16 %v2695, %v2693
  %v2908 = vpack.c.b16 %v2696, %v2694
  %v2909 = vpack.c.b16 %v2699, %v2697
  %v2910 = vpack.c.b16 %v2700, %v2698
  %v2911 = vpack.c.b16 %v2703, %v2701
  %v2912 = vpack.c.b16 %v2704, %v2702
  %v2913 = vpack.c.b16 %v2707, %v2705
  %v2914 = vpack.c.b16 %v2708, %v2706
  %v2915 = vpack.c.b16 %v2711, %v2709
  %v2916 = vpack.c.b16 %v2712, %v2710
  %v2917 = vpack.c.b16 %v2715, %v2713
  %v2918 = vpack.c.b16 %v2716, %v2714
  %v2919 = vpack.c.b16 %v2719, %v2717
  %v2920 = vpack.c.b16 %v2720, %v2718
  %v2921 = vpack.c.b16 %v2723, %v2721
  %v2922 = vpack.c.b16 %v2724, %v2722
  %v2923 = vpack.c.b16 %v2727, %v2725
  %v2924 = vpack.c.b16 %v2728, %v2726
  %v2925 = vpack.c.b16 %v2731, %v2729
  %v2926 = vpack.c.b16 %v2732, %v2730
  %v2927 = vpack.c.b16 %v2735, %v2733
  %v2928 = vpack.c.b16 %v2736, %v2734
  %v2929 = vpack.c.b16 %v2739, %v2737
  %v2930 = vpack.c.b16 %v2740, %v2738
  %v2931 = vpack.c.b16 %v2743, %v2741
  %v2932 = vpack.c.b16 %v2744, %v2742
  %v2933 = vpack.c.b16 %v2747, %v2745
  %v2934 = vpack.c.b16 %v2748, %v2746
  %v2935 = vpack.c.b16 %v2751, %v2749
  %v2936 = vpack.c.b16 %v2752, %v2750
  %v2937 = vpack.c.b16 %v2755, %v2753
  %v2938 = vpack.c.b16 %v2756, %v2754
  %v2939 = vpack.c.b16 %v2759, %v2757
  %v2940 = vpack.c.b16 %v2760, %v2758
  %v2941 = vpack.c.b16 %v2763, %v2761
  %v2942 = vpack.c.b16 %v2764, %v2762
  %v2943 = vpack.c.b16 %v2767, %v2765
  %v2944 = vpack.c.b16 %v2768, %v2766
  %v2945 = vpack.c.b16 %v2771, %v2769
  %v2946 = vpack.c.b16 %v2772, %v2770
  %v2947 = vpack.c.b16 %v2775, %v2773
  %v2948 = vpack.c.b16 %v2776, %v2774
  %v2949 = vpack.c.b16 %v2779, %v2777
  %v2950 = vpack.c.b16 %v2780, %v2778
  %v2951 = vpack.c.b16 %v2783, %v2781
  %v2952 = vpack.c.b16 %v2784, %v2782
  %v2953 = vpack.c.b16 %v2787, %v2785
  %v2954 = vpack.c.b16 %v2788, %v2786
  %v2955 = vpack.c.b16 %v2791, %v2789
  %v2956 = vpack.c.b16 %v2792, %v2790
  %v2957 = vpack.c.b16 %v2795, %v2793
  %v2958 = vpack.c.b16 %v2796, %v2794
  %v2959 = vpack.c.b16 %v2799, %v2797
  %v2960 = vpack.c.b16 %v2800, %v2798
  %v2961 = vpack.c.b16 %v2803, %v2801
  %v2962 = vpack.c.b16 %v2804, %v2802
  %v2963 = vpack.c.b16 %v2807, %v2805
  %v2964 = vpack.c.b16 %v2808, %v2806
  %v2965 = vpack.c.b16 %v2811, %v2809
  %v2966 = vpack.c.b16 %v2812, %v2810
  %v2967 = vpack.c.b16 %v2815, %v2813
  %v2968 = vpack.c.b16 %v2816, %v2814
  %v2969 = vpack.c.b16 %v2819, %v2817
  %v2970 = vpack.c.b16 %v2820, %v2818
  %v2971 = vpack.c.b16 %v2823, %v2821
  %v2972 = vpack.c.b16 %v2824, %v2822
  %v2973 = vpack.c.b16 %v2827, %v2825
  %v2974 = vpack.c.b16 %v2828, %v2826
  %v2975 = vpack.c.b16 %v2831, %v2829
  %v2976 = vpack.c.b16 %v2832, %v2830
  %v2977 = vpack.c.b16 %v2835, %v2833
  %v2978 = vpack.c.b16 %v2836, %v2834
  %v2979 = vpack.c.b16 %v2839, %v2837
  %v2980 = vpack.c.b16 %v2840, %v2838
  %v2981 = vpack.c.b16 %v2843, %v2841
  %v2982 = vpack.c.b16 %v2844, %v2842
  %v2983 = vpack.c.b16 %v2847, %v2845
  %v2984 = vpack.c.b16 %v2848, %v2846
  %v2985 = vpack.c.b16 %v2851, %v2849
  %v2986 = vpack.c.b16 %v2852, %v2850
  %v2987 = vpack.c.b16 %v2855, %v2853
  %v2988 = vpack.c.b16 %v2856, %v2854
  %v2989 = vpack.c.b16 %v2859, %v2857
  %v2990 = vpack.c.b16 %v2860, %v2858
  %v2991 = vpack.c.b16 %v2863, %v2861
  %v2992 = vpack.c.b16 %v2864, %v2862
  %3121 = vmatprep.subr.bf16.mxu0 %v2866
  %3122 = vmatpush1.bf16.msra.mxu0 %v2865
  %3123 = vmatprep.subr.bf16.mxu0 %v2868
  %3124 = vmatpush1.bf16.msra.mxu0 %v2867
  %3125 = vmatprep.subr.bf16.mxu0 %v2870
  %3126 = vmatpush1.bf16.msra.mxu0 %v2869
  %3127 = vmatprep.subr.bf16.mxu0 %v2872
  %3128 = vmatpush1.bf16.msra.mxu0 %v2871
  %3129 = vmatprep.subr.bf16.mxu0 %v2874
  %3130 = vmatpush1.bf16.msra.mxu0 %v2873
  %3131 = vmatprep.subr.bf16.mxu0 %v2876
  %3132 = vmatpush1.bf16.msra.mxu0 %v2875
  %3133 = vmatprep.subr.bf16.mxu0 %v2878
  %3134 = vmatpush1.bf16.msra.mxu0 %v2877
  %3135 = vmatprep.subr.bf16.mxu0 %v2880
  %3136 = vmatpush1.bf16.msra.mxu0 %v2879
  %3137 = vmatprep.subr.bf16.mxu0 %v2882
  %3138 = vmatpush1.bf16.msra.mxu0 %v2881
  %3139 = vmatprep.subr.bf16.mxu0 %v2884
  %3140 = vmatpush1.bf16.msra.mxu0 %v2883
  %3141 = vmatprep.subr.bf16.mxu0 %v2886
  %3142 = vmatpush1.bf16.msra.mxu0 %v2885
  %3143 = vmatprep.subr.bf16.mxu0 %v2888
  %3144 = vmatpush1.bf16.msra.mxu0 %v2887
  %3145 = vmatprep.subr.bf16.mxu0 %v2890
  %3146 = vmatpush1.bf16.msra.mxu0 %v2889
  %3147 = vmatprep.subr.bf16.mxu0 %v2892
  %3148 = vmatpush1.bf16.msra.mxu0 %v2891
  %3149 = vmatprep.subr.bf16.mxu0 %v2894
  %3150 = vmatpush1.bf16.msra.mxu0 %v2893
  %3151 = vmatprep.subr.bf16.mxu0 %v2896
  %3152 = vmatpush1.bf16.msra.mxu0 %v2895
  %3153 = vmatprep.mubr.bf16.mxu0 %v2346
  %3154 = vmatmul.mubr.bf16.gmra.mrb[0].mxu0 %v2345
  %v3155 = vpop.f32.mrb[0].mxu0
  %v3156 = vadd.f32 0.0, %v3155
  %v3157 = vpop.f32.mrb[0].mxu0
  %v3158 = vadd.f32 0.0, %v3157
  %v3159 = vpop.f32.mrb[0].mxu0
  %v3160 = vpop.f32.mrb[0].mxu0
  %3161 = vdwg.mxu0
  %3162 = vmatprep.subr.bf16.mxu0 %v2898
  %3163 = vmatpush1.bf16.msra.mxu0 %v2897
  %3164 = vmatprep.subr.bf16.mxu0 %v2900
  %3165 = vmatpush1.bf16.msra.mxu0 %v2899
  %3166 = vmatprep.subr.bf16.mxu0 %v2902
  %3167 = vmatpush1.bf16.msra.mxu0 %v2901
  %3168 = vmatprep.subr.bf16.mxu0 %v2904
  %3169 = vmatpush1.bf16.msra.mxu0 %v2903
  %3170 = vmatprep.subr.bf16.mxu0 %v2906
  %3171 = vmatpush1.bf16.msra.mxu0 %v2905
  %3172 = vmatprep.subr.bf16.mxu0 %v2908
  %3173 = vmatpush1.bf16.msra.mxu0 %v2907
  %3174 = vmatprep.subr.bf16.mxu0 %v2910
  %3175 = vmatpush1.bf16.msra.mxu0 %v2909
  %3176 = vmatprep.subr.bf16.mxu0 %v2912
  %3177 = vmatpush1.bf16.msra.mxu0 %v2911
  %3178 = vmatprep.subr.bf16.mxu0 %v2914
  %3179 = vmatpush1.bf16.msra.mxu0 %v2913
  %3180 = vmatprep.subr.bf16.mxu0 %v2916
  %3181 = vmatpush1.bf16.msra.mxu0 %v2915
  %3182 = vmatprep.subr.bf16.mxu0 %v2918
  %3183 = vmatpush1.bf16.msra.mxu0 %v2917
  %3184 = vmatprep.subr.bf16.mxu0 %v2920
  %3185 = vmatpush1.bf16.msra.mxu0 %v2919
  %3186 = vmatprep.subr.bf16.mxu0 %v2922
  %3187 = vmatpush1.bf16.msra.mxu0 %v2921
  %3188 = vmatprep.subr.bf16.mxu0 %v2924
  %3189 = vmatpush1.bf16.msra.mxu0 %v2923
  %3190 = vmatprep.subr.bf16.mxu0 %v2926
  %3191 = vmatpush1.bf16.msra.mxu0 %v2925
  %3192 = vmatprep.subr.bf16.mxu0 %v2928
  %3193 = vmatpush1.bf16.msra.mxu0 %v2927
  %3194 = vmatprep.mubr.bf16.mxu0 %v2348
  %3195 = vmatmul.mubr.bf16.gmra.mrb[0].mxu0 %v2347
  %v3196 = vpop.f32.mrb[0].mxu0
  %v3197 = vadd.f32 %v3156, %v3196
  %v3198 = vpop.f32.mrb[0].mxu0
  %v3199 = vadd.f32 %v3158, %v3198
  %v3200 = vpop.f32.mrb[0].mxu0
  %v3201 = vpop.f32.mrb[0].mxu0
  %3202 = vdwg.mxu0
  %3203 = vmatprep.subr.bf16.mxu0 %v2930
  %3204 = vmatpush1.bf16.msra.mxu0 %v2929
  %3205 = vmatprep.subr.bf16.mxu0 %v2932
  %3206 = vmatpush1.bf16.msra.mxu0 %v2931
  %3207 = vmatprep.subr.bf16.mxu0 %v2934
  %3208 = vmatpush1.bf16.msra.mxu0 %v2933
  %3209 = vmatprep.subr.bf16.mxu0 %v2936
  %3210 = vmatpush1.bf16.msra.mxu0 %v2935
  %3211 = vmatprep.subr.bf16.mxu0 %v2938
  %3212 = vmatpush1.bf16.msra.mxu0 %v2937
  %3213 = vmatprep.subr.bf16.mxu0 %v2940
  %3214 = vmatpush1.bf16.msra.mxu0 %v2939
  %3215 = vmatprep.subr.bf16.mxu0 %v2942
  %3216 = vmatpush1.bf16.msra.mxu0 %v2941
  %3217 = vmatprep.subr.bf16.mxu0 %v2944
  %3218 = vmatpush1.bf16.msra.mxu0 %v2943
  %3219 = vmatprep.subr.bf16.mxu0 %v2946
  %3220 = vmatpush1.bf16.msra.mxu0 %v2945
  %3221 = vmatprep.subr.bf16.mxu0 %v2948
  %3222 = vmatpush1.bf16.msra.mxu0 %v2947
  %3223 = vmatprep.subr.bf16.mxu0 %v2950
  %3224 = vmatpush1.bf16.msra.mxu0 %v2949
  %3225 = vmatprep.subr.bf16.mxu0 %v2952
  %3226 = vmatpush1.bf16.msra.mxu0 %v2951
  %3227 = vmatprep.subr.bf16.mxu0 %v2954
  %3228 = vmatpush1.bf16.msra.mxu0 %v2953
  %3229 = vmatprep.subr.bf16.mxu0 %v2956
  %3230 = vmatpush1.bf16.msra.mxu0 %v2955
  %3231 = vmatprep.subr.bf16.mxu0 %v2958
  %3232 = vmatpush1.bf16.msra.mxu0 %v2957
  %3233 = vmatprep.subr.bf16.mxu0 %v2960
  %3234 = vmatpush1.bf16.msra.mxu0 %v2959
  %3235 = vmatprep.mubr.bf16.mxu0 %v2350
  %3236 = vmatmul.mubr.bf16.gmra.mrb[0].mxu0 %v2349
  %v3237 = vpop.f32.mrb[0].mxu0
  %v3238 = vadd.f32 %v3197, %v3237
  %v3239 = vpop.f32.mrb[0].mxu0
  %v3240 = vadd.f32 %v3199, %v3239
  %v3241 = vpop.f32.mrb[0].mxu0
  %v3242 = vpop.f32.mrb[0].mxu0
  %3243 = vdwg.mxu0
  %3244 = vmatprep.subr.bf16.mxu0 %v2962
  %3245 = vmatpush1.bf16.msra.mxu0 %v2961
  %3246 = vmatprep.subr.bf16.mxu0 %v2964
  %3247 = vmatpush1.bf16.msra.mxu0 %v2963
  %3248 = vmatprep.subr.bf16.mxu0 %v2966
  %3249 = vmatpush1.bf16.msra.mxu0 %v2965
  %3250 = vmatprep.subr.bf16.mxu0 %v2968
  %3251 = vmatpush1.bf16.msra.mxu0 %v2967
  %3252 = vmatprep.subr.bf16.mxu0 %v2970
  %3253 = vmatpush1.bf16.msra.mxu0 %v2969
  %3254 = vmatprep.subr.bf16.mxu0 %v2972
  %3255 = vmatpush1.bf16.msra.mxu0 %v2971
  %3256 = vmatprep.subr.bf16.mxu0 %v2974
  %3257 = vmatpush1.bf16.msra.mxu0 %v2973
  %3258 = vmatprep.subr.bf16.mxu0 %v2976
  %3259 = vmatpush1.bf16.msra.mxu0 %v2975
  %3260 = vmatprep.subr.bf16.mxu0 %v2978
  %3261 = vmatpush1.bf16.msra.mxu0 %v2977
  %3262 = vmatprep.subr.bf16.mxu0 %v2980
  %3263 = vmatpush1.bf16.msra.mxu0 %v2979
  %3264 = vmatprep.subr.bf16.mxu0 %v2982
  %3265 = vmatpush1.bf16.msra.mxu0 %v2981
  %3266 = vmatprep.subr.bf16.mxu0 %v2984
  %3267 = vmatpush1.bf16.msra.mxu0 %v2983
  %3268 = vmatprep.subr.bf16.mxu0 %v2986
  %3269 = vmatpush1.bf16.msra.mxu0 %v2985
  %3270 = vmatprep.subr.bf16.mxu0 %v2988
  %3271 = vmatpush1.bf16.msra.mxu0 %v2987
  %3272 = vmatprep.subr.bf16.mxu0 %v2990
  %3273 = vmatpush1.bf16.msra.mxu0 %v2989
  %3274 = vmatprep.subr.bf16.mxu0 %v2992
  %3275 = vmatpush1.bf16.msra.mxu0 %v2991
  %3276 = vmatprep.mubr.bf16.mxu0 %v2352
  %3277 = vmatmul.mubr.bf16.gmra.mrb[0].mxu0 %v2351
  %v3278 = vpop.f32.mrb[0].mxu0
  %v3279 = vadd.f32 %v3238, %v3278
  %v3280 = vpop.f32.mrb[0].mxu0
  %v3281 = vadd.f32 %v3240, %v3280
  %v3282 = vpop.f32.mrb[0].mxu0
  %v3283 = vpop.f32.mrb[0].mxu0
  %3284 = vdwg.mxu0
  %v3285 = vmax.f32 %v3279, %v3281
  %3287 = vrot.lane.b32.xlu0 %v3285, 64
  %v3288 = vpop.permute.xlu0 %3287
  %v3290 = vmax.f32 %v3285, %v3288
  %3292 = vrot.lane.b32.xlu0 %v3290, 96
  %v3293 = vpop.permute.xlu0 %3292
  %v3295 = vmax.f32 %v3290, %v3293
  %v3296 = vld [vmem:[%s4] sm:$0x1]
  %v3298 = vlaneseq
  %v3299 = vshrl.u32 %v3298, 7
  %v3300 = vsub.s32 0, %v3299
  %v3301 = vrot.slane %v3296, %v3300
  %v3303 = vadd.f32 %v3295, %v3301
  %v3304 = vmax.f32 %v3303, 0.0
  %v3305 = vpack.c.bf16 %v3304, %v3304
  %v3306 = vld [vmem:[%s5] sm:$0xff]
  %v3307 = vld [vmem:[%s5 + $0x8] sm:$0xff]
  %v3308 = vld [vmem:[%s5 + $0x10] sm:$0xff]
  %v3309 = vld [vmem:[%s5 + $0x18] sm:$0xff]
  %v3310 = vld [vmem:[%s5 + $0x20] sm:$0xff]
  %v3311 = vld [vmem:[%s5 + $0x28] sm:$0xff]
  %v3312 = vld [vmem:[%s5 + $0x30] sm:$0xff]
  %v3313 = vld [vmem:[%s5 + $0x38] sm:$0xff]
  %v3314 = vld [vmem:[%s6] sm:$0xf]
  %v3316 = vlaneseq
  %v3317 = vshrl.u32 %v3316, 7
  %v3318 = vsub.s32 0, %v3317
  %v3319 = vrot.slane %v3314, %v3318
  %v3320 = vlaneseq
  %v3321 = vshrl.u32 %v3320, 7
  %v3322 = vsub.s32 1, %v3321
  %v3323 = vrot.slane %v3314, %v3322
  %v3324 = vlaneseq
  %v3325 = vshrl.u32 %v3324, 7
  %v3326 = vsub.s32 2, %v3325
  %v3327 = vrot.slane %v3314, %v3326
  %v3328 = vlaneseq
  %v3329 = vshrl.u32 %v3328, 7
  %v3330 = vsub.s32 3, %v3329
  %v3331 = vrot.slane %v3314, %v3330
  %v3344 = vunpack.c.l.b16 %v3306
  %v3345 = vunpack.c.h.b16 %v3306
  %v3346 = vunpack.c.l.b16 %v3307
  %v3347 = vunpack.c.h.b16 %v3307
  %v3348 = vunpack.c.l.b16 %v3308
  %v3349 = vunpack.c.h.b16 %v3308
  %v3350 = vunpack.c.l.b16 %v3309
  %v3351 = vunpack.c.h.b16 %v3309
  %v3352 = vunpack.c.l.b16 %v3310
  %v3353 = vunpack.c.h.b16 %v3310
  %v3354 = vunpack.c.l.b16 %v3311
  %v3355 = vunpack.c.h.b16 %v3311
  %v3356 = vunpack.c.l.b16 %v3312
  %v3357 = vunpack.c.h.b16 %v3312
  %v3358 = vunpack.c.l.b16 %v3313
  %v3359 = vunpack.c.h.b16 %v3313
  %v3360 = vpack.c.b16 %v3348, %v3344
  %v3361 = vpack.c.b16 %v3349, %v3345
  %v3362 = vpack.c.b16 %v3350, %v3346
  %v3363 = vpack.c.b16 %v3351, %v3347
  %v3364 = vpack.c.b16 %v3356, %v3352
  %v3365 = vpack.c.b16 %v3357, %v3353
  %v3366 = vpack.c.b16 %v3358, %v3354
  %v3367 = vpack.c.b16 %v3359, %v3355
  %vm3376 = vcmask 261120
  %v3378 = vsel %vm3376, %v3305, 0
  %3380 = vmatprep.subr.bf16.mxu0 %v3361
  %3381 = vmatpush1.bf16.msra.mxu0 %v3360
  %3382 = vmatprep.subr.bf16.mxu0 %v3365
  %3383 = vmatpush1.bf16.msra.mxu0 %v3364
  %3384 = vmatprep.subr.bf16.mxu0 0
  %3385 = vmatpush1.bf16.msra.mxu0 0
  %3386 = vmatprep.subr.bf16.mxu0 0
  %3387 = vmatpush1.bf16.msra.mxu0 0
  %3388 = vmatprep.subr.bf16.mxu0 0
  %3389 = vmatpush1.bf16.msra.mxu0 0
  %3390 = vmatprep.subr.bf16.mxu0 0
  %3391 = vmatpush1.bf16.msra.mxu0 0
  %3392 = vmatprep.subr.bf16.mxu0 0
  %3393 = vmatpush1.bf16.msra.mxu0 0
  %3394 = vmatprep.subr.bf16.mxu0 0
  %3395 = vmatpush1.bf16.msra.mxu0 0
  %3396 = vmatprep.subr.bf16.mxu0 0
  %3397 = vmatpush1.bf16.msra.mxu0 0
  %3398 = vmatprep.subr.bf16.mxu0 0
  %3399 = vmatpush1.bf16.msra.mxu0 0
  %3400 = vmatprep.subr.bf16.mxu0 0
  %3401 = vmatpush1.bf16.msra.mxu0 0
  %3402 = vmatprep.subr.bf16.mxu0 0
  %3403 = vmatpush1.bf16.msra.mxu0 0
  %3404 = vmatprep.subr.bf16.mxu0 0
  %3405 = vmatpush1.bf16.msra.mxu0 0
  %3406 = vmatprep.subr.bf16.mxu0 0
  %3407 = vmatpush1.bf16.msra.mxu0 0
  %3408 = vmatprep.subr.bf16.mxu0 0
  %3409 = vmatpush1.bf16.msra.mxu0 0
  %3410 = vmatprep.subr.bf16.mxu0 0
  %3411 = vmatpush1.bf16.msra.mxu0 0
  %3412 = vmatprep.mubr.bf16.mxu0 0
  %3413 = vmatmul.mubr.bf16.gmra.mrb[0].mxu0 %v3378
  %v3414 = vpop.f32.mrb[0].mxu0
  %v3415 = vadd.f32 %v3319, %v3414
  %v3416 = vpop.f32.mrb[0].mxu0
  %v3417 = vadd.f32 %v3323, %v3416
  %v3418 = vpop.f32.mrb[0].mxu0
  %v3419 = vpop.f32.mrb[0].mxu0
  %3420 = vdwg.mxu0
  %3421 = vmatprep.subr.bf16.mxu0 %v3363
  %3422 = vmatpush1.bf16.msra.mxu0 %v3362
  %3423 = vmatprep.subr.bf16.mxu0 %v3367
  %3424 = vmatpush1.bf16.msra.mxu0 %v3366
  %3425 = vmatprep.subr.bf16.mxu0 0
  %3426 = vmatpush1.bf16.msra.mxu0 0
  %3427 = vmatprep.subr.bf16.mxu0 0
  %3428 = vmatpush1.bf16.msra.mxu0 0
  %3429 = vmatprep.subr.bf16.mxu0 0
  %3430 = vmatpush1.bf16.msra.mxu0 0
  %3431 = vmatprep.subr.bf16.mxu0 0
  %3432 = vmatpush1.bf16.msra.mxu0 0
  %3433 = vmatprep.subr.bf16.mxu0 0
  %3434 = vmatpush1.bf16.msra.mxu0 0
  %3435 = vmatprep.subr.bf16.mxu0 0
  %3436 = vmatpush1.bf16.msra.mxu0 0
  %3437 = vmatprep.subr.bf16.mxu0 0
  %3438 = vmatpush1.bf16.msra.mxu0 0
  %3439 = vmatprep.subr.bf16.mxu0 0
  %3440 = vmatpush1.bf16.msra.mxu0 0
  %3441 = vmatprep.subr.bf16.mxu0 0
  %3442 = vmatpush1.bf16.msra.mxu0 0
  %3443 = vmatprep.subr.bf16.mxu0 0
  %3444 = vmatpush1.bf16.msra.mxu0 0
  %3445 = vmatprep.subr.bf16.mxu0 0
  %3446 = vmatpush1.bf16.msra.mxu0 0
  %3447 = vmatprep.subr.bf16.mxu0 0
  %3448 = vmatpush1.bf16.msra.mxu0 0
  %3449 = vmatprep.subr.bf16.mxu0 0
  %3450 = vmatpush1.bf16.msra.mxu0 0
  %3451 = vmatprep.subr.bf16.mxu0 0
  %3452 = vmatpush1.bf16.msra.mxu0 0
  %3453 = vmatprep.mubr.bf16.mxu0 0
  %3454 = vmatmul.mubr.bf16.gmra.mrb[0].mxu0 %v3378
  %v3455 = vpop.f32.mrb[0].mxu0
  %v3456 = vadd.f32 %v3327, %v3455
  %v3457 = vpop.f32.mrb[0].mxu0
  %v3458 = vadd.f32 %v3331, %v3457
  %v3459 = vpop.f32.mrb[0].mxu0
  %v3460 = vpop.f32.mrb[0].mxu0
  %3461 = vdwg.mxu0
  %v3462 = vmax.f32 %v3415, 0.0
  %v3463 = vmax.f32 %v3417, 0.0
  %v3464 = vmax.f32 %v3456, 0.0
  %v3465 = vmax.f32 %v3458, 0.0
  %v3466 = vpack.c.bf16 %v3462, %v3462
  %v3467 = vpack.c.bf16 %v3463, %v3463
  %v3468 = vpack.c.bf16 %v3464, %v3464
  %v3469 = vpack.c.bf16 %v3465, %v3465
  %v3470 = vld [vmem:[%s7] sm:$0xf]
  %v3471 = vld [vmem:[%s7 + $0x4] sm:$0xf]
  %v3472 = vld [vmem:[%s7 + $0x8] sm:$0xf]
  %v3473 = vld [vmem:[%s7 + $0xc] sm:$0xf]
  %v3474 = vld [vmem:[%s7 + $0x10] sm:$0xf]
  %v3475 = vld [vmem:[%s7 + $0x14] sm:$0xf]
  %v3476 = vld [vmem:[%s7 + $0x18] sm:$0xf]
  %v3477 = vld [vmem:[%s7 + $0x1c] sm:$0xf]
  %v3478 = vld [vmem:[%s7 + $0x20] sm:$0xf]
  %v3479 = vld [vmem:[%s7 + $0x24] sm:$0xf]
  %v3480 = vld [vmem:[%s7 + $0x28] sm:$0xf]
  %v3481 = vld [vmem:[%s7 + $0x2c] sm:$0xf]
  %v3482 = vld [vmem:[%s7 + $0x30] sm:$0xf]
  %v3483 = vld [vmem:[%s7 + $0x34] sm:$0xf]
  %v3484 = vld [vmem:[%s7 + $0x38] sm:$0xf]
  %v3485 = vld [vmem:[%s7 + $0x3c] sm:$0xf]
  %v3486 = vld [vmem:[%s7 + $0x40] sm:$0xf]
  %v3487 = vld [vmem:[%s7 + $0x44] sm:$0xf]
  %v3488 = vld [vmem:[%s7 + $0x48] sm:$0xf]
  %v3489 = vld [vmem:[%s7 + $0x4c] sm:$0xf]
  %v3490 = vld [vmem:[%s7 + $0x50] sm:$0xf]
  %v3491 = vld [vmem:[%s7 + $0x54] sm:$0xf]
  %v3492 = vld [vmem:[%s7 + $0x58] sm:$0xf]
  %v3493 = vld [vmem:[%s7 + $0x5c] sm:$0xf]
  %v3494 = vld [vmem:[%s7 + $0x60] sm:$0xf]
  %v3495 = vld [vmem:[%s7 + $0x64] sm:$0xf]
  %v3496 = vld [vmem:[%s7 + $0x68] sm:$0xf]
  %v3497 = vld [vmem:[%s7 + $0x6c] sm:$0xf]
  %v3498 = vld [vmem:[%s7 + $0x70] sm:$0xf]
  %v3499 = vld [vmem:[%s7 + $0x74] sm:$0xf]
  %v3500 = vld [vmem:[%s7 + $0x78] sm:$0xf]
  %v3501 = vld [vmem:[%s7 + $0x7c] sm:$0xf]
  %v3502 = vld [vmem:[%s7 + $0x80] sm:$0xf]
  %v3503 = vld [vmem:[%s7 + $0x84] sm:$0xf]
  %v3504 = vld [vmem:[%s7 + $0x88] sm:$0xf]
  %v3505 = vld [vmem:[%s7 + $0x8c] sm:$0xf]
  %v3506 = vld [vmem:[%s7 + $0x90] sm:$0xf]
  %v3507 = vld [vmem:[%s7 + $0x94] sm:$0xf]
  %v3508 = vld [vmem:[%s7 + $0x98] sm:$0xf]
  %v3509 = vld [vmem:[%s7 + $0x9c] sm:$0xf]
  %v3510 = vld [vmem:[%s7 + $0xa0] sm:$0xf]
  %v3511 = vld [vmem:[%s7 + $0xa4] sm:$0xf]
  %v3512 = vld [vmem:[%s7 + $0xa8] sm:$0xf]
  %v3513 = vld [vmem:[%s7 + $0xac] sm:$0xf]
  %v3514 = vld [vmem:[%s7 + $0xb0] sm:$0xf]
  %v3515 = vld [vmem:[%s7 + $0xb4] sm:$0xf]
  %v3516 = vld [vmem:[%s7 + $0xb8] sm:$0xf]
  %v3517 = vld [vmem:[%s7 + $0xbc] sm:$0xf]
  %v3518 = vld [vmem:[%s7 + $0xc0] sm:$0xf]
  %v3519 = vld [vmem:[%s7 + $0xc4] sm:$0xf]
  %v3520 = vld [vmem:[%s7 + $0xc8] sm:$0xf]
  %v3521 = vld [vmem:[%s7 + $0xcc] sm:$0xf]
  %v3522 = vld [vmem:[%s7 + $0xd0] sm:$0xf]
  %v3523 = vld [vmem:[%s7 + $0xd4] sm:$0xf]
  %v3524 = vld [vmem:[%s7 + $0xd8] sm:$0xf]
  %v3525 = vld [vmem:[%s7 + $0xdc] sm:$0xf]
  %v3526 = vld [vmem:[%s7 + $0xe0] sm:$0xf]
  %v3527 = vld [vmem:[%s7 + $0xe4] sm:$0xf]
  %v3528 = vld [vmem:[%s7 + $0xe8] sm:$0xf]
  %v3529 = vld [vmem:[%s7 + $0xec] sm:$0xf]
  %v3530 = vld [vmem:[%s7 + $0xf0] sm:$0xf]
  %v3531 = vld [vmem:[%s7 + $0xf4] sm:$0xf]
  %v3532 = vld [vmem:[%s7 + $0xf8] sm:$0xf]
  %v3533 = vld [vmem:[%s7 + $0xfc] sm:$0xf]
  %v3534 = vld [vmem:[%s8] sm:$0x1]
  %v3536 = vlaneseq
  %v3537 = vshrl.u32 %v3536, 7
  %v3538 = vsub.s32 0, %v3537
  %v3539 = vrot.slane %v3534, %v3538
  %v3605 = vunpack.c.l.b16 %v3470
  %v3606 = vunpack.c.l.b16 %v3471
  %v3607 = vunpack.c.l.b16 %v3472
  %v3608 = vunpack.c.l.b16 %v3473
  %v3609 = vunpack.c.l.b16 %v3474
  %v3610 = vunpack.c.l.b16 %v3475
  %v3611 = vunpack.c.l.b16 %v3476
  %v3612 = vunpack.c.l.b16 %v3477
  %v3613 = vunpack.c.l.b16 %v3478
  %v3614 = vunpack.c.l.b16 %v3479
  %v3615 = vunpack.c.l.b16 %v3480
  %v3616 = vunpack.c.l.b16 %v3481
  %v3617 = vunpack.c.l.b16 %v3482
  %v3618 = vunpack.c.l.b16 %v3483
  %v3619 = vunpack.c.l.b16 %v3484
  %v3620 = vunpack.c.l.b16 %v3485
  %v3621 = vunpack.c.l.b16 %v3486
  %v3622 = vunpack.c.l.b16 %v3487
  %v3623 = vunpack.c.l.b16 %v3488
  %v3624 = vunpack.c.l.b16 %v3489
  %v3625 = vunpack.c.l.b16 %v3490
  %v3626 = vunpack.c.l.b16 %v3491
  %v3627 = vunpack.c.l.b16 %v3492
  %v3628 = vunpack.c.l.b16 %v3493
  %v3629 = vunpack.c.l.b16 %v3494
  %v3630 = vunpack.c.l.b16 %v3495
  %v3631 = vunpack.c.l.b16 %v3496
  %v3632 = vunpack.c.l.b16 %v3497
  %v3633 = vunpack.c.l.b16 %v3498
  %v3634 = vunpack.c.l.b16 %v3499
  %v3635 = vunpack.c.l.b16 %v3500
  %v3636 = vunpack.c.l.b16 %v3501
  %v3637 = vunpack.c.l.b16 %v3502
  %v3638 = vunpack.c.l.b16 %v3503
  %v3639 = vunpack.c.l.b16 %v3504
  %v3640 = vunpack.c.l.b16 %v3505
  %v3641 = vunpack.c.l.b16 %v3506
  %v3642 = vunpack.c.l.b16 %v3507
  %v3643 = vunpack.c.l.b16 %v3508
  %v3644 = vunpack.c.l.b16 %v3509
  %v3645 = vunpack.c.l.b16 %v3510
  %v3646 = vunpack.c.l.b16 %v3511
  %v3647 = vunpack.c.l.b16 %v3512
  %v3648 = vunpack.c.l.b16 %v3513
  %v3649 = vunpack.c.l.b16 %v3514
  %v3650 = vunpack.c.l.b16 %v3515
  %v3651 = vunpack.c.l.b16 %v3516
  %v3652 = vunpack.c.l.b16 %v3517
  %v3653 = vunpack.c.l.b16 %v3518
  %v3654 = vunpack.c.l.b16 %v3519
  %v3655 = vunpack.c.l.b16 %v3520
  %v3656 = vunpack.c.l.b16 %v3521
  %v3657 = vunpack.c.l.b16 %v3522
  %v3658 = vunpack.c.l.b16 %v3523
  %v3659 = vunpack.c.l.b16 %v3524
  %v3660 = vunpack.c.l.b16 %v3525
  %v3661 = vunpack.c.l.b16 %v3526
  %v3662 = vunpack.c.l.b16 %v3527
  %v3663 = vunpack.c.l.b16 %v3528
  %v3664 = vunpack.c.l.b16 %v3529
  %v3665 = vunpack.c.l.b16 %v3530
  %v3666 = vunpack.c.l.b16 %v3531
  %v3667 = vunpack.c.l.b16 %v3532
  %v3668 = vunpack.c.l.b16 %v3533
  %v3669 = vpack.c.b16 %v3606, %v3605
  %v3670 = vpack.c.b16 %v3608, %v3607
  %v3671 = vpack.c.b16 %v3610, %v3609
  %v3672 = vpack.c.b16 %v3612, %v3611
  %v3673 = vpack.c.b16 %v3614, %v3613
  %v3674 = vpack.c.b16 %v3616, %v3615
  %v3675 = vpack.c.b16 %v3618, %v3617
  %v3676 = vpack.c.b16 %v3620, %v3619
  %v3677 = vpack.c.b16 %v3622, %v3621
  %v3678 = vpack.c.b16 %v3624, %v3623
  %v3679 = vpack.c.b16 %v3626, %v3625
  %v3680 = vpack.c.b16 %v3628, %v3627
  %v3681 = vpack.c.b16 %v3630, %v3629
  %v3682 = vpack.c.b16 %v3632, %v3631
  %v3683 = vpack.c.b16 %v3634, %v3633
  %v3684 = vpack.c.b16 %v3636, %v3635
  %v3685 = vpack.c.b16 %v3638, %v3637
  %v3686 = vpack.c.b16 %v3640, %v3639
  %v3687 = vpack.c.b16 %v3642, %v3641
  %v3688 = vpack.c.b16 %v3644, %v3643
  %v3689 = vpack.c.b16 %v3646, %v3645
  %v3690 = vpack.c.b16 %v3648, %v3647
  %v3691 = vpack.c.b16 %v3650, %v3649
  %v3692 = vpack.c.b16 %v3652, %v3651
  %v3693 = vpack.c.b16 %v3654, %v3653
  %v3694 = vpack.c.b16 %v3656, %v3655
  %v3695 = vpack.c.b16 %v3658, %v3657
  %v3696 = vpack.c.b16 %v3660, %v3659
  %v3697 = vpack.c.b16 %v3662, %v3661
  %v3698 = vpack.c.b16 %v3664, %v3663
  %v3699 = vpack.c.b16 %v3666, %v3665
  %v3700 = vpack.c.b16 %v3668, %v3667
  %3733 = vmatprep.subr.bf16.mxu0 0
  %3734 = vmatpush1.bf16.msra.mxu0 %v3669
  %3735 = vmatprep.subr.bf16.mxu0 0
  %3736 = vmatpush1.bf16.msra.mxu0 %v3670
  %3737 = vmatprep.subr.bf16.mxu0 0
  %3738 = vmatpush1.bf16.msra.mxu0 %v3671
  %3739 = vmatprep.subr.bf16.mxu0 0
  %3740 = vmatpush1.bf16.msra.mxu0 %v3672
  %3741 = vmatprep.subr.bf16.mxu0 0
  %3742 = vmatpush1.bf16.msra.mxu0 %v3673
  %3743 = vmatprep.subr.bf16.mxu0 0
  %3744 = vmatpush1.bf16.msra.mxu0 %v3674
  %3745 = vmatprep.subr.bf16.mxu0 0
  %3746 = vmatpush1.bf16.msra.mxu0 %v3675
  %3747 = vmatprep.subr.bf16.mxu0 0
  %3748 = vmatpush1.bf16.msra.mxu0 %v3676
  %3749 = vmatprep.subr.bf16.mxu0 0
  %3750 = vmatpush1.bf16.msra.mxu0 %v3677
  %3751 = vmatprep.subr.bf16.mxu0 0
  %3752 = vmatpush1.bf16.msra.mxu0 %v3678
  %3753 = vmatprep.subr.bf16.mxu0 0
  %3754 = vmatpush1.bf16.msra.mxu0 %v3679
  %3755 = vmatprep.subr.bf16.mxu0 0
  %3756 = vmatpush1.bf16.msra.mxu0 %v3680
  %3757 = vmatprep.subr.bf16.mxu0 0
  %3758 = vmatpush1.bf16.msra.mxu0 %v3681
  %3759 = vmatprep.subr.bf16.mxu0 0
  %3760 = vmatpush1.bf16.msra.mxu0 %v3682
  %3761 = vmatprep.subr.bf16.mxu0 0
  %3762 = vmatpush1.bf16.msra.mxu0 %v3683
  %3763 = vmatprep.subr.bf16.mxu0 0
  %3764 = vmatpush1.bf16.msra.mxu0 %v3684
  %3765 = vmatprep.mubr.bf16.mxu0 %v3467
  %3766 = vmatmul.mubr.bf16.gmra.mrb[0].mxu0 %v3466
  %v3767 = vpop.f32.mrb[0].mxu0
  %v3768 = vadd.f32 %v3539, %v3767
  %v3769 = vpop.f32.mrb[0].mxu0
  %v3770 = vpop.f32.mrb[0].mxu0
  %v3771 = vpop.f32.mrb[0].mxu0
  %3772 = vdwg.mxu0
  %3773 = vmatprep.subr.bf16.mxu0 0
  %3774 = vmatpush1.bf16.msra.mxu0 %v3685
  %3775 = vmatprep.subr.bf16.mxu0 0
  %3776 = vmatpush1.bf16.msra.mxu0 %v3686
  %3777 = vmatprep.subr.bf16.mxu0 0
  %3778 = vmatpush1.bf16.msra.mxu0 %v3687
  %3779 = vmatprep.subr.bf16.mxu0 0
  %3780 = vmatpush1.bf16.msra.mxu0 %v3688
  %3781 = vmatprep.subr.bf16.mxu0 0
  %3782 = vmatpush1.bf16.msra.mxu0 %v3689
  %3783 = vmatprep.subr.bf16.mxu0 0
  %3784 = vmatpush1.bf16.msra.mxu0 %v3690
  %3785 = vmatprep.subr.bf16.mxu0 0
  %3786 = vmatpush1.bf16.msra.mxu0 %v3691
  %3787 = vmatprep.subr.bf16.mxu0 0
  %3788 = vmatpush1.bf16.msra.mxu0 %v3692
  %3789 = vmatprep.subr.bf16.mxu0 0
  %3790 = vmatpush1.bf16.msra.mxu0 %v3693
  %3791 = vmatprep.subr.bf16.mxu0 0
  %3792 = vmatpush1.bf16.msra.mxu0 %v3694
  %3793 = vmatprep.subr.bf16.mxu0 0
  %3794 = vmatpush1.bf16.msra.mxu0 %v3695
  %3795 = vmatprep.subr.bf16.mxu0 0
  %3796 = vmatpush1.bf16.msra.mxu0 %v3696
  %3797 = vmatprep.subr.bf16.mxu0 0
  %3798 = vmatpush1.bf16.msra.mxu0 %v3697
  %3799 = vmatprep.subr.bf16.mxu0 0
  %3800 = vmatpush1.bf16.msra.mxu0 %v3698
  %3801 = vmatprep.subr.bf16.mxu0 0
  %3802 = vmatpush1.bf16.msra.mxu0 %v3699
  %3803 = vmatprep.subr.bf16.mxu0 0
  %3804 = vmatpush1.bf16.msra.mxu0 %v3700
  %3805 = vmatprep.mubr.bf16.mxu0 %v3469
  %3806 = vmatmul.mubr.bf16.gmra.mrb[0].mxu0 %v3468
  %v3807 = vpop.f32.mrb[0].mxu0
  %v3808 = vadd.f32 %v3768, %v3807
  %v3809 = vpop.f32.mrb[0].mxu0
  %v3810 = vpop.f32.mrb[0].mxu0
  %v3811 = vpop.f32.mrb[0].mxu0
  %3812 = vdwg.mxu0
  %3813 = vst [vmem:[%s9] sm:$0xff] %v3808
  // Predicated region
  $region38: #{net_forward.1} parent=0 // pred_check
    _
  $region39: #{net_forward.1} parent=0 // pred_check_branch
    %3815 = sbr.rel (0) target = $region41
  $region40: #{net_forward.1} parent=0 // pred_region
    _
  $region41: #{net_forward.1} parent=0 // pred_fallthru
    _
  // Predicated region
  $region42: #{net_forward.1} parent=0 // pred_check
    _
  $region43: #{net_forward.1} parent=0 // pred_check_branch
    %3817 = sbr.rel (0) target = $region45
  $region44: #{net_forward.1} parent=0 // pred_region
    _
  $region45: #{net_forward.1} parent=0 // pred_fallthru
    _

</llo_original>
